<compile_context>
chip_gen: v6e
topology: v6e:2x2x1
jax: 0.10.0
libtpu: 0.0.40
codegen_flags: <defaults>
</compile_context>

<pallas_src>
import functools

import jax
import jax.numpy as jnp
from jax import lax
from jax.experimental import pallas as pl
from jax.experimental.pallas import tpu as pltpu


HP = 128  # lane padding per gate: one full vreg lane group


# ------------------------------ fused kernel ----------------------------------

def _bitcoin_kernel(*refs, num_layers, ws, hp):
    """Fused forward: [LSTM] * num_layers -> Linear applied to the last step.

    Ref layout (inputs, then output, then scratch):
      x_ref                    (ws*B, in0)    time-major input rows
      per layer l:
        wih_l  (in_l, 4*hp)    W_ih^T, gate blocks lane-padded to hp
        whh_l  (hp, 4*hp)      W_hh^T, rows/gate blocks zero-padded
        b_l    (1, 4*hp)       b_ih + b_hh, lane-padded
      wout   (hp, out)         Linear weight^T, rows zero-padded
      bout   (1, out)
      o_ref  (B, out)          final output (only HBM store)
      seq_buf (ws*B, hp)       VMEM scratch: inter-layer activations
      gbuf    (ws*B, 4*hp)     VMEM scratch: hoisted input projection
    """
    x_ref = refs[0]
    layer_refs = refs[1:1 + 3 * num_layers]
    wout_ref = refs[1 + 3 * num_layers]
    bout_ref = refs[2 + 3 * num_layers]
    o_ref = refs[3 + 3 * num_layers]
    seq_buf, gbuf = refs[4 + 3 * num_layers:]

    bsz = o_ref.shape[0]

    h_last = None
    for l in range(num_layers):
        wih = layer_refs[3 * l]
        whh = layer_refs[3 * l + 1]
        b = layer_refs[3 * l + 2]
        last_layer = (l == num_layers - 1)

        # Hoisted input projection: all ws steps in one matmul (8 sublanes fed
        # to the MXU instead of 1 per step), bias folded in here.
        x_all = x_ref[...] if l == 0 else seq_buf[...]
        gbuf[...] = (jnp.dot(x_all, wih[...], preferred_element_type=jnp.float32)
                     + b[...])

        def step(t, carry, _whh=whh, _last=last_layer):
            h, c = carry
            row = pl.ds(t * bsz, bsz)
            # Only the recurrent matmul remains inside the loop.
            gates = gbuf[row, :] + jnp.dot(h, _whh[...],
                                           preferred_element_type=jnp.float32)
            # Each gate sits on a 128-lane boundary -> whole-vreg slices,
            # no cross-lane (XLU) work. PyTorch gate order: i, f, g, o.
            i = jax.nn.sigmoid(gates[:, 0 * hp:1 * hp])
            f = jax.nn.sigmoid(gates[:, 1 * hp:2 * hp])
            g = jnp.tanh(gates[:, 2 * hp:3 * hp])
            o = jax.nn.sigmoid(gates[:, 3 * hp:4 * hp])
            c = f * c + i * g
            h = o * jnp.tanh(c)
            if not _last:
                seq_buf[row, :] = h       # stays in VMEM; never touches HBM
            return (h, c)

        h0 = jnp.zeros((bsz, hp), jnp.float32)
        c0 = jnp.zeros((bsz, hp), jnp.float32)
        # ws is static (8): fully unroll so the LLO scheduler can overlap
        # MXU / EUP / VPU latencies across adjacent steps.
        h_last, _ = lax.fori_loop(0, ws, step, (h0, c0), unroll=True)

    # linear(seq)[-1] == linear(h at the last time step); padded rows of wout
    # are zero so the padded lanes of h_last contribute nothing.
    o_ref[...] = (jnp.dot(h_last, wout_ref[...],
                          preferred_element_type=jnp.float32)
                  + bout_ref[...]).astype(o_ref.dtype)


# --------------------------- weight pre-packing --------------------------------

def _pack_lstm(w_ih, w_hh, b_ih, b_hh, hp, in_rows):
    """Transpose + lane-pad PyTorch-layout LSTM params (done once, in __init__)."""
    four_h = w_ih.shape[0]
    in_dim = w_ih.shape[1]
    h = four_h // 4
    wih_t = jnp.transpose(w_ih).astype(jnp.float32)    # (in, 4H)
    whh_t = jnp.transpose(w_hh).astype(jnp.float32)    # (H, 4H)
    bias = (b_ih + b_hh).astype(jnp.float32)           # (4H,)
    wih_p = jnp.zeros((in_rows, 4 * hp), jnp.float32)
    whh_p = jnp.zeros((hp, 4 * hp), jnp.float32)
    b_p = jnp.zeros((1, 4 * hp), jnp.float32)
    for g in range(4):
        wih_p = wih_p.at[:in_dim, g * hp:g * hp + h].set(wih_t[:, g * h:(g + 1) * h])
        whh_p = whh_p.at[:h, g * hp:g * hp + h].set(whh_t[:, g * h:(g + 1) * h])
        b_p = b_p.at[0, g * hp:g * hp + h].set(bias[g * h:(g + 1) * h])
    return wih_p, whh_p, b_p


# ------------------------------- Bitcoin model ---------------------------------

class BitcoinPallas:
    """JAX/Pallas port of the PyTorch `Bitcoin` module (single fused kernel)."""

    def __init__(self, in_size, hidden_size, out_size, ws, key):
        self.in_size = in_size
        self.hidden_size = list(hidden_size)
        self.out_size = out_size
        self.ws = ws
        self.hp = max(HP, ((max(self.hidden_size) + HP - 1) // HP) * HP)

        self._raw_lstm = []
        packed = []
        k = key
        cur_in = in_size
        for idx, h in enumerate(self.hidden_size):
            bound = 1.0 / float(h) ** 0.5
            k, k1, k2, k3, k4 = jax.random.split(k, 5)
            w_ih = jax.random.uniform(k1, (4 * h, cur_in), jnp.float32, -bound, bound)
            w_hh = jax.random.uniform(k2, (4 * h, h), jnp.float32, -bound, bound)
            b_ih = jax.random.uniform(k3, (4 * h,), jnp.float32, -bound, bound)
            b_hh = jax.random.uniform(k4, (4 * h,), jnp.float32, -bound, bound)
            self._raw_lstm.append((w_ih, w_hh, b_ih, b_hh))
            in_rows = cur_in if idx == 0 else self.hp
            packed.append(_pack_lstm(w_ih, w_hh, b_ih, b_hh, self.hp, in_rows))
            cur_in = h

        h_last = self.hidden_size[-1]
        bound = 1.0 / float(h_last) ** 0.5
        k, k1, k2 = jax.random.split(k, 3)
        w_out = jax.random.uniform(k1, (out_size, h_last), jnp.float32, -bound, bound)
        b_out = jax.random.uniform(k2, (out_size,), jnp.float32, -bound, bound)
        self._raw_out = (w_out, b_out)

        self._layer_params = packed
        self._wout = jnp.zeros((self.hp, out_size), jnp.float32).at[:h_last, :].set(
            jnp.transpose(w_out).astype(jnp.float32))
        self._bout = b_out.reshape(1, out_size).astype(jnp.float32)

        # jit the whole forward: the tiny reshape fuses and the pre-packed
        # weights constant-fold -> one dispatch per call.
        self._forward = jax.jit(self._forward_impl)

    def _forward_impl(self, seq):
        # seq.view(ws, -1, 6) with time-major row ordering, flattened to 2-D.
        x = seq.reshape(-1, self.in_size).astype(jnp.float32)   # (ws*B, in)
        bsz = x.shape[0] // self.ws
        hp = self.hp
        num_layers = len(self._layer_params)

        flat_params = [p for lp in self._layer_params for p in lp]
        flat_params += [self._wout, self._bout]

        vmem = pl.BlockSpec(memory_space=pltpu.MemorySpace.VMEM)
        kernel = functools.partial(_bitcoin_kernel, num_layers=num_layers,
                                   ws=self.ws, hp=hp)
        return pl.pallas_call(
            kernel,
            out_shape=jax.ShapeDtypeStruct((bsz, self.out_size), jnp.float32),
            in_specs=[vmem] * (1 + len(flat_params)),
            out_specs=vmem,
            scratch_shapes=[pltpu.VMEM((self.ws * bsz, hp), jnp.float32),
                            pltpu.VMEM((self.ws * bsz, 4 * hp), jnp.float32)],
        )(x, *flat_params)

    def __call__(self, seq):
        return self._forward(seq)

    # Pure-JAX reference of the PyTorch forward (for correctness checking only).
    def reference(self, seq):
        x = seq.reshape(self.ws, -1, self.in_size).astype(jnp.float32)
        for (w_ih, w_hh, b_ih, b_hh) in self._raw_lstm:
            hdim = w_hh.shape[1]
            bsz = x.shape[1]
            h = jnp.zeros((bsz, hdim), jnp.float32)
            c = jnp.zeros((bsz, hdim), jnp.float32)
            outs = []
            for t in range(self.ws):
                gates = x[t] @ w_ih.T + h @ w_hh.T + b_ih + b_hh
                i = jax.nn.sigmoid(gates[:, 0 * hdim:1 * hdim])
                f = jax.nn.sigmoid(gates[:, 1 * hdim:2 * hdim])
                g = jnp.tanh(gates[:, 2 * hdim:3 * hdim])
                o = jax.nn.sigmoid(gates[:, 3 * hdim:4 * hdim])
                c = f * c + i * g
                h = o * jnp.tanh(c)
                outs.append(h)
            x = jnp.stack(outs, axis=0)
        w_out, b_out = self._raw_out
        return x[-1] @ w_out.T + b_out


# ----------------------------------- main ---------------------------------------

if __name__ == "__main__":
    key = jax.random.PRNGKey(0)
    k_in, k_params = jax.random.split(key)

    in_size = 6              # fixed by `seq.view(ws, -1, 6)`
    hidden_size = [32, 16]   # two stacked LSTM layers
    out_size = 1
    ws = 8
    batch = 1                # implied by the (1, 1, H) hidden state in reset()

    model = BitcoinPallas(in_size, hidden_size, out_size, ws, k_params)
    seq = jax.random.normal(k_in, (ws * batch * in_size,), jnp.float32)  # (48,)

    out = jax.block_until_ready(model(seq))
    assert out.shape == (batch, out_size), out.shape

    ref = jax.block_until_ready(model.reference(seq))
    if not bool(jnp.allclose(out, ref, atol=1e-3, rtol=1e-3)):
        print("MISMATCH:", out, ref, jnp.max(jnp.abs(out - ref)))
        raise SystemExit(1)

    print("KERNEL_OK")
</pallas_src>

<mosaic_0001>
module attributes {stable_mosaic.version = 11 : i64} {
  func.func @_bitcoin_kernel(%arg0: memref<8x6xf32, #tpu.memory_space<vmem>>, %arg1: memref<6x512xf32, #tpu.memory_space<vmem>>, %arg2: memref<128x512xf32, #tpu.memory_space<vmem>>, %arg3: memref<1x512xf32, #tpu.memory_space<vmem>>, %arg4: memref<128x512xf32, #tpu.memory_space<vmem>>, %arg5: memref<128x512xf32, #tpu.memory_space<vmem>>, %arg6: memref<1x512xf32, #tpu.memory_space<vmem>>, %arg7: memref<128x1xf32, #tpu.memory_space<vmem>>, %arg8: memref<1x1xf32, #tpu.memory_space<vmem>>, %arg9: memref<1x1xf32, #tpu.memory_space<vmem>>, %arg10: memref<8x128xf32, #tpu.memory_space<vmem>>, %arg11: memref<8x512xf32, #tpu.memory_space<vmem>>) attributes {dimension_semantics = [], scalar_prefetch = 0 : i64, scratch_operands = 2 : i64, tpu.core_type = #tpu.core_type<tc>} {
    %c0 = arith.constant 0 : index
    %c0_0 = arith.constant 0 : index
    %0 = vector.load %arg0[%c0, %c0_0] : memref<8x6xf32, #tpu.memory_space<vmem>>, vector<8x6xf32>
    %c0_1 = arith.constant 0 : index
    %c0_2 = arith.constant 0 : index
    %1 = vector.load %arg1[%c0_1, %c0_2] : memref<6x512xf32, #tpu.memory_space<vmem>>, vector<6x512xf32>
    %cst = arith.constant dense<0.000000e+00> : vector<8x512xf32>
    %2 = tpu.matmul %0, %1, %cst {dimension_numbers = #tpu.dot_dimension_numbers<[1], [0], [0], [1], [0, 0, 1, 1], [], []>} : vector<8x6xf32>, vector<6x512xf32>, vector<8x512xf32> -> vector<8x512xf32>
    %c0_3 = arith.constant 0 : index
    %c0_4 = arith.constant 0 : index
    %3 = vector.load %arg3[%c0_3, %c0_4] : memref<1x512xf32, #tpu.memory_space<vmem>>, vector<1x512xf32>
    %4 = vector.broadcast %3 : vector<1x512xf32> to vector<8x512xf32>
    %5 = arith.addf %2, %4 : vector<8x512xf32>
    %c0_5 = arith.constant 0 : index
    %c0_6 = arith.constant 0 : index
    %6 = vector.load %arg11[%c0_5, %c0_6] : memref<8x512xf32, #tpu.memory_space<vmem>>, vector<8x512xf32>
    tpu.vector_store %arg11[%c0_5, %c0_6], %5 {strides = array<i32>} : memref<8x512xf32, #tpu.memory_space<vmem>>, vector<8x512xf32>,
    %cst_7 = arith.constant 0.000000e+00 : f32
    %7 = vector.broadcast %cst_7 : f32 to vector<1x128xf32>
    %cst_8 = arith.constant 0.000000e+00 : f32
    %8 = vector.broadcast %cst_8 : f32 to vector<1x128xf32>
    %c0_i32 = arith.constant 0 : i32
    %c1_i32 = arith.constant 1 : i32
    %9 = arith.muli %c0_i32, %c1_i32 : i32
    %10 = arith.index_cast %9 : i32 to index
    %c0_9 = arith.constant 0 : index
    %11 = vector.load %arg11[%10, %c0_9] : memref<8x512xf32, #tpu.memory_space<vmem>>, vector<1x512xf32>
    %c0_10 = arith.constant 0 : index
    %c0_11 = arith.constant 0 : index
    %12 = vector.load %arg2[%c0_10, %c0_11] : memref<128x512xf32, #tpu.memory_space<vmem>>, vector<128x512xf32>
    %cst_12 = arith.constant dense<0.000000e+00> : vector<1x512xf32>
    %13 = tpu.matmul %7, %12, %cst_12 {dimension_numbers = #tpu.dot_dimension_numbers<[1], [0], [0], [1], [0, 0, 1, 1], [], []>} : vector<1x128xf32>, vector<128x512xf32>, vector<1x512xf32> -> vector<1x512xf32>
    %14 = arith.addf %11, %13 : vector<1x512xf32>
    %15 = vector.extract_strided_slice %14 {offsets = [0, 0], sizes = [1, 128], strides = [1, 1]} : vector<1x512xf32> to vector<1x128xf32>
    %16 = arith.negf %15 : vector<1x128xf32>
    %17 = math.exp %16 : vector<1x128xf32>
    %cst_13 = arith.constant 1.000000e+00 : f32
    %18 = vector.broadcast %cst_13 : f32 to vector<1x128xf32>
    %19 = arith.addf %18, %17 : vector<1x128xf32>
    %20 = arith.divf %18, %19 : vector<1x128xf32>
    %21 = vector.extract_strided_slice %14 {offsets = [0, 128], sizes = [1, 128], strides = [1, 1]} : vector<1x512xf32> to vector<1x128xf32>
    %22 = arith.negf %21 : vector<1x128xf32>
    %23 = math.exp %22 : vector<1x128xf32>
    %cst_14 = arith.constant 1.000000e+00 : f32
    %24 = vector.broadcast %cst_14 : f32 to vector<1x128xf32>
    %25 = arith.addf %24, %23 : vector<1x128xf32>
    %26 = arith.divf %24, %25 : vector<1x128xf32>
    %27 = vector.extract_strided_slice %14 {offsets = [0, 256], sizes = [1, 128], strides = [1, 1]} : vector<1x512xf32> to vector<1x128xf32>
    %28 = math.tanh %27 : vector<1x128xf32>
    %29 = vector.extract_strided_slice %14 {offsets = [0, 384], sizes = [1, 128], strides = [1, 1]} : vector<1x512xf32> to vector<1x128xf32>
    %30 = arith.negf %29 : vector<1x128xf32>
    %31 = math.exp %30 : vector<1x128xf32>
    %cst_15 = arith.constant 1.000000e+00 : f32
    %32 = vector.broadcast %cst_15 : f32 to vector<1x128xf32>
    %33 = arith.addf %32, %31 : vector<1x128xf32>
    %34 = arith.divf %32, %33 : vector<1x128xf32>
    %35 = arith.mulf %26, %8 : vector<1x128xf32>
    %36 = arith.mulf %20, %28 : vector<1x128xf32>
    %37 = arith.addf %35, %36 : vector<1x128xf32>
    %38 = math.tanh %37 : vector<1x128xf32>
    %39 = arith.mulf %34, %38 : vector<1x128xf32>
    %40 = arith.index_cast %9 : i32 to index
    %c0_16 = arith.constant 0 : index
    %41 = vector.load %arg10[%40, %c0_16] : memref<8x128xf32, #tpu.memory_space<vmem>>, vector<1x128xf32>
    tpu.vector_store %arg10[%40, %c0_16], %39 {strides = array<i32>} : memref<8x128xf32, #tpu.memory_space<vmem>>, vector<1x128xf32>,
    %c1_i32_17 = arith.constant 1 : i32
    %c1_i32_18 = arith.constant 1 : i32
    %42 = arith.muli %c1_i32_17, %c1_i32_18 : i32
    %43 = arith.index_cast %42 : i32 to index
    %c0_19 = arith.constant 0 : index
    %44 = vector.load %arg11[%43, %c0_19] : memref<8x512xf32, #tpu.memory_space<vmem>>, vector<1x512xf32>
    %c0_20 = arith.constant 0 : index
    %c0_21 = arith.constant 0 : index
    %45 = vector.load %arg2[%c0_20, %c0_21] : memref<128x512xf32, #tpu.memory_space<vmem>>, vector<128x512xf32>
    %cst_22 = arith.constant dense<0.000000e+00> : vector<1x512xf32>
    %46 = tpu.matmul %39, %45, %cst_22 {dimension_numbers = #tpu.dot_dimension_numbers<[1], [0], [0], [1], [0, 0, 1, 1], [], []>} : vector<1x128xf32>, vector<128x512xf32>, vector<1x512xf32> -> vector<1x512xf32>
    %47 = arith.addf %44, %46 : vector<1x512xf32>
    %48 = vector.extract_strided_slice %47 {offsets = [0, 0], sizes = [1, 128], strides = [1, 1]} : vector<1x512xf32> to vector<1x128xf32>
    %49 = arith.negf %48 : vector<1x128xf32>
    %50 = math.exp %49 : vector<1x128xf32>
    %cst_23 = arith.constant 1.000000e+00 : f32
    %51 = vector.broadcast %cst_23 : f32 to vector<1x128xf32>
    %52 = arith.addf %51, %50 : vector<1x128xf32>
    %53 = arith.divf %51, %52 : vector<1x128xf32>
    %54 = vector.extract_strided_slice %47 {offsets = [0, 128], sizes = [1, 128], strides = [1, 1]} : vector<1x512xf32> to vector<1x128xf32>
    %55 = arith.negf %54 : vector<1x128xf32>
    %56 = math.exp %55 : vector<1x128xf32>
    %cst_24 = arith.constant 1.000000e+00 : f32
    %57 = vector.broadcast %cst_24 : f32 to vector<1x128xf32>
    %58 = arith.addf %57, %56 : vector<1x128xf32>
    %59 = arith.divf %57, %58 : vector<1x128xf32>
    %60 = vector.extract_strided_slice %47 {offsets = [0, 256], sizes = [1, 128], strides = [1, 1]} : vector<1x512xf32> to vector<1x128xf32>
    %61 = math.tanh %60 : vector<1x128xf32>
    %62 = vector.extract_strided_slice %47 {offsets = [0, 384], sizes = [1, 128], strides = [1, 1]} : vector<1x512xf32> to vector<1x128xf32>
    %63 = arith.negf %62 : vector<1x128xf32>
    %64 = math.exp %63 : vector<1x128xf32>
    %cst_25 = arith.constant 1.000000e+00 : f32
    %65 = vector.broadcast %cst_25 : f32 to vector<1x128xf32>
    %66 = arith.addf %65, %64 : vector<1x128xf32>
    %67 = arith.divf %65, %66 : vector<1x128xf32>
    %68 = arith.mulf %59, %37 : vector<1x128xf32>
    %69 = arith.mulf %53, %61 : vector<1x128xf32>
    %70 = arith.addf %68, %69 : vector<1x128xf32>
    %71 = math.tanh %70 : vector<1x128xf32>
    %72 = arith.mulf %67, %71 : vector<1x128xf32>
    %73 = arith.index_cast %42 : i32 to index
    %c0_26 = arith.constant 0 : index
    %74 = vector.load %arg10[%73, %c0_26] : memref<8x128xf32, #tpu.memory_space<vmem>>, vector<1x128xf32>
    tpu.vector_store %arg10[%73, %c0_26], %72 {strides = array<i32>} : memref<8x128xf32, #tpu.memory_space<vmem>>, vector<1x128xf32>,
    %c2_i32 = arith.constant 2 : i32
    %c1_i32_27 = arith.constant 1 : i32
    %75 = arith.muli %c2_i32, %c1_i32_27 : i32
    %76 = arith.index_cast %75 : i32 to index
    %c0_28 = arith.constant 0 : index
    %77 = vector.load %arg11[%76, %c0_28] : memref<8x512xf32, #tpu.memory_space<vmem>>, vector<1x512xf32>
    %c0_29 = arith.constant 0 : index
    %c0_30 = arith.constant 0 : index
    %78 = vector.load %arg2[%c0_29, %c0_30] : memref<128x512xf32, #tpu.memory_space<vmem>>, vector<128x512xf32>
    %cst_31 = arith.constant dense<0.000000e+00> : vector<1x512xf32>
    %79 = tpu.matmul %72, %78, %cst_31 {dimension_numbers = #tpu.dot_dimension_numbers<[1], [0], [0], [1], [0, 0, 1, 1], [], []>} : vector<1x128xf32>, vector<128x512xf32>, vector<1x512xf32> -> vector<1x512xf32>
    %80 = arith.addf %77, %79 : vector<1x512xf32>
    %81 = vector.extract_strided_slice %80 {offsets = [0, 0], sizes = [1, 128], strides = [1, 1]} : vector<1x512xf32> to vector<1x128xf32>
    %82 = arith.negf %81 : vector<1x128xf32>
    %83 = math.exp %82 : vector<1x128xf32>
    %cst_32 = arith.constant 1.000000e+00 : f32
    %84 = vector.broadcast %cst_32 : f32 to vector<1x128xf32>
    %85 = arith.addf %84, %83 : vector<1x128xf32>
    %86 = arith.divf %84, %85 : vector<1x128xf32>
    %87 = vector.extract_strided_slice %80 {offsets = [0, 128], sizes = [1, 128], strides = [1, 1]} : vector<1x512xf32> to vector<1x128xf32>
    %88 = arith.negf %87 : vector<1x128xf32>
    %89 = math.exp %88 : vector<1x128xf32>
    %cst_33 = arith.constant 1.000000e+00 : f32
    %90 = vector.broadcast %cst_33 : f32 to vector<1x128xf32>
    %91 = arith.addf %90, %89 : vector<1x128xf32>
    %92 = arith.divf %90, %91 : vector<1x128xf32>
    %93 = vector.extract_strided_slice %80 {offsets = [0, 256], sizes = [1, 128], strides = [1, 1]} : vector<1x512xf32> to vector<1x128xf32>
    %94 = math.tanh %93 : vector<1x128xf32>
    %95 = vector.extract_strided_slice %80 {offsets = [0, 384], sizes = [1, 128], strides = [1, 1]} : vector<1x512xf32> to vector<1x128xf32>
    %96 = arith.negf %95 : vector<1x128xf32>
    %97 = math.exp %96 : vector<1x128xf32>
    %cst_34 = arith.constant 1.000000e+00 : f32
    %98 = vector.broadcast %cst_34 : f32 to vector<1x128xf32>
    %99 = arith.addf %98, %97 : vector<1x128xf32>
    %100 = arith.divf %98, %99 : vector<1x128xf32>
    %101 = arith.mulf %92, %70 : vector<1x128xf32>
    %102 = arith.mulf %86, %94 : vector<1x128xf32>
    %103 = arith.addf %101, %102 : vector<1x128xf32>
    %104 = math.tanh %103 : vector<1x128xf32>
    %105 = arith.mulf %100, %104 : vector<1x128xf32>
    %106 = arith.index_cast %75 : i32 to index
    %c0_35 = arith.constant 0 : index
    %107 = vector.load %arg10[%106, %c0_35] : memref<8x128xf32, #tpu.memory_space<vmem>>, vector<1x128xf32>
    tpu.vector_store %arg10[%106, %c0_35], %105 {strides = array<i32>} : memref<8x128xf32, #tpu.memory_space<vmem>>, vector<1x128xf32>,
    %c3_i32 = arith.constant 3 : i32
    %c1_i32_36 = arith.constant 1 : i32
    %108 = arith.muli %c3_i32, %c1_i32_36 : i32
    %109 = arith.index_cast %108 : i32 to index
    %c0_37 = arith.constant 0 : index
    %110 = vector.load %arg11[%109, %c0_37] : memref<8x512xf32, #tpu.memory_space<vmem>>, vector<1x512xf32>
    %c0_38 = arith.constant 0 : index
    %c0_39 = arith.constant 0 : index
    %111 = vector.load %arg2[%c0_38, %c0_39] : memref<128x512xf32, #tpu.memory_space<vmem>>, vector<128x512xf32>
    %cst_40 = arith.constant dense<0.000000e+00> : vector<1x512xf32>
    %112 = tpu.matmul %105, %111, %cst_40 {dimension_numbers = #tpu.dot_dimension_numbers<[1], [0], [0], [1], [0, 0, 1, 1], [], []>} : vector<1x128xf32>, vector<128x512xf32>, vector<1x512xf32> -> vector<1x512xf32>
    %113 = arith.addf %110, %112 : vector<1x512xf32>
    %114 = vector.extract_strided_slice %113 {offsets = [0, 0], sizes = [1, 128], strides = [1, 1]} : vector<1x512xf32> to vector<1x128xf32>
    %115 = arith.negf %114 : vector<1x128xf32>
    %116 = math.exp %115 : vector<1x128xf32>
    %cst_41 = arith.constant 1.000000e+00 : f32
    %117 = vector.broadcast %cst_41 : f32 to vector<1x128xf32>
    %118 = arith.addf %117, %116 : vector<1x128xf32>
    %119 = arith.divf %117, %118 : vector<1x128xf32>
    %120 = vector.extract_strided_slice %113 {offsets = [0, 128], sizes = [1, 128], strides = [1, 1]} : vector<1x512xf32> to vector<1x128xf32>
    %121 = arith.negf %120 : vector<1x128xf32>
    %122 = math.exp %121 : vector<1x128xf32>
    %cst_42 = arith.constant 1.000000e+00 : f32
    %123 = vector.broadcast %cst_42 : f32 to vector<1x128xf32>
    %124 = arith.addf %123, %122 : vector<1x128xf32>
    %125 = arith.divf %123, %124 : vector<1x128xf32>
    %126 = vector.extract_strided_slice %113 {offsets = [0, 256], sizes = [1, 128], strides = [1, 1]} : vector<1x512xf32> to vector<1x128xf32>
    %127 = math.tanh %126 : vector<1x128xf32>
    %128 = vector.extract_strided_slice %113 {offsets = [0, 384], sizes = [1, 128], strides = [1, 1]} : vector<1x512xf32> to vector<1x128xf32>
    %129 = arith.negf %128 : vector<1x128xf32>
    %130 = math.exp %129 : vector<1x128xf32>
    %cst_43 = arith.constant 1.000000e+00 : f32
    %131 = vector.broadcast %cst_43 : f32 to vector<1x128xf32>
    %132 = arith.addf %131, %130 : vector<1x128xf32>
    %133 = arith.divf %131, %132 : vector<1x128xf32>
    %134 = arith.mulf %125, %103 : vector<1x128xf32>
    %135 = arith.mulf %119, %127 : vector<1x128xf32>
    %136 = arith.addf %134, %135 : vector<1x128xf32>
    %137 = math.tanh %136 : vector<1x128xf32>
    %138 = arith.mulf %133, %137 : vector<1x128xf32>
    %139 = arith.index_cast %108 : i32 to index
    %c0_44 = arith.constant 0 : index
    %140 = vector.load %arg10[%139, %c0_44] : memref<8x128xf32, #tpu.memory_space<vmem>>, vector<1x128xf32>
    tpu.vector_store %arg10[%139, %c0_44], %138 {strides = array<i32>} : memref<8x128xf32, #tpu.memory_space<vmem>>, vector<1x128xf32>,
    %c4_i32 = arith.constant 4 : i32
    %c1_i32_45 = arith.constant 1 : i32
    %141 = arith.muli %c4_i32, %c1_i32_45 : i32
    %142 = arith.index_cast %141 : i32 to index
    %c0_46 = arith.constant 0 : index
    %143 = vector.load %arg11[%142, %c0_46] : memref<8x512xf32, #tpu.memory_space<vmem>>, vector<1x512xf32>
    %c0_47 = arith.constant 0 : index
    %c0_48 = arith.constant 0 : index
    %144 = vector.load %arg2[%c0_47, %c0_48] : memref<128x512xf32, #tpu.memory_space<vmem>>, vector<128x512xf32>
    %cst_49 = arith.constant dense<0.000000e+00> : vector<1x512xf32>
    %145 = tpu.matmul %138, %144, %cst_49 {dimension_numbers = #tpu.dot_dimension_numbers<[1], [0], [0], [1], [0, 0, 1, 1], [], []>} : vector<1x128xf32>, vector<128x512xf32>, vector<1x512xf32> -> vector<1x512xf32>
    %146 = arith.addf %143, %145 : vector<1x512xf32>
    %147 = vector.extract_strided_slice %146 {offsets = [0, 0], sizes = [1, 128], strides = [1, 1]} : vector<1x512xf32> to vector<1x128xf32>
    %148 = arith.negf %147 : vector<1x128xf32>
    %149 = math.exp %148 : vector<1x128xf32>
    %cst_50 = arith.constant 1.000000e+00 : f32
    %150 = vector.broadcast %cst_50 : f32 to vector<1x128xf32>
    %151 = arith.addf %150, %149 : vector<1x128xf32>
    %152 = arith.divf %150, %151 : vector<1x128xf32>
    %153 = vector.extract_strided_slice %146 {offsets = [0, 128], sizes = [1, 128], strides = [1, 1]} : vector<1x512xf32> to vector<1x128xf32>
    %154 = arith.negf %153 : vector<1x128xf32>
    %155 = math.exp %154 : vector<1x128xf32>
    %cst_51 = arith.constant 1.000000e+00 : f32
    %156 = vector.broadcast %cst_51 : f32 to vector<1x128xf32>
    %157 = arith.addf %156, %155 : vector<1x128xf32>
    %158 = arith.divf %156, %157 : vector<1x128xf32>
    %159 = vector.extract_strided_slice %146 {offsets = [0, 256], sizes = [1, 128], strides = [1, 1]} : vector<1x512xf32> to vector<1x128xf32>
    %160 = math.tanh %159 : vector<1x128xf32>
    %161 = vector.extract_strided_slice %146 {offsets = [0, 384], sizes = [1, 128], strides = [1, 1]} : vector<1x512xf32> to vector<1x128xf32>
    %162 = arith.negf %161 : vector<1x128xf32>
    %163 = math.exp %162 : vector<1x128xf32>
    %cst_52 = arith.constant 1.000000e+00 : f32
    %164 = vector.broadcast %cst_52 : f32 to vector<1x128xf32>
    %165 = arith.addf %164, %163 : vector<1x128xf32>
    %166 = arith.divf %164, %165 : vector<1x128xf32>
    %167 = arith.mulf %158, %136 : vector<1x128xf32>
    %168 = arith.mulf %152, %160 : vector<1x128xf32>
    %169 = arith.addf %167, %168 : vector<1x128xf32>
    %170 = math.tanh %169 : vector<1x128xf32>
    %171 = arith.mulf %166, %170 : vector<1x128xf32>
    %172 = arith.index_cast %141 : i32 to index
    %c0_53 = arith.constant 0 : index
    %173 = vector.load %arg10[%172, %c0_53] : memref<8x128xf32, #tpu.memory_space<vmem>>, vector<1x128xf32>
    tpu.vector_store %arg10[%172, %c0_53], %171 {strides = array<i32>} : memref<8x128xf32, #tpu.memory_space<vmem>>, vector<1x128xf32>,
    %c5_i32 = arith.constant 5 : i32
    %c1_i32_54 = arith.constant 1 : i32
    %174 = arith.muli %c5_i32, %c1_i32_54 : i32
    %175 = arith.index_cast %174 : i32 to index
    %c0_55 = arith.constant 0 : index
    %176 = vector.load %arg11[%175, %c0_55] : memref<8x512xf32, #tpu.memory_space<vmem>>, vector<1x512xf32>
    %c0_56 = arith.constant 0 : index
    %c0_57 = arith.constant 0 : index
    %177 = vector.load %arg2[%c0_56, %c0_57] : memref<128x512xf32, #tpu.memory_space<vmem>>, vector<128x512xf32>
    %cst_58 = arith.constant dense<0.000000e+00> : vector<1x512xf32>
    %178 = tpu.matmul %171, %177, %cst_58 {dimension_numbers = #tpu.dot_dimension_numbers<[1], [0], [0], [1], [0, 0, 1, 1], [], []>} : vector<1x128xf32>, vector<128x512xf32>, vector<1x512xf32> -> vector<1x512xf32>
    %179 = arith.addf %176, %178 : vector<1x512xf32>
    %180 = vector.extract_strided_slice %179 {offsets = [0, 0], sizes = [1, 128], strides = [1, 1]} : vector<1x512xf32> to vector<1x128xf32>
    %181 = arith.negf %180 : vector<1x128xf32>
    %182 = math.exp %181 : vector<1x128xf32>
    %cst_59 = arith.constant 1.000000e+00 : f32
    %183 = vector.broadcast %cst_59 : f32 to vector<1x128xf32>
    %184 = arith.addf %183, %182 : vector<1x128xf32>
    %185 = arith.divf %183, %184 : vector<1x128xf32>
    %186 = vector.extract_strided_slice %179 {offsets = [0, 128], sizes = [1, 128], strides = [1, 1]} : vector<1x512xf32> to vector<1x128xf32>
    %187 = arith.negf %186 : vector<1x128xf32>
    %188 = math.exp %187 : vector<1x128xf32>
    %cst_60 = arith.constant 1.000000e+00 : f32
    %189 = vector.broadcast %cst_60 : f32 to vector<1x128xf32>
    %190 = arith.addf %189, %188 : vector<1x128xf32>
    %191 = arith.divf %189, %190 : vector<1x128xf32>
    %192 = vector.extract_strided_slice %179 {offsets = [0, 256], sizes = [1, 128], strides = [1, 1]} : vector<1x512xf32> to vector<1x128xf32>
    %193 = math.tanh %192 : vector<1x128xf32>
    %194 = vector.extract_strided_slice %179 {offsets = [0, 384], sizes = [1, 128], strides = [1, 1]} : vector<1x512xf32> to vector<1x128xf32>
    %195 = arith.negf %194 : vector<1x128xf32>
    %196 = math.exp %195 : vector<1x128xf32>
    %cst_61 = arith.constant 1.000000e+00 : f32
    %197 = vector.broadcast %cst_61 : f32 to vector<1x128xf32>
    %198 = arith.addf %197, %196 : vector<1x128xf32>
    %199 = arith.divf %197, %198 : vector<1x128xf32>
    %200 = arith.mulf %191, %169 : vector<1x128xf32>
    %201 = arith.mulf %185, %193 : vector<1x128xf32>
    %202 = arith.addf %200, %201 : vector<1x128xf32>
    %203 = math.tanh %202 : vector<1x128xf32>
    %204 = arith.mulf %199, %203 : vector<1x128xf32>
    %205 = arith.index_cast %174 : i32 to index
    %c0_62 = arith.constant 0 : index
    %206 = vector.load %arg10[%205, %c0_62] : memref<8x128xf32, #tpu.memory_space<vmem>>, vector<1x128xf32>
    tpu.vector_store %arg10[%205, %c0_62], %204 {strides = array<i32>} : memref<8x128xf32, #tpu.memory_space<vmem>>, vector<1x128xf32>,
    %c6_i32 = arith.constant 6 : i32
    %c1_i32_63 = arith.constant 1 : i32
    %207 = arith.muli %c6_i32, %c1_i32_63 : i32
    %208 = arith.index_cast %207 : i32 to index
    %c0_64 = arith.constant 0 : index
    %209 = vector.load %arg11[%208, %c0_64] : memref<8x512xf32, #tpu.memory_space<vmem>>, vector<1x512xf32>
    %c0_65 = arith.constant 0 : index
    %c0_66 = arith.constant 0 : index
    %210 = vector.load %arg2[%c0_65, %c0_66] : memref<128x512xf32, #tpu.memory_space<vmem>>, vector<128x512xf32>
    %cst_67 = arith.constant dense<0.000000e+00> : vector<1x512xf32>
    %211 = tpu.matmul %204, %210, %cst_67 {dimension_numbers = #tpu.dot_dimension_numbers<[1], [0], [0], [1], [0, 0, 1, 1], [], []>} : vector<1x128xf32>, vector<128x512xf32>, vector<1x512xf32> -> vector<1x512xf32>
    %212 = arith.addf %209, %211 : vector<1x512xf32>
    %213 = vector.extract_strided_slice %212 {offsets = [0, 0], sizes = [1, 128], strides = [1, 1]} : vector<1x512xf32> to vector<1x128xf32>
    %214 = arith.negf %213 : vector<1x128xf32>
    %215 = math.exp %214 : vector<1x128xf32>
    %cst_68 = arith.constant 1.000000e+00 : f32
    %216 = vector.broadcast %cst_68 : f32 to vector<1x128xf32>
    %217 = arith.addf %216, %215 : vector<1x128xf32>
    %218 = arith.divf %216, %217 : vector<1x128xf32>
    %219 = vector.extract_strided_slice %212 {offsets = [0, 128], sizes = [1, 128], strides = [1, 1]} : vector<1x512xf32> to vector<1x128xf32>
    %220 = arith.negf %219 : vector<1x128xf32>
    %221 = math.exp %220 : vector<1x128xf32>
    %cst_69 = arith.constant 1.000000e+00 : f32
    %222 = vector.broadcast %cst_69 : f32 to vector<1x128xf32>
    %223 = arith.addf %222, %221 : vector<1x128xf32>
    %224 = arith.divf %222, %223 : vector<1x128xf32>
    %225 = vector.extract_strided_slice %212 {offsets = [0, 256], sizes = [1, 128], strides = [1, 1]} : vector<1x512xf32> to vector<1x128xf32>
    %226 = math.tanh %225 : vector<1x128xf32>
    %227 = vector.extract_strided_slice %212 {offsets = [0, 384], sizes = [1, 128], strides = [1, 1]} : vector<1x512xf32> to vector<1x128xf32>
    %228 = arith.negf %227 : vector<1x128xf32>
    %229 = math.exp %228 : vector<1x128xf32>
    %cst_70 = arith.constant 1.000000e+00 : f32
    %230 = vector.broadcast %cst_70 : f32 to vector<1x128xf32>
    %231 = arith.addf %230, %229 : vector<1x128xf32>
    %232 = arith.divf %230, %231 : vector<1x128xf32>
    %233 = arith.mulf %224, %202 : vector<1x128xf32>
    %234 = arith.mulf %218, %226 : vector<1x128xf32>
    %235 = arith.addf %233, %234 : vector<1x128xf32>
    %236 = math.tanh %235 : vector<1x128xf32>
    %237 = arith.mulf %232, %236 : vector<1x128xf32>
    %238 = arith.index_cast %207 : i32 to index
    %c0_71 = arith.constant 0 : index
    %239 = vector.load %arg10[%238, %c0_71] : memref<8x128xf32, #tpu.memory_space<vmem>>, vector<1x128xf32>
    tpu.vector_store %arg10[%238, %c0_71], %237 {strides = array<i32>} : memref<8x128xf32, #tpu.memory_space<vmem>>, vector<1x128xf32>,
    %c7_i32 = arith.constant 7 : i32
    %c1_i32_72 = arith.constant 1 : i32
    %240 = arith.muli %c7_i32, %c1_i32_72 : i32
    %241 = arith.index_cast %240 : i32 to index
    %c0_73 = arith.constant 0 : index
    %242 = vector.load %arg11[%241, %c0_73] : memref<8x512xf32, #tpu.memory_space<vmem>>, vector<1x512xf32>
    %c0_74 = arith.constant 0 : index
    %c0_75 = arith.constant 0 : index
    %243 = vector.load %arg2[%c0_74, %c0_75] : memref<128x512xf32, #tpu.memory_space<vmem>>, vector<128x512xf32>
    %cst_76 = arith.constant dense<0.000000e+00> : vector<1x512xf32>
    %244 = tpu.matmul %237, %243, %cst_76 {dimension_numbers = #tpu.dot_dimension_numbers<[1], [0], [0], [1], [0, 0, 1, 1], [], []>} : vector<1x128xf32>, vector<128x512xf32>, vector<1x512xf32> -> vector<1x512xf32>
    %245 = arith.addf %242, %244 : vector<1x512xf32>
    %246 = vector.extract_strided_slice %245 {offsets = [0, 0], sizes = [1, 128], strides = [1, 1]} : vector<1x512xf32> to vector<1x128xf32>
    %247 = arith.negf %246 : vector<1x128xf32>
    %248 = math.exp %247 : vector<1x128xf32>
    %cst_77 = arith.constant 1.000000e+00 : f32
    %249 = vector.broadcast %cst_77 : f32 to vector<1x128xf32>
    %250 = arith.addf %249, %248 : vector<1x128xf32>
    %251 = arith.divf %249, %250 : vector<1x128xf32>
    %252 = vector.extract_strided_slice %245 {offsets = [0, 128], sizes = [1, 128], strides = [1, 1]} : vector<1x512xf32> to vector<1x128xf32>
    %253 = arith.negf %252 : vector<1x128xf32>
    %254 = math.exp %253 : vector<1x128xf32>
    %cst_78 = arith.constant 1.000000e+00 : f32
    %255 = vector.broadcast %cst_78 : f32 to vector<1x128xf32>
    %256 = arith.addf %255, %254 : vector<1x128xf32>
    %257 = arith.divf %255, %256 : vector<1x128xf32>
    %258 = vector.extract_strided_slice %245 {offsets = [0, 256], sizes = [1, 128], strides = [1, 1]} : vector<1x512xf32> to vector<1x128xf32>
    %259 = math.tanh %258 : vector<1x128xf32>
    %260 = vector.extract_strided_slice %245 {offsets = [0, 384], sizes = [1, 128], strides = [1, 1]} : vector<1x512xf32> to vector<1x128xf32>
    %261 = arith.negf %260 : vector<1x128xf32>
    %262 = math.exp %261 : vector<1x128xf32>
    %cst_79 = arith.constant 1.000000e+00 : f32
    %263 = vector.broadcast %cst_79 : f32 to vector<1x128xf32>
    %264 = arith.addf %263, %262 : vector<1x128xf32>
    %265 = arith.divf %263, %264 : vector<1x128xf32>
    %266 = arith.mulf %257, %235 : vector<1x128xf32>
    %267 = arith.mulf %251, %259 : vector<1x128xf32>
    %268 = arith.addf %266, %267 : vector<1x128xf32>
    %269 = math.tanh %268 : vector<1x128xf32>
    %270 = arith.mulf %265, %269 : vector<1x128xf32>
    %271 = arith.index_cast %240 : i32 to index
    %c0_80 = arith.constant 0 : index
    %272 = vector.load %arg10[%271, %c0_80] : memref<8x128xf32, #tpu.memory_space<vmem>>, vector<1x128xf32>
    tpu.vector_store %arg10[%271, %c0_80], %270 {strides = array<i32>} : memref<8x128xf32, #tpu.memory_space<vmem>>, vector<1x128xf32>,
    %c8_i32 = arith.constant 8 : i32
    %c0_81 = arith.constant 0 : index
    %c0_82 = arith.constant 0 : index
    %273 = vector.load %arg10[%c0_81, %c0_82] : memref<8x128xf32, #tpu.memory_space<vmem>>, vector<8x128xf32>
    %c0_83 = arith.constant 0 : index
    %c0_84 = arith.constant 0 : index
    %274 = vector.load %arg4[%c0_83, %c0_84] : memref<128x512xf32, #tpu.memory_space<vmem>>, vector<128x512xf32>
    %cst_85 = arith.constant dense<0.000000e+00> : vector<8x512xf32>
    %275 = tpu.matmul %273, %274, %cst_85 {dimension_numbers = #tpu.dot_dimension_numbers<[1], [0], [0], [1], [0, 0, 1, 1], [], []>} : vector<8x128xf32>, vector<128x512xf32>, vector<8x512xf32> -> vector<8x512xf32>
    %c0_86 = arith.constant 0 : index
    %c0_87 = arith.constant 0 : index
    %276 = vector.load %arg6[%c0_86, %c0_87] : memref<1x512xf32, #tpu.memory_space<vmem>>, vector<1x512xf32>
    %277 = vector.broadcast %276 : vector<1x512xf32> to vector<8x512xf32>
    %278 = arith.addf %275, %277 : vector<8x512xf32>
    %c0_88 = arith.constant 0 : index
    %c0_89 = arith.constant 0 : index
    %279 = vector.load %arg11[%c0_88, %c0_89] : memref<8x512xf32, #tpu.memory_space<vmem>>, vector<8x512xf32>
    tpu.vector_store %arg11[%c0_88, %c0_89], %278 {strides = array<i32>} : memref<8x512xf32, #tpu.memory_space<vmem>>, vector<8x512xf32>,
    %cst_90 = arith.constant 0.000000e+00 : f32
    %280 = vector.broadcast %cst_90 : f32 to vector<1x128xf32>
    %cst_91 = arith.constant 0.000000e+00 : f32
    %281 = vector.broadcast %cst_91 : f32 to vector<1x128xf32>
    %c0_i32_92 = arith.constant 0 : i32
    %c1_i32_93 = arith.constant 1 : i32
    %282 = arith.muli %c0_i32_92, %c1_i32_93 : i32
    %283 = arith.index_cast %282 : i32 to index
    %c0_94 = arith.constant 0 : index
    %284 = vector.load %arg11[%283, %c0_94] : memref<8x512xf32, #tpu.memory_space<vmem>>, vector<1x512xf32>
    %c0_95 = arith.constant 0 : index
    %c0_96 = arith.constant 0 : index
    %285 = vector.load %arg5[%c0_95, %c0_96] : memref<128x512xf32, #tpu.memory_space<vmem>>, vector<128x512xf32>
    %cst_97 = arith.constant dense<0.000000e+00> : vector<1x512xf32>
    %286 = tpu.matmul %280, %285, %cst_97 {dimension_numbers = #tpu.dot_dimension_numbers<[1], [0], [0], [1], [0, 0, 1, 1], [], []>} : vector<1x128xf32>, vector<128x512xf32>, vector<1x512xf32> -> vector<1x512xf32>
    %287 = arith.addf %284, %286 : vector<1x512xf32>
    %288 = vector.extract_strided_slice %287 {offsets = [0, 0], sizes = [1, 128], strides = [1, 1]} : vector<1x512xf32> to vector<1x128xf32>
    %289 = arith.negf %288 : vector<1x128xf32>
    %290 = math.exp %289 : vector<1x128xf32>
    %cst_98 = arith.constant 1.000000e+00 : f32
    %291 = vector.broadcast %cst_98 : f32 to vector<1x128xf32>
    %292 = arith.addf %291, %290 : vector<1x128xf32>
    %293 = arith.divf %291, %292 : vector<1x128xf32>
    %294 = vector.extract_strided_slice %287 {offsets = [0, 128], sizes = [1, 128], strides = [1, 1]} : vector<1x512xf32> to vector<1x128xf32>
    %295 = arith.negf %294 : vector<1x128xf32>
    %296 = math.exp %295 : vector<1x128xf32>
    %cst_99 = arith.constant 1.000000e+00 : f32
    %297 = vector.broadcast %cst_99 : f32 to vector<1x128xf32>
    %298 = arith.addf %297, %296 : vector<1x128xf32>
    %299 = arith.divf %297, %298 : vector<1x128xf32>
    %300 = vector.extract_strided_slice %287 {offsets = [0, 256], sizes = [1, 128], strides = [1, 1]} : vector<1x512xf32> to vector<1x128xf32>
    %301 = math.tanh %300 : vector<1x128xf32>
    %302 = vector.extract_strided_slice %287 {offsets = [0, 384], sizes = [1, 128], strides = [1, 1]} : vector<1x512xf32> to vector<1x128xf32>
    %303 = arith.negf %302 : vector<1x128xf32>
    %304 = math.exp %303 : vector<1x128xf32>
    %cst_100 = arith.constant 1.000000e+00 : f32
    %305 = vector.broadcast %cst_100 : f32 to vector<1x128xf32>
    %306 = arith.addf %305, %304 : vector<1x128xf32>
    %307 = arith.divf %305, %306 : vector<1x128xf32>
    %308 = arith.mulf %299, %281 : vector<1x128xf32>
    %309 = arith.mulf %293, %301 : vector<1x128xf32>
    %310 = arith.addf %308, %309 : vector<1x128xf32>
    %311 = math.tanh %310 : vector<1x128xf32>
    %312 = arith.mulf %307, %311 : vector<1x128xf32>
    %c1_i32_101 = arith.constant 1 : i32
    %c1_i32_102 = arith.constant 1 : i32
    %313 = arith.muli %c1_i32_101, %c1_i32_102 : i32
    %314 = arith.index_cast %313 : i32 to index
    %c0_103 = arith.constant 0 : index
    %315 = vector.load %arg11[%314, %c0_103] : memref<8x512xf32, #tpu.memory_space<vmem>>, vector<1x512xf32>
    %c0_104 = arith.constant 0 : index
    %c0_105 = arith.constant 0 : index
    %316 = vector.load %arg5[%c0_104, %c0_105] : memref<128x512xf32, #tpu.memory_space<vmem>>, vector<128x512xf32>
    %cst_106 = arith.constant dense<0.000000e+00> : vector<1x512xf32>
    %317 = tpu.matmul %312, %316, %cst_106 {dimension_numbers = #tpu.dot_dimension_numbers<[1], [0], [0], [1], [0, 0, 1, 1], [], []>} : vector<1x128xf32>, vector<128x512xf32>, vector<1x512xf32> -> vector<1x512xf32>
    %318 = arith.addf %315, %317 : vector<1x512xf32>
    %319 = vector.extract_strided_slice %318 {offsets = [0, 0], sizes = [1, 128], strides = [1, 1]} : vector<1x512xf32> to vector<1x128xf32>
    %320 = arith.negf %319 : vector<1x128xf32>
    %321 = math.exp %320 : vector<1x128xf32>
    %cst_107 = arith.constant 1.000000e+00 : f32
    %322 = vector.broadcast %cst_107 : f32 to vector<1x128xf32>
    %323 = arith.addf %322, %321 : vector<1x128xf32>
    %324 = arith.divf %322, %323 : vector<1x128xf32>
    %325 = vector.extract_strided_slice %318 {offsets = [0, 128], sizes = [1, 128], strides = [1, 1]} : vector<1x512xf32> to vector<1x128xf32>
    %326 = arith.negf %325 : vector<1x128xf32>
    %327 = math.exp %326 : vector<1x128xf32>
    %cst_108 = arith.constant 1.000000e+00 : f32
    %328 = vector.broadcast %cst_108 : f32 to vector<1x128xf32>
    %329 = arith.addf %328, %327 : vector<1x128xf32>
    %330 = arith.divf %328, %329 : vector<1x128xf32>
    %331 = vector.extract_strided_slice %318 {offsets = [0, 256], sizes = [1, 128], strides = [1, 1]} : vector<1x512xf32> to vector<1x128xf32>
    %332 = math.tanh %331 : vector<1x128xf32>
    %333 = vector.extract_strided_slice %318 {offsets = [0, 384], sizes = [1, 128], strides = [1, 1]} : vector<1x512xf32> to vector<1x128xf32>
    %334 = arith.negf %333 : vector<1x128xf32>
    %335 = math.exp %334 : vector<1x128xf32>
    %cst_109 = arith.constant 1.000000e+00 : f32
    %336 = vector.broadcast %cst_109 : f32 to vector<1x128xf32>
    %337 = arith.addf %336, %335 : vector<1x128xf32>
    %338 = arith.divf %336, %337 : vector<1x128xf32>
    %339 = arith.mulf %330, %310 : vector<1x128xf32>
    %340 = arith.mulf %324, %332 : vector<1x128xf32>
    %341 = arith.addf %339, %340 : vector<1x128xf32>
    %342 = math.tanh %341 : vector<1x128xf32>
    %343 = arith.mulf %338, %342 : vector<1x128xf32>
    %c2_i32_110 = arith.constant 2 : i32
    %c1_i32_111 = arith.constant 1 : i32
    %344 = arith.muli %c2_i32_110, %c1_i32_111 : i32
    %345 = arith.index_cast %344 : i32 to index
    %c0_112 = arith.constant 0 : index
    %346 = vector.load %arg11[%345, %c0_112] : memref<8x512xf32, #tpu.memory_space<vmem>>, vector<1x512xf32>
    %c0_113 = arith.constant 0 : index
    %c0_114 = arith.constant 0 : index
    %347 = vector.load %arg5[%c0_113, %c0_114] : memref<128x512xf32, #tpu.memory_space<vmem>>, vector<128x512xf32>
    %cst_115 = arith.constant dense<0.000000e+00> : vector<1x512xf32>
    %348 = tpu.matmul %343, %347, %cst_115 {dimension_numbers = #tpu.dot_dimension_numbers<[1], [0], [0], [1], [0, 0, 1, 1], [], []>} : vector<1x128xf32>, vector<128x512xf32>, vector<1x512xf32> -> vector<1x512xf32>
    %349 = arith.addf %346, %348 : vector<1x512xf32>
    %350 = vector.extract_strided_slice %349 {offsets = [0, 0], sizes = [1, 128], strides = [1, 1]} : vector<1x512xf32> to vector<1x128xf32>
    %351 = arith.negf %350 : vector<1x128xf32>
    %352 = math.exp %351 : vector<1x128xf32>
    %cst_116 = arith.constant 1.000000e+00 : f32
    %353 = vector.broadcast %cst_116 : f32 to vector<1x128xf32>
    %354 = arith.addf %353, %352 : vector<1x128xf32>
    %355 = arith.divf %353, %354 : vector<1x128xf32>
    %356 = vector.extract_strided_slice %349 {offsets = [0, 128], sizes = [1, 128], strides = [1, 1]} : vector<1x512xf32> to vector<1x128xf32>
    %357 = arith.negf %356 : vector<1x128xf32>
    %358 = math.exp %357 : vector<1x128xf32>
    %cst_117 = arith.constant 1.000000e+00 : f32
    %359 = vector.broadcast %cst_117 : f32 to vector<1x128xf32>
    %360 = arith.addf %359, %358 : vector<1x128xf32>
    %361 = arith.divf %359, %360 : vector<1x128xf32>
    %362 = vector.extract_strided_slice %349 {offsets = [0, 256], sizes = [1, 128], strides = [1, 1]} : vector<1x512xf32> to vector<1x128xf32>
    %363 = math.tanh %362 : vector<1x128xf32>
    %364 = vector.extract_strided_slice %349 {offsets = [0, 384], sizes = [1, 128], strides = [1, 1]} : vector<1x512xf32> to vector<1x128xf32>
    %365 = arith.negf %364 : vector<1x128xf32>
    %366 = math.exp %365 : vector<1x128xf32>
    %cst_118 = arith.constant 1.000000e+00 : f32
    %367 = vector.broadcast %cst_118 : f32 to vector<1x128xf32>
    %368 = arith.addf %367, %366 : vector<1x128xf32>
    %369 = arith.divf %367, %368 : vector<1x128xf32>
    %370 = arith.mulf %361, %341 : vector<1x128xf32>
    %371 = arith.mulf %355, %363 : vector<1x128xf32>
    %372 = arith.addf %370, %371 : vector<1x128xf32>
    %373 = math.tanh %372 : vector<1x128xf32>
    %374 = arith.mulf %369, %373 : vector<1x128xf32>
    %c3_i32_119 = arith.constant 3 : i32
    %c1_i32_120 = arith.constant 1 : i32
    %375 = arith.muli %c3_i32_119, %c1_i32_120 : i32
    %376 = arith.index_cast %375 : i32 to index
    %c0_121 = arith.constant 0 : index
    %377 = vector.load %arg11[%376, %c0_121] : memref<8x512xf32, #tpu.memory_space<vmem>>, vector<1x512xf32>
    %c0_122 = arith.constant 0 : index
    %c0_123 = arith.constant 0 : index
    %378 = vector.load %arg5[%c0_122, %c0_123] : memref<128x512xf32, #tpu.memory_space<vmem>>, vector<128x512xf32>
    %cst_124 = arith.constant dense<0.000000e+00> : vector<1x512xf32>
    %379 = tpu.matmul %374, %378, %cst_124 {dimension_numbers = #tpu.dot_dimension_numbers<[1], [0], [0], [1], [0, 0, 1, 1], [], []>} : vector<1x128xf32>, vector<128x512xf32>, vector<1x512xf32> -> vector<1x512xf32>
    %380 = arith.addf %377, %379 : vector<1x512xf32>
    %381 = vector.extract_strided_slice %380 {offsets = [0, 0], sizes = [1, 128], strides = [1, 1]} : vector<1x512xf32> to vector<1x128xf32>
    %382 = arith.negf %381 : vector<1x128xf32>
    %383 = math.exp %382 : vector<1x128xf32>
    %cst_125 = arith.constant 1.000000e+00 : f32
    %384 = vector.broadcast %cst_125 : f32 to vector<1x128xf32>
    %385 = arith.addf %384, %383 : vector<1x128xf32>
    %386 = arith.divf %384, %385 : vector<1x128xf32>
    %387 = vector.extract_strided_slice %380 {offsets = [0, 128], sizes = [1, 128], strides = [1, 1]} : vector<1x512xf32> to vector<1x128xf32>
    %388 = arith.negf %387 : vector<1x128xf32>
    %389 = math.exp %388 : vector<1x128xf32>
    %cst_126 = arith.constant 1.000000e+00 : f32
    %390 = vector.broadcast %cst_126 : f32 to vector<1x128xf32>
    %391 = arith.addf %390, %389 : vector<1x128xf32>
    %392 = arith.divf %390, %391 : vector<1x128xf32>
    %393 = vector.extract_strided_slice %380 {offsets = [0, 256], sizes = [1, 128], strides = [1, 1]} : vector<1x512xf32> to vector<1x128xf32>
    %394 = math.tanh %393 : vector<1x128xf32>
    %395 = vector.extract_strided_slice %380 {offsets = [0, 384], sizes = [1, 128], strides = [1, 1]} : vector<1x512xf32> to vector<1x128xf32>
    %396 = arith.negf %395 : vector<1x128xf32>
    %397 = math.exp %396 : vector<1x128xf32>
    %cst_127 = arith.constant 1.000000e+00 : f32
    %398 = vector.broadcast %cst_127 : f32 to vector<1x128xf32>
    %399 = arith.addf %398, %397 : vector<1x128xf32>
    %400 = arith.divf %398, %399 : vector<1x128xf32>
    %401 = arith.mulf %392, %372 : vector<1x128xf32>
    %402 = arith.mulf %386, %394 : vector<1x128xf32>
    %403 = arith.addf %401, %402 : vector<1x128xf32>
    %404 = math.tanh %403 : vector<1x128xf32>
    %405 = arith.mulf %400, %404 : vector<1x128xf32>
    %c4_i32_128 = arith.constant 4 : i32
    %c1_i32_129 = arith.constant 1 : i32
    %406 = arith.muli %c4_i32_128, %c1_i32_129 : i32
    %407 = arith.index_cast %406 : i32 to index
    %c0_130 = arith.constant 0 : index
    %408 = vector.load %arg11[%407, %c0_130] : memref<8x512xf32, #tpu.memory_space<vmem>>, vector<1x512xf32>
    %c0_131 = arith.constant 0 : index
    %c0_132 = arith.constant 0 : index
    %409 = vector.load %arg5[%c0_131, %c0_132] : memref<128x512xf32, #tpu.memory_space<vmem>>, vector<128x512xf32>
    %cst_133 = arith.constant dense<0.000000e+00> : vector<1x512xf32>
    %410 = tpu.matmul %405, %409, %cst_133 {dimension_numbers = #tpu.dot_dimension_numbers<[1], [0], [0], [1], [0, 0, 1, 1], [], []>} : vector<1x128xf32>, vector<128x512xf32>, vector<1x512xf32> -> vector<1x512xf32>
    %411 = arith.addf %408, %410 : vector<1x512xf32>
    %412 = vector.extract_strided_slice %411 {offsets = [0, 0], sizes = [1, 128], strides = [1, 1]} : vector<1x512xf32> to vector<1x128xf32>
    %413 = arith.negf %412 : vector<1x128xf32>
    %414 = math.exp %413 : vector<1x128xf32>
    %cst_134 = arith.constant 1.000000e+00 : f32
    %415 = vector.broadcast %cst_134 : f32 to vector<1x128xf32>
    %416 = arith.addf %415, %414 : vector<1x128xf32>
    %417 = arith.divf %415, %416 : vector<1x128xf32>
    %418 = vector.extract_strided_slice %411 {offsets = [0, 128], sizes = [1, 128], strides = [1, 1]} : vector<1x512xf32> to vector<1x128xf32>
    %419 = arith.negf %418 : vector<1x128xf32>
    %420 = math.exp %419 : vector<1x128xf32>
    %cst_135 = arith.constant 1.000000e+00 : f32
    %421 = vector.broadcast %cst_135 : f32 to vector<1x128xf32>
    %422 = arith.addf %421, %420 : vector<1x128xf32>
    %423 = arith.divf %421, %422 : vector<1x128xf32>
    %424 = vector.extract_strided_slice %411 {offsets = [0, 256], sizes = [1, 128], strides = [1, 1]} : vector<1x512xf32> to vector<1x128xf32>
    %425 = math.tanh %424 : vector<1x128xf32>
    %426 = vector.extract_strided_slice %411 {offsets = [0, 384], sizes = [1, 128], strides = [1, 1]} : vector<1x512xf32> to vector<1x128xf32>
    %427 = arith.negf %426 : vector<1x128xf32>
    %428 = math.exp %427 : vector<1x128xf32>
    %cst_136 = arith.constant 1.000000e+00 : f32
    %429 = vector.broadcast %cst_136 : f32 to vector<1x128xf32>
    %430 = arith.addf %429, %428 : vector<1x128xf32>
    %431 = arith.divf %429, %430 : vector<1x128xf32>
    %432 = arith.mulf %423, %403 : vector<1x128xf32>
    %433 = arith.mulf %417, %425 : vector<1x128xf32>
    %434 = arith.addf %432, %433 : vector<1x128xf32>
    %435 = math.tanh %434 : vector<1x128xf32>
    %436 = arith.mulf %431, %435 : vector<1x128xf32>
    %c5_i32_137 = arith.constant 5 : i32
    %c1_i32_138 = arith.constant 1 : i32
    %437 = arith.muli %c5_i32_137, %c1_i32_138 : i32
    %438 = arith.index_cast %437 : i32 to index
    %c0_139 = arith.constant 0 : index
    %439 = vector.load %arg11[%438, %c0_139] : memref<8x512xf32, #tpu.memory_space<vmem>>, vector<1x512xf32>
    %c0_140 = arith.constant 0 : index
    %c0_141 = arith.constant 0 : index
    %440 = vector.load %arg5[%c0_140, %c0_141] : memref<128x512xf32, #tpu.memory_space<vmem>>, vector<128x512xf32>
    %cst_142 = arith.constant dense<0.000000e+00> : vector<1x512xf32>
    %441 = tpu.matmul %436, %440, %cst_142 {dimension_numbers = #tpu.dot_dimension_numbers<[1], [0], [0], [1], [0, 0, 1, 1], [], []>} : vector<1x128xf32>, vector<128x512xf32>, vector<1x512xf32> -> vector<1x512xf32>
    %442 = arith.addf %439, %441 : vector<1x512xf32>
    %443 = vector.extract_strided_slice %442 {offsets = [0, 0], sizes = [1, 128], strides = [1, 1]} : vector<1x512xf32> to vector<1x128xf32>
    %444 = arith.negf %443 : vector<1x128xf32>
    %445 = math.exp %444 : vector<1x128xf32>
    %cst_143 = arith.constant 1.000000e+00 : f32
    %446 = vector.broadcast %cst_143 : f32 to vector<1x128xf32>
    %447 = arith.addf %446, %445 : vector<1x128xf32>
    %448 = arith.divf %446, %447 : vector<1x128xf32>
    %449 = vector.extract_strided_slice %442 {offsets = [0, 128], sizes = [1, 128], strides = [1, 1]} : vector<1x512xf32> to vector<1x128xf32>
    %450 = arith.negf %449 : vector<1x128xf32>
    %451 = math.exp %450 : vector<1x128xf32>
    %cst_144 = arith.constant 1.000000e+00 : f32
    %452 = vector.broadcast %cst_144 : f32 to vector<1x128xf32>
    %453 = arith.addf %452, %451 : vector<1x128xf32>
    %454 = arith.divf %452, %453 : vector<1x128xf32>
    %455 = vector.extract_strided_slice %442 {offsets = [0, 256], sizes = [1, 128], strides = [1, 1]} : vector<1x512xf32> to vector<1x128xf32>
    %456 = math.tanh %455 : vector<1x128xf32>
    %457 = vector.extract_strided_slice %442 {offsets = [0, 384], sizes = [1, 128], strides = [1, 1]} : vector<1x512xf32> to vector<1x128xf32>
    %458 = arith.negf %457 : vector<1x128xf32>
    %459 = math.exp %458 : vector<1x128xf32>
    %cst_145 = arith.constant 1.000000e+00 : f32
    %460 = vector.broadcast %cst_145 : f32 to vector<1x128xf32>
    %461 = arith.addf %460, %459 : vector<1x128xf32>
    %462 = arith.divf %460, %461 : vector<1x128xf32>
    %463 = arith.mulf %454, %434 : vector<1x128xf32>
    %464 = arith.mulf %448, %456 : vector<1x128xf32>
    %465 = arith.addf %463, %464 : vector<1x128xf32>
    %466 = math.tanh %465 : vector<1x128xf32>
    %467 = arith.mulf %462, %466 : vector<1x128xf32>
    %c6_i32_146 = arith.constant 6 : i32
    %c1_i32_147 = arith.constant 1 : i32
    %468 = arith.muli %c6_i32_146, %c1_i32_147 : i32
    %469 = arith.index_cast %468 : i32 to index
    %c0_148 = arith.constant 0 : index
    %470 = vector.load %arg11[%469, %c0_148] : memref<8x512xf32, #tpu.memory_space<vmem>>, vector<1x512xf32>
    %c0_149 = arith.constant 0 : index
    %c0_150 = arith.constant 0 : index
    %471 = vector.load %arg5[%c0_149, %c0_150] : memref<128x512xf32, #tpu.memory_space<vmem>>, vector<128x512xf32>
    %cst_151 = arith.constant dense<0.000000e+00> : vector<1x512xf32>
    %472 = tpu.matmul %467, %471, %cst_151 {dimension_numbers = #tpu.dot_dimension_numbers<[1], [0], [0], [1], [0, 0, 1, 1], [], []>} : vector<1x128xf32>, vector<128x512xf32>, vector<1x512xf32> -> vector<1x512xf32>
    %473 = arith.addf %470, %472 : vector<1x512xf32>
    %474 = vector.extract_strided_slice %473 {offsets = [0, 0], sizes = [1, 128], strides = [1, 1]} : vector<1x512xf32> to vector<1x128xf32>
    %475 = arith.negf %474 : vector<1x128xf32>
    %476 = math.exp %475 : vector<1x128xf32>
    %cst_152 = arith.constant 1.000000e+00 : f32
    %477 = vector.broadcast %cst_152 : f32 to vector<1x128xf32>
    %478 = arith.addf %477, %476 : vector<1x128xf32>
    %479 = arith.divf %477, %478 : vector<1x128xf32>
    %480 = vector.extract_strided_slice %473 {offsets = [0, 128], sizes = [1, 128], strides = [1, 1]} : vector<1x512xf32> to vector<1x128xf32>
    %481 = arith.negf %480 : vector<1x128xf32>
    %482 = math.exp %481 : vector<1x128xf32>
    %cst_153 = arith.constant 1.000000e+00 : f32
    %483 = vector.broadcast %cst_153 : f32 to vector<1x128xf32>
    %484 = arith.addf %483, %482 : vector<1x128xf32>
    %485 = arith.divf %483, %484 : vector<1x128xf32>
    %486 = vector.extract_strided_slice %473 {offsets = [0, 256], sizes = [1, 128], strides = [1, 1]} : vector<1x512xf32> to vector<1x128xf32>
    %487 = math.tanh %486 : vector<1x128xf32>
    %488 = vector.extract_strided_slice %473 {offsets = [0, 384], sizes = [1, 128], strides = [1, 1]} : vector<1x512xf32> to vector<1x128xf32>
    %489 = arith.negf %488 : vector<1x128xf32>
    %490 = math.exp %489 : vector<1x128xf32>
    %cst_154 = arith.constant 1.000000e+00 : f32
    %491 = vector.broadcast %cst_154 : f32 to vector<1x128xf32>
    %492 = arith.addf %491, %490 : vector<1x128xf32>
    %493 = arith.divf %491, %492 : vector<1x128xf32>
    %494 = arith.mulf %485, %465 : vector<1x128xf32>
    %495 = arith.mulf %479, %487 : vector<1x128xf32>
    %496 = arith.addf %494, %495 : vector<1x128xf32>
    %497 = math.tanh %496 : vector<1x128xf32>
    %498 = arith.mulf %493, %497 : vector<1x128xf32>
    %c7_i32_155 = arith.constant 7 : i32
    %c1_i32_156 = arith.constant 1 : i32
    %499 = arith.muli %c7_i32_155, %c1_i32_156 : i32
    %500 = arith.index_cast %499 : i32 to index
    %c0_157 = arith.constant 0 : index
    %501 = vector.load %arg11[%500, %c0_157] : memref<8x512xf32, #tpu.memory_space<vmem>>, vector<1x512xf32>
    %c0_158 = arith.constant 0 : index
    %c0_159 = arith.constant 0 : index
    %502 = vector.load %arg5[%c0_158, %c0_159] : memref<128x512xf32, #tpu.memory_space<vmem>>, vector<128x512xf32>
    %cst_160 = arith.constant dense<0.000000e+00> : vector<1x512xf32>
    %503 = tpu.matmul %498, %502, %cst_160 {dimension_numbers = #tpu.dot_dimension_numbers<[1], [0], [0], [1], [0, 0, 1, 1], [], []>} : vector<1x128xf32>, vector<128x512xf32>, vector<1x512xf32> -> vector<1x512xf32>
    %504 = arith.addf %501, %503 : vector<1x512xf32>
    %505 = vector.extract_strided_slice %504 {offsets = [0, 0], sizes = [1, 128], strides = [1, 1]} : vector<1x512xf32> to vector<1x128xf32>
    %506 = arith.negf %505 : vector<1x128xf32>
    %507 = math.exp %506 : vector<1x128xf32>
    %cst_161 = arith.constant 1.000000e+00 : f32
    %508 = vector.broadcast %cst_161 : f32 to vector<1x128xf32>
    %509 = arith.addf %508, %507 : vector<1x128xf32>
    %510 = arith.divf %508, %509 : vector<1x128xf32>
    %511 = vector.extract_strided_slice %504 {offsets = [0, 128], sizes = [1, 128], strides = [1, 1]} : vector<1x512xf32> to vector<1x128xf32>
    %512 = arith.negf %511 : vector<1x128xf32>
    %513 = math.exp %512 : vector<1x128xf32>
    %cst_162 = arith.constant 1.000000e+00 : f32
    %514 = vector.broadcast %cst_162 : f32 to vector<1x128xf32>
    %515 = arith.addf %514, %513 : vector<1x128xf32>
    %516 = arith.divf %514, %515 : vector<1x128xf32>
    %517 = vector.extract_strided_slice %504 {offsets = [0, 256], sizes = [1, 128], strides = [1, 1]} : vector<1x512xf32> to vector<1x128xf32>
    %518 = math.tanh %517 : vector<1x128xf32>
    %519 = vector.extract_strided_slice %504 {offsets = [0, 384], sizes = [1, 128], strides = [1, 1]} : vector<1x512xf32> to vector<1x128xf32>
    %520 = arith.negf %519 : vector<1x128xf32>
    %521 = math.exp %520 : vector<1x128xf32>
    %cst_163 = arith.constant 1.000000e+00 : f32
    %522 = vector.broadcast %cst_163 : f32 to vector<1x128xf32>
    %523 = arith.addf %522, %521 : vector<1x128xf32>
    %524 = arith.divf %522, %523 : vector<1x128xf32>
    %525 = arith.mulf %516, %496 : vector<1x128xf32>
    %526 = arith.mulf %510, %518 : vector<1x128xf32>
    %527 = arith.addf %525, %526 : vector<1x128xf32>
    %528 = math.tanh %527 : vector<1x128xf32>
    %529 = arith.mulf %524, %528 : vector<1x128xf32>
    %c8_i32_164 = arith.constant 8 : i32
    %c0_165 = arith.constant 0 : index
    %c0_166 = arith.constant 0 : index
    %530 = vector.load %arg7[%c0_165, %c0_166] : memref<128x1xf32, #tpu.memory_space<vmem>>, vector<128x1xf32>
    %cst_167 = arith.constant dense<0.000000e+00> : vector<1x1xf32>
    %531 = tpu.matmul %529, %530, %cst_167 {dimension_numbers = #tpu.dot_dimension_numbers<[1], [0], [0], [1], [0, 0, 1, 1], [], []>} : vector<1x128xf32>, vector<128x1xf32>, vector<1x1xf32> -> vector<1x1xf32>
    %c0_168 = arith.constant 0 : index
    %c0_169 = arith.constant 0 : index
    %532 = vector.load %arg8[%c0_168, %c0_169] : memref<1x1xf32, #tpu.memory_space<vmem>>, vector<1x1xf32>
    %533 = arith.addf %531, %532 : vector<1x1xf32>
    %c0_170 = arith.constant 0 : index
    %c0_171 = arith.constant 0 : index
    %534 = vector.load %arg9[%c0_170, %c0_171] : memref<1x1xf32, #tpu.memory_space<vmem>>, vector<1x1xf32>
    tpu.vector_store %arg9[%c0_170, %c0_171], %533 {strides = array<i32>} : memref<1x1xf32, #tpu.memory_space<vmem>>, vector<1x1xf32>,
    return
  }
}

</mosaic_0001>

<llo_original>
// kernel: _forward_impl.1
$region0: #{_forward_impl.1}
  #allocation0 [shape = 'u32[]', space=smem, size = 0x4, offset = 0x4, fixed_abs, tag = 'smem constant byte address 0x4 - core index']
  #allocation1 [shape = 'u32[144,128]{1,0:T(1,128)}', space=vmem, size = 0x12000, scoped, tag = 'internal scratch']
  #allocation2 [shape = 'f32[8,128]{1,0:T(8,128)}', space=vmem, size = 0x1000, scoped, tag = 'scratch operand']
  #allocation3 [shape = 'f32[8,512]{1,0:T(8,128)}', space=vmem, size = 0x4000, scoped, tag = 'scratch operand']
  #allocation4 [shape = 'f32[1,1]{1,0:T(1,128)S(1)}', space=vmem, size = 0x200, scoped, tag = 'scoped memory for _forward_impl.1']
  %s0 = inlined_call_operand.vmem [shape: f32[8,6], index: 0, kind: input, shape index: {}]
  %s1 = inlined_call_operand.hbm [shape: f32[6,512], index: 1, kind: input, shape index: {}]
  %s2 = inlined_call_operand.hbm [shape: f32[128,512], index: 2, kind: input, shape index: {}]
  %s3 = inlined_call_operand.vmem [shape: f32[1,512], index: 3, kind: input, shape index: {}]
  %s4 = inlined_call_operand.hbm [shape: f32[128,512], index: 4, kind: input, shape index: {}]
  %s5 = inlined_call_operand.hbm [shape: f32[128,512], index: 5, kind: input, shape index: {}]
  %s6 = inlined_call_operand.vmem [shape: f32[1,512], index: 6, kind: input, shape index: {}]
  %s7 = inlined_call_operand.hbm [shape: f32[128,1], index: 7, kind: input, shape index: {}]
  %s8 = inlined_call_operand.<no memory space> [shape: f32[1,1], index: 8, kind: input, shape index: {}]
  %s9 = inlined_call_operand.hbm [shape: f32[1,1], index: 9, kind: output, shape index: {}]
  %s10 = sld [smem:[#allocation0]]
  $region66: #{_forward_impl.1} parent=0
    _
  %s12 = ssub.s32 1, %s10
  %s13 = scalar_select 0, %s12, %s10
  %v14 = vstv %s8
  %15 = vst [vmem:[#allocation4] sm:$0x1] %v14
  $region1: #{_forward_impl.1} parent=0
    #allocation5 [shape = 'u8[16384]{0}', space=vmem, size = 0x4000, scoped, tag = 'input window, operand 1, single buffered']
    #allocation6 [shape = 's32[1]{0}', space=sflag, size = 0x4, scoped, tag = 'scoped memory for _forward_impl.1']
    #allocation7 [shape = 's32[1]{0}', space=sflag, size = 0x4, scoped, tag = 'scoped memory for _forward_impl.1']
    #allocation8 [shape = 'u8[262144]{0}', space=vmem, size = 0x40000, scoped, tag = 'input window, operand 2, single buffered']
    #allocation9 [shape = 's32[1]{0}', space=sflag, size = 0x4, scoped, tag = 'scoped memory for _forward_impl.1']
    #allocation10 [shape = 'u8[262144]{0}', space=vmem, size = 0x40000, scoped, tag = 'input window, operand 4, single buffered']
    #allocation11 [shape = 'u8[262144]{0}', space=vmem, size = 0x40000, scoped, tag = 'input window, operand 5, single buffered']
    #allocation12 [shape = 's32[1]{0}', space=sflag, size = 0x4, scoped, tag = 'scoped memory for _forward_impl.1']
    #allocation13 [shape = 'u8[65536]{0}', space=vmem, size = 0x10000, scoped, tag = 'input window, operand 7, single buffered']
    #allocation14 [shape = 'u8[512]{0}', space=vmem, size = 0x400, scoped, tag = 'output window, operand 0, single buffered']
    %16 = vsyncpa [#allocation6], 0
    %17 = vsyncpa [#allocation9], 0
    %18 = vsyncpa [#allocation12], 0
    %19 = vsyncpa [#allocation7], 0
    // Predicated region
    $region2: #{_forward_impl.1} parent=1 // pred_check
      _
    $region3: #{_forward_impl.1} parent=1 // pred_check_branch
      %21 = sbr.rel (0) target = $region5
    $region4: #{_forward_impl.1} parent=1 // pred_region
      _
    $region5: #{_forward_impl.1} parent=1 // pred_fallthru
      _
    // Predicated region
    $region6: #{_forward_impl.1} parent=1 // pred_check
      _
    $region7: #{_forward_impl.1} parent=1 // pred_check_branch
      %23 = sbr.rel (0) target = $region9
    $region8: #{_forward_impl.1} parent=1 // pred_region
      %s25 = ssub.s32 512, 512
      %26 = vsyncadd [#allocation6], %s25
      %s28 = sshll.u32 [#allocation5], 4
      %s29 = int_to_ptr.vmem [resolvable:$true] %s28
      %31 = dma.hbm_to_vmem [thread:$0]  %s1, 512, %s29, [#allocation6]
    $region9: #{_forward_impl.1} parent=1 // pred_fallthru
      _
    // Predicated region
    $region10: #{_forward_impl.1} parent=1 // pred_check
      _
    $region11: #{_forward_impl.1} parent=1 // pred_check_branch
      %33 = sbr.rel (0) target = $region13
    $region12: #{_forward_impl.1} parent=1 // pred_region
      %s35 = ssub.s32 8192, 8192
      %36 = vsyncadd [#allocation9], %s35
      %s37 = sshll.u32 [#allocation8], 4
      %s38 = int_to_ptr.vmem [resolvable:$true] %s37
      %43 = dma.hbm_to_vmem [thread:$0]  %s2, 8192, %s38, [#allocation9], 512, 512, 32
    $region13: #{_forward_impl.1} parent=1 // pred_fallthru
      _
    // Predicated region
    $region14: #{_forward_impl.1} parent=1 // pred_check
      _
    $region15: #{_forward_impl.1} parent=1 // pred_check_branch
      %45 = sbr.rel (0) target = $region17
    $region16: #{_forward_impl.1} parent=1 // pred_region
      _
    $region17: #{_forward_impl.1} parent=1 // pred_fallthru
      _
    // Predicated region
    $region18: #{_forward_impl.1} parent=1 // pred_check
      _
    $region19: #{_forward_impl.1} parent=1 // pred_check_branch
      %47 = sbr.rel (0) target = $region21
    $region20: #{_forward_impl.1} parent=1 // pred_region
      %s49 = ssub.s32 8192, 8192
      %50 = vsyncadd [#allocation9], %s49
      %s51 = sshll.u32 [#allocation10], 4
      %s52 = int_to_ptr.vmem [resolvable:$true] %s51
      %57 = dma.hbm_to_vmem [thread:$0]  %s4, 8192, %s52, [#allocation9], 512, 512, 32
    $region21: #{_forward_impl.1} parent=1 // pred_fallthru
      _
    // Predicated region
    $region22: #{_forward_impl.1} parent=1 // pred_check
      _
    $region23: #{_forward_impl.1} parent=1 // pred_check_branch
      %59 = sbr.rel (0) target = $region25
    $region24: #{_forward_impl.1} parent=1 // pred_region
      %s61 = ssub.s32 8192, 8192
      %62 = vsyncadd [#allocation12], %s61
      %s63 = sshll.u32 [#allocation11], 4
      %s64 = int_to_ptr.vmem [resolvable:$true] %s63
      %69 = dma.hbm_to_vmem [thread:$0]  %s5, 8192, %s64, [#allocation12], 512, 512, 32
    $region25: #{_forward_impl.1} parent=1 // pred_fallthru
      _
    // Predicated region
    $region26: #{_forward_impl.1} parent=1 // pred_check
      _
    $region27: #{_forward_impl.1} parent=1 // pred_check_branch
      %71 = sbr.rel (0) target = $region29
    $region28: #{_forward_impl.1} parent=1 // pred_region
      _
    $region29: #{_forward_impl.1} parent=1 // pred_fallthru
      _
    // Predicated region
    $region30: #{_forward_impl.1} parent=1 // pred_check
      _
    $region31: #{_forward_impl.1} parent=1 // pred_check_branch
      %73 = sbr.rel (0) target = $region33
    $region32: #{_forward_impl.1} parent=1 // pred_region
      %s75 = ssub.s32 2048, 2048
      %76 = vsyncadd [#allocation12], %s75
      %s77 = sshll.u32 [#allocation13], 4
      %s78 = int_to_ptr.vmem [resolvable:$true] %s77
      %83 = dma.hbm_to_vmem [thread:$0]  %s7, 2048, %s78, [#allocation12], 128, 128, 8
    $region33: #{_forward_impl.1} parent=1 // pred_fallthru
      _
    // Predicated region
    $region34: #{_forward_impl.1} parent=1 // pred_check
      _
    $region35: #{_forward_impl.1} parent=1 // pred_check_branch
      %85 = sbr.rel (0) target = $region37
    $region36: #{_forward_impl.1} parent=1 // pred_region
      _
    $region37: #{_forward_impl.1} parent=1 // pred_fallthru
      _
    // Predicated region
    $region38: #{_forward_impl.1} parent=1 // pred_check
      _
    $region39: #{_forward_impl.1} parent=1 // pred_check_branch
      %87 = sbr.rel (0) target = $region41
    $region40: #{_forward_impl.1} parent=1 // pred_region
      %88 = dma.done [#allocation6], 512
    $region41: #{_forward_impl.1} parent=1 // pred_fallthru
      _
    // Predicated region
    $region42: #{_forward_impl.1} parent=1 // pred_check
      _
    $region43: #{_forward_impl.1} parent=1 // pred_check_branch
      %90 = sbr.rel (0) target = $region45
    $region44: #{_forward_impl.1} parent=1 // pred_region
      %91 = dma.done [#allocation9], 8192
    $region45: #{_forward_impl.1} parent=1 // pred_fallthru
      _
    // Predicated region
    $region46: #{_forward_impl.1} parent=1 // pred_check
      _
    $region47: #{_forward_impl.1} parent=1 // pred_check_branch
      %93 = sbr.rel (0) target = $region49
    $region48: #{_forward_impl.1} parent=1 // pred_region
      %94 = dma.done [#allocation9], 8192
    $region49: #{_forward_impl.1} parent=1 // pred_fallthru
      _
    // Predicated region
    $region50: #{_forward_impl.1} parent=1 // pred_check
      _
    $region51: #{_forward_impl.1} parent=1 // pred_check_branch
      %96 = sbr.rel (0) target = $region53
    $region52: #{_forward_impl.1} parent=1 // pred_region
      %97 = dma.done [#allocation12], 8192
    $region53: #{_forward_impl.1} parent=1 // pred_fallthru
      _
    // Predicated region
    $region54: #{_forward_impl.1} parent=1 // pred_check
      _
    $region55: #{_forward_impl.1} parent=1 // pred_check_branch
      %99 = sbr.rel (0) target = $region57
    $region56: #{_forward_impl.1} parent=1 // pred_region
      %100 = dma.done [#allocation12], 2048
    $region57: #{_forward_impl.1} parent=1 // pred_fallthru
      _
    %v101 = vld [vmem:[%s0] sm:$0xff]
    %v102 = vld [vmem:[#allocation5] sm:$0x3f]
    %v103 = vld [vmem:[#allocation5 + $0x8] sm:$0x3f]
    %v104 = vld [vmem:[#allocation5 + $0x10] sm:$0x3f]
    %v105 = vld [vmem:[#allocation5 + $0x18] sm:$0x3f]
    %v106 = vld [vmem:[%s3] sm:$0xf]
    %v108 = vlaneseq
    %v109 = vshrl.u32 %v108, 7
    %v110 = vsub.s32 0, %v109
    %v111 = vrot.slane %v106, %v110
    %v112 = vlaneseq
    %v113 = vshrl.u32 %v112, 7
    %v114 = vsub.s32 1, %v113
    %v115 = vrot.slane %v106, %v114
    %v116 = vlaneseq
    %v117 = vshrl.u32 %v116, 7
    %v118 = vsub.s32 2, %v117
    %v119 = vrot.slane %v106, %v118
    %v120 = vlaneseq
    %v121 = vshrl.u32 %v120, 7
    %v122 = vsub.s32 3, %v121
    %v123 = vrot.slane %v106, %v122
    %vm128 = vcmask 48128
    %v130 = vsel %vm128, %v101, 0
    %vm132 = vcmask 1045504
    %v134 = vsel %vm132, %v102, 0
    %v137 = vsel %vm132, %v103, 0
    %v140 = vsel %vm132, %v104, 0
    %v143 = vsel %vm132, %v105, 0
    %145 = vmatprep.subr.mxu0 0.0
    %146 = vmatpush1.msra.mxu0 0.0
    %147 = vmatprep.subr.mxu0 0.0
    %148 = vmatpush1.msra.mxu0 0.0
    %149 = vmatprep.subr.mxu0 0.0
    %150 = vmatpush1.msra.mxu0 0.0
    %151 = vmatprep.subr.mxu0 0.0
    %152 = vmatpush1.msra.mxu0 0.0
    %153 = vmatprep.subr.mxu0 0.0
    %154 = vmatpush1.msra.mxu0 0.0
    %155 = vmatprep.subr.mxu0 0.0
    %156 = vmatpush1.msra.mxu0 0.0
    %157 = vmatprep.subr.mxu0 0.0
    %158 = vmatpush1.msra.mxu0 0.0
    %159 = vmatprep.subr.mxu0 0.0
    %160 = vmatpush1.msra.mxu0 0.0
    %161 = vmatprep.subr.mxu0 0.0
    %162 = vmatpush1.msra.mxu0 0.0
    %163 = vmatprep.subr.mxu0 0.0
    %164 = vmatpush1.msra.mxu0 0.0
    %165 = vmatprep.subr.mxu0 0.0
    %166 = vmatpush1.msra.mxu0 0.0
    %167 = vmatprep.subr.mxu0 0.0
    %168 = vmatpush1.msra.mxu0 0.0
    %169 = vmatprep.subr.mxu0 0.0
    %170 = vmatpush1.msra.mxu0 0.0
    %171 = vmatprep.subr.mxu0 0.0
    %172 = vmatpush1.msra.mxu0 0.0
    %173 = vmatprep.subr.mxu0 0.0
    %174 = vmatpush1.msra.mxu0 0.0
    %175 = vmatprep.subr.mxu0 %v137
    %176 = vmatpush1.msra.mxu0 %v134
    %177 = vmatprep.subr.mxu0 0.0
    %178 = vmatpush2.msra.mxu0 0.0
    %179 = vmatprep.subr.mxu0 0.0
    %180 = vmatpush2.msra.mxu0 0.0
    %181 = vmatprep.subr.mxu0 0.0
    %182 = vmatpush2.msra.mxu0 0.0
    %183 = vmatprep.subr.mxu0 0.0
    %184 = vmatpush2.msra.mxu0 0.0
    %185 = vmatprep.subr.mxu0 0.0
    %186 = vmatpush2.msra.mxu0 0.0
    %187 = vmatprep.subr.mxu0 0.0
    %188 = vmatpush2.msra.mxu0 0.0
    %189 = vmatprep.subr.mxu0 0.0
    %190 = vmatpush2.msra.mxu0 0.0
    %191 = vmatprep.subr.mxu0 0.0
    %192 = vmatpush2.msra.mxu0 0.0
    %193 = vmatprep.subr.mxu0 0.0
    %194 = vmatpush2.msra.mxu0 0.0
    %195 = vmatprep.subr.mxu0 0.0
    %196 = vmatpush2.msra.mxu0 0.0
    %197 = vmatprep.subr.mxu0 0.0
    %198 = vmatpush2.msra.mxu0 0.0
    %199 = vmatprep.subr.mxu0 0.0
    %200 = vmatpush2.msra.mxu0 0.0
    %201 = vmatprep.subr.mxu0 0.0
    %202 = vmatpush2.msra.mxu0 0.0
    %203 = vmatprep.subr.mxu0 0.0
    %204 = vmatpush2.msra.mxu0 0.0
    %205 = vmatprep.subr.mxu0 0.0
    %206 = vmatpush2.msra.mxu0 0.0
    %207 = vmatprep.subr.mxu0 0.0
    %208 = vmatpush2.msra.mxu0 0.0
    %209 = vmatprep.mubr.f32.mxu0 0.0
    %210 = vmatmul.mubr.f32.gmra.mxu0 %v130
    %v211 = vpop.f32.mrf.mxu0
    %v212 = vadd.f32 %v111, %v211
    %v213 = vpop.f32.mrf.mxu0
    %v214 = vadd.f32 %v115, %v213
    %215 = vdwg.mxu0
    %216 = vmatprep.subr.mxu0 0.0
    %217 = vmatpush1.msra.mxu0 0.0
    %218 = vmatprep.subr.mxu0 0.0
    %219 = vmatpush1.msra.mxu0 0.0
    %220 = vmatprep.subr.mxu0 0.0
    %221 = vmatpush1.msra.mxu0 0.0
    %222 = vmatprep.subr.mxu0 0.0
    %223 = vmatpush1.msra.mxu0 0.0
    %224 = vmatprep.subr.mxu0 0.0
    %225 = vmatpush1.msra.mxu0 0.0
    %226 = vmatprep.subr.mxu0 0.0
    %227 = vmatpush1.msra.mxu0 0.0
    %228 = vmatprep.subr.mxu0 0.0
    %229 = vmatpush1.msra.mxu0 0.0
    %230 = vmatprep.subr.mxu0 0.0
    %231 = vmatpush1.msra.mxu0 0.0
    %232 = vmatprep.subr.mxu0 0.0
    %233 = vmatpush1.msra.mxu0 0.0
    %234 = vmatprep.subr.mxu0 0.0
    %235 = vmatpush1.msra.mxu0 0.0
    %236 = vmatprep.subr.mxu0 0.0
    %237 = vmatpush1.msra.mxu0 0.0
    %238 = vmatprep.subr.mxu0 0.0
    %239 = vmatpush1.msra.mxu0 0.0
    %240 = vmatprep.subr.mxu0 0.0
    %241 = vmatpush1.msra.mxu0 0.0
    %242 = vmatprep.subr.mxu0 0.0
    %243 = vmatpush1.msra.mxu0 0.0
    %244 = vmatprep.subr.mxu0 0.0
    %245 = vmatpush1.msra.mxu0 0.0
    %246 = vmatprep.subr.mxu0 %v143
    %247 = vmatpush1.msra.mxu0 %v140
    %248 = vmatprep.subr.mxu0 0.0
    %249 = vmatpush2.msra.mxu0 0.0
    %250 = vmatprep.subr.mxu0 0.0
    %251 = vmatpush2.msra.mxu0 0.0
    %252 = vmatprep.subr.mxu0 0.0
    %253 = vmatpush2.msra.mxu0 0.0
    %254 = vmatprep.subr.mxu0 0.0
    %255 = vmatpush2.msra.mxu0 0.0
    %256 = vmatprep.subr.mxu0 0.0
    %257 = vmatpush2.msra.mxu0 0.0
    %258 = vmatprep.subr.mxu0 0.0
    %259 = vmatpush2.msra.mxu0 0.0
    %260 = vmatprep.subr.mxu0 0.0
    %261 = vmatpush2.msra.mxu0 0.0
    %262 = vmatprep.subr.mxu0 0.0
    %263 = vmatpush2.msra.mxu0 0.0
    %264 = vmatprep.subr.mxu0 0.0
    %265 = vmatpush2.msra.mxu0 0.0
    %266 = vmatprep.subr.mxu0 0.0
    %267 = vmatpush2.msra.mxu0 0.0
    %268 = vmatprep.subr.mxu0 0.0
    %269 = vmatpush2.msra.mxu0 0.0
    %270 = vmatprep.subr.mxu0 0.0
    %271 = vmatpush2.msra.mxu0 0.0
    %272 = vmatprep.subr.mxu0 0.0
    %273 = vmatpush2.msra.mxu0 0.0
    %274 = vmatprep.subr.mxu0 0.0
    %275 = vmatpush2.msra.mxu0 0.0
    %276 = vmatprep.subr.mxu0 0.0
    %277 = vmatpush2.msra.mxu0 0.0
    %278 = vmatprep.subr.mxu0 0.0
    %279 = vmatpush2.msra.mxu0 0.0
    %280 = vmatprep.mubr.f32.mxu0 0.0
    %281 = vmatmul.mubr.f32.gmra.mxu0 %v130
    %v282 = vpop.f32.mrf.mxu0
    %v283 = vadd.f32 %v119, %v282
    %v284 = vpop.f32.mrf.mxu0
    %v285 = vadd.f32 %v123, %v284
    %286 = vdwg.mxu0
    %287 = vst [vmem:[#allocation3] sm:$0xff] %v212
    %288 = vst [vmem:[#allocation3 + $0x8] sm:$0xff] %v214
    %289 = vst [vmem:[#allocation3 + $0x10] sm:$0xff] %v283
    %290 = vst [vmem:[#allocation3 + $0x18] sm:$0xff] %v285
    %v291 = vld [vmem:[#allocation3] ss:$8 sm:$0xf]
    %v292 = vld [vmem:[#allocation8] sm:$0xff]
    %v293 = vld [vmem:[#allocation8 + $0x8] sm:$0xff]
    %v294 = vld [vmem:[#allocation8 + $0x10] sm:$0xff]
    %v295 = vld [vmem:[#allocation8 + $0x18] sm:$0xff]
    %v296 = vld [vmem:[#allocation8 + $0x20] sm:$0xff]
    %v297 = vld [vmem:[#allocation8 + $0x28] sm:$0xff]
    %v298 = vld [vmem:[#allocation8 + $0x30] sm:$0xff]
    %v299 = vld [vmem:[#allocation8 + $0x38] sm:$0xff]
    %v300 = vld [vmem:[#allocation8 + $0x40] sm:$0xff]
    %v301 = vld [vmem:[#allocation8 + $0x48] sm:$0xff]
    %v302 = vld [vmem:[#allocation8 + $0x50] sm:$0xff]
    %v303 = vld [vmem:[#allocation8 + $0x58] sm:$0xff]
    %v304 = vld [vmem:[#allocation8 + $0x60] sm:$0xff]
    %v305 = vld [vmem:[#allocation8 + $0x68] sm:$0xff]
    %v306 = vld [vmem:[#allocation8 + $0x70] sm:$0xff]
    %v307 = vld [vmem:[#allocation8 + $0x78] sm:$0xff]
    %v308 = vld [vmem:[#allocation8 + $0x80] sm:$0xff]
    %v309 = vld [vmem:[#allocation8 + $0x88] sm:$0xff]
    %v310 = vld [vmem:[#allocation8 + $0x90] sm:$0xff]
    %v311 = vld [vmem:[#allocation8 + $0x98] sm:$0xff]
    %v312 = vld [vmem:[#allocation8 + $0xa0] sm:$0xff]
    %v313 = vld [vmem:[#allocation8 + $0xa8] sm:$0xff]
    %v314 = vld [vmem:[#allocation8 + $0xb0] sm:$0xff]
    %v315 = vld [vmem:[#allocation8 + $0xb8] sm:$0xff]
    %v316 = vld [vmem:[#allocation8 + $0xc0] sm:$0xff]
    %v317 = vld [vmem:[#allocation8 + $0xc8] sm:$0xff]
    %v318 = vld [vmem:[#allocation8 + $0xd0] sm:$0xff]
    %v319 = vld [vmem:[#allocation8 + $0xd8] sm:$0xff]
    %v320 = vld [vmem:[#allocation8 + $0xe0] sm:$0xff]
    %v321 = vld [vmem:[#allocation8 + $0xe8] sm:$0xff]
    %v322 = vld [vmem:[#allocation8 + $0xf0] sm:$0xff]
    %v323 = vld [vmem:[#allocation8 + $0xf8] sm:$0xff]
    %v324 = vld [vmem:[#allocation8 + $0x100] sm:$0xff]
    %v325 = vld [vmem:[#allocation8 + $0x108] sm:$0xff]
    %v326 = vld [vmem:[#allocation8 + $0x110] sm:$0xff]
    %v327 = vld [vmem:[#allocation8 + $0x118] sm:$0xff]
    %v328 = vld [vmem:[#allocation8 + $0x120] sm:$0xff]
    %v329 = vld [vmem:[#allocation8 + $0x128] sm:$0xff]
    %v330 = vld [vmem:[#allocation8 + $0x130] sm:$0xff]
    %v331 = vld [vmem:[#allocation8 + $0x138] sm:$0xff]
    %v332 = vld [vmem:[#allocation8 + $0x140] sm:$0xff]
    %v333 = vld [vmem:[#allocation8 + $0x148] sm:$0xff]
    %v334 = vld [vmem:[#allocation8 + $0x150] sm:$0xff]
    %v335 = vld [vmem:[#allocation8 + $0x158] sm:$0xff]
    %v336 = vld [vmem:[#allocation8 + $0x160] sm:$0xff]
    %v337 = vld [vmem:[#allocation8 + $0x168] sm:$0xff]
    %v338 = vld [vmem:[#allocation8 + $0x170] sm:$0xff]
    %v339 = vld [vmem:[#allocation8 + $0x178] sm:$0xff]
    %v340 = vld [vmem:[#allocation8 + $0x180] sm:$0xff]
    %v341 = vld [vmem:[#allocation8 + $0x188] sm:$0xff]
    %v342 = vld [vmem:[#allocation8 + $0x190] sm:$0xff]
    %v343 = vld [vmem:[#allocation8 + $0x198] sm:$0xff]
    %v344 = vld [vmem:[#allocation8 + $0x1a0] sm:$0xff]
    %v345 = vld [vmem:[#allocation8 + $0x1a8] sm:$0xff]
    %v346 = vld [vmem:[#allocation8 + $0x1b0] sm:$0xff]
    %v347 = vld [vmem:[#allocation8 + $0x1b8] sm:$0xff]
    %v348 = vld [vmem:[#allocation8 + $0x1c0] sm:$0xff]
    %v349 = vld [vmem:[#allocation8 + $0x1c8] sm:$0xff]
    %v350 = vld [vmem:[#allocation8 + $0x1d0] sm:$0xff]
    %v351 = vld [vmem:[#allocation8 + $0x1d8] sm:$0xff]
    %v352 = vld [vmem:[#allocation8 + $0x1e0] sm:$0xff]
    %v353 = vld [vmem:[#allocation8 + $0x1e8] sm:$0xff]
    %v354 = vld [vmem:[#allocation8 + $0x1f0] sm:$0xff]
    %v355 = vld [vmem:[#allocation8 + $0x1f8] sm:$0xff]
    %356 = vmatprep.subr.mxu0 %v353
    %357 = vmatpush1.msra.mxu0 %v352
    %358 = vmatprep.subr.mxu0 %v349
    %359 = vmatpush1.msra.mxu0 %v348
    %360 = vmatprep.subr.mxu0 %v345
    %361 = vmatpush1.msra.mxu0 %v344
    %362 = vmatprep.subr.mxu0 %v341
    %363 = vmatpush1.msra.mxu0 %v340
    %364 = vmatprep.subr.mxu0 %v337
    %365 = vmatpush1.msra.mxu0 %v336
    %366 = vmatprep.subr.mxu0 %v333
    %367 = vmatpush1.msra.mxu0 %v332
    %368 = vmatprep.subr.mxu0 %v329
    %369 = vmatpush1.msra.mxu0 %v328
    %370 = vmatprep.subr.mxu0 %v325
    %371 = vmatpush1.msra.mxu0 %v324
    %372 = vmatprep.subr.mxu0 %v321
    %373 = vmatpush1.msra.mxu0 %v320
    %374 = vmatprep.subr.mxu0 %v317
    %375 = vmatpush1.msra.mxu0 %v316
    %376 = vmatprep.subr.mxu0 %v313
    %377 = vmatpush1.msra.mxu0 %v312
    %378 = vmatprep.subr.mxu0 %v309
    %379 = vmatpush1.msra.mxu0 %v308
    %380 = vmatprep.subr.mxu0 %v305
    %381 = vmatpush1.msra.mxu0 %v304
    %382 = vmatprep.subr.mxu0 %v301
    %383 = vmatpush1.msra.mxu0 %v300
    %384 = vmatprep.subr.mxu0 %v297
    %385 = vmatpush1.msra.mxu0 %v296
    %386 = vmatprep.subr.mxu0 %v293
    %387 = vmatpush1.msra.mxu0 %v292
    %388 = vmatprep.subr.mxu0 0.0
    %389 = vmatpush2.msra.mxu0 0.0
    %390 = vmatprep.subr.mxu0 0.0
    %391 = vmatpush2.msra.mxu0 0.0
    %392 = vmatprep.subr.mxu0 0.0
    %393 = vmatpush2.msra.mxu0 0.0
    %394 = vmatprep.subr.mxu0 0.0
    %395 = vmatpush2.msra.mxu0 0.0
    %396 = vmatprep.subr.mxu0 0.0
    %397 = vmatpush2.msra.mxu0 0.0
    %398 = vmatprep.subr.mxu0 0.0
    %399 = vmatpush2.msra.mxu0 0.0
    %400 = vmatprep.subr.mxu0 0.0
    %401 = vmatpush2.msra.mxu0 0.0
    %402 = vmatprep.subr.mxu0 0.0
    %403 = vmatpush2.msra.mxu0 0.0
    %404 = vmatprep.subr.mxu0 0.0
    %405 = vmatpush2.msra.mxu0 0.0
    %406 = vmatprep.subr.mxu0 0.0
    %407 = vmatpush2.msra.mxu0 0.0
    %408 = vmatprep.subr.mxu0 0.0
    %409 = vmatpush2.msra.mxu0 0.0
    %410 = vmatprep.subr.mxu0 0.0
    %411 = vmatpush2.msra.mxu0 0.0
    %412 = vmatprep.subr.mxu0 0.0
    %413 = vmatpush2.msra.mxu0 0.0
    %414 = vmatprep.subr.mxu0 0.0
    %415 = vmatpush2.msra.mxu0 0.0
    %416 = vmatprep.subr.mxu0 0.0
    %417 = vmatpush2.msra.mxu0 0.0
    %418 = vmatprep.subr.mxu0 0.0
    %419 = vmatpush2.msra.mxu0 0.0
    %420 = vmatprep.mubr.f32.mxu0 0.0
    %421 = vmatmul.mubr.f32.gmra.mxu0 0.0
    %v422 = vpop.f32.mrf.mxu0
    %v423 = vadd.f32 0.0, %v422
    %v424 = vpop.f32.mrf.mxu0
    %v425 = vadd.f32 0.0, %v424
    %426 = vdwg.mxu0
    %427 = vmatprep.subr.mxu0 %v355
    %428 = vmatpush1.msra.mxu0 %v354
    %429 = vmatprep.subr.mxu0 %v351
    %430 = vmatpush1.msra.mxu0 %v350
    %431 = vmatprep.subr.mxu0 %v347
    %432 = vmatpush1.msra.mxu0 %v346
    %433 = vmatprep.subr.mxu0 %v343
    %434 = vmatpush1.msra.mxu0 %v342
    %435 = vmatprep.subr.mxu0 %v339
    %436 = vmatpush1.msra.mxu0 %v338
    %437 = vmatprep.subr.mxu0 %v335
    %438 = vmatpush1.msra.mxu0 %v334
    %439 = vmatprep.subr.mxu0 %v331
    %440 = vmatpush1.msra.mxu0 %v330
    %441 = vmatprep.subr.mxu0 %v327
    %442 = vmatpush1.msra.mxu0 %v326
    %443 = vmatprep.subr.mxu0 %v323
    %444 = vmatpush1.msra.mxu0 %v322
    %445 = vmatprep.subr.mxu0 %v319
    %446 = vmatpush1.msra.mxu0 %v318
    %447 = vmatprep.subr.mxu0 %v315
    %448 = vmatpush1.msra.mxu0 %v314
    %449 = vmatprep.subr.mxu0 %v311
    %450 = vmatpush1.msra.mxu0 %v310
    %451 = vmatprep.subr.mxu0 %v307
    %452 = vmatpush1.msra.mxu0 %v306
    %453 = vmatprep.subr.mxu0 %v303
    %454 = vmatpush1.msra.mxu0 %v302
    %455 = vmatprep.subr.mxu0 %v299
    %456 = vmatpush1.msra.mxu0 %v298
    %457 = vmatprep.subr.mxu0 %v295
    %458 = vmatpush1.msra.mxu0 %v294
    %459 = vmatprep.subr.mxu0 0.0
    %460 = vmatpush2.msra.mxu0 0.0
    %461 = vmatprep.subr.mxu0 0.0
    %462 = vmatpush2.msra.mxu0 0.0
    %463 = vmatprep.subr.mxu0 0.0
    %464 = vmatpush2.msra.mxu0 0.0
    %465 = vmatprep.subr.mxu0 0.0
    %466 = vmatpush2.msra.mxu0 0.0
    %467 = vmatprep.subr.mxu0 0.0
    %468 = vmatpush2.msra.mxu0 0.0
    %469 = vmatprep.subr.mxu0 0.0
    %470 = vmatpush2.msra.mxu0 0.0
    %471 = vmatprep.subr.mxu0 0.0
    %472 = vmatpush2.msra.mxu0 0.0
    %473 = vmatprep.subr.mxu0 0.0
    %474 = vmatpush2.msra.mxu0 0.0
    %475 = vmatprep.subr.mxu0 0.0
    %476 = vmatpush2.msra.mxu0 0.0
    %477 = vmatprep.subr.mxu0 0.0
    %478 = vmatpush2.msra.mxu0 0.0
    %479 = vmatprep.subr.mxu0 0.0
    %480 = vmatpush2.msra.mxu0 0.0
    %481 = vmatprep.subr.mxu0 0.0
    %482 = vmatpush2.msra.mxu0 0.0
    %483 = vmatprep.subr.mxu0 0.0
    %484 = vmatpush2.msra.mxu0 0.0
    %485 = vmatprep.subr.mxu0 0.0
    %486 = vmatpush2.msra.mxu0 0.0
    %487 = vmatprep.subr.mxu0 0.0
    %488 = vmatpush2.msra.mxu0 0.0
    %489 = vmatprep.subr.mxu0 0.0
    %490 = vmatpush2.msra.mxu0 0.0
    %491 = vmatprep.mubr.f32.mxu0 0.0
    %492 = vmatmul.mubr.f32.gmra.mxu0 0.0
    %v493 = vpop.f32.mrf.mxu0
    %v494 = vadd.f32 0.0, %v493
    %v495 = vpop.f32.mrf.mxu0
    %v496 = vadd.f32 0.0, %v495
    %497 = vdwg.mxu0
    %v502 = vcombine.low %v423, %v425
    %v503 = vcombine.low %v494, %v496
    %v505 = vunpack.c.l.s4 1966171168
    %v506 = vunpack.c.0.s8 %v505
    %v507 = vlaneseq
    %v508 = vshrl.u32 %v507, 7
    %v509 = vsub.s32 %v506, %v508
    %v510 = vrot.slane %v502, %v509
    %v512 = vunpack.c.l.s4 1966171168
    %v513 = vunpack.c.0.s8 %v512
    %v514 = vlaneseq
    %v515 = vshrl.u32 %v514, 7
    %v516 = vsub.s32 %v513, %v515
    %v517 = vrot.slane %v503, %v516
    %v518 = vcombine.low %v510, %v517
    %v520 = vunpack.c.l.s4 1966171168
    %v521 = vunpack.c.0.s8 %v520
    %v522 = vlaneseq
    %v523 = vshrl.u32 %v522, 7
    %v524 = vsub.s32 %v521, %v523
    %v525 = vrot.slane %v518, %v524
    %v527 = vadd.f32 %v291, %v525
    %v528 = vxor.u32 %v527, 2147483648
    %v529 = vmul.f32 %v528, 1.442695
    %v530 = vpow.pop %v529
    %v531 = vadd.f32 %v530, 1.0
    %v532 = vrcp.pop %v531
    %v533 = vmul.f32 1.0, %v532
    %v535 = vrot.slane %v527, 1
    %v537 = vxor.u32 %v535, 2147483648
    %v538 = vmul.f32 %v537, 1.442695
    %v539 = vpow.pop %v538
    %v540 = vadd.f32 %v539, 1.0
    %v541 = vrcp.pop %v540
    %v542 = vmul.f32 1.0, %v541
    %v543 = vrot.slane %v527, 2
    %v545 = vtanh.pop %v543
    %v546 = vrot.slane %v527, 3
    %v548 = vxor.u32 %v546, 2147483648
    %v549 = vmul.f32 %v548, 1.442695
    %v550 = vpow.pop %v549
    %v551 = vadd.f32 %v550, 1.0
    %v552 = vrcp.pop %v551
    %v553 = vmul.f32 1.0, %v552
    %v554 = vmul.f32 %v542, 0.0
    %v555 = vmul.f32 %v533, %v545
    %v556 = vadd.f32 %v554, %v555
    %v557 = vtanh.pop %v556
    %v558 = vmul.f32 %v553, %v557
    %559 = vst [vmem:[#allocation2] sm:$0x1] %v558
    %s560 = scalar_lea.vmem [#allocation3], 1
    %v561 = vld [vmem:[%s560] ss:$8 sm:$0xf]
    %v562 = vld [vmem:[#allocation8] sm:$0xff]
    %v563 = vld [vmem:[#allocation8 + $0x8] sm:$0xff]
    %v564 = vld [vmem:[#allocation8 + $0x10] sm:$0xff]
    %v565 = vld [vmem:[#allocation8 + $0x18] sm:$0xff]
    %v566 = vld [vmem:[#allocation8 + $0x20] sm:$0xff]
    %v567 = vld [vmem:[#allocation8 + $0x28] sm:$0xff]
    %v568 = vld [vmem:[#allocation8 + $0x30] sm:$0xff]
    %v569 = vld [vmem:[#allocation8 + $0x38] sm:$0xff]
    %v570 = vld [vmem:[#allocation8 + $0x40] sm:$0xff]
    %v571 = vld [vmem:[#allocation8 + $0x48] sm:$0xff]
    %v572 = vld [vmem:[#allocation8 + $0x50] sm:$0xff]
    %v573 = vld [vmem:[#allocation8 + $0x58] sm:$0xff]
    %v574 = vld [vmem:[#allocation8 + $0x60] sm:$0xff]
    %v575 = vld [vmem:[#allocation8 + $0x68] sm:$0xff]
    %v576 = vld [vmem:[#allocation8 + $0x70] sm:$0xff]
    %v577 = vld [vmem:[#allocation8 + $0x78] sm:$0xff]
    %v578 = vld [vmem:[#allocation8 + $0x80] sm:$0xff]
    %v579 = vld [vmem:[#allocation8 + $0x88] sm:$0xff]
    %v580 = vld [vmem:[#allocation8 + $0x90] sm:$0xff]
    %v581 = vld [vmem:[#allocation8 + $0x98] sm:$0xff]
    %v582 = vld [vmem:[#allocation8 + $0xa0] sm:$0xff]
    %v583 = vld [vmem:[#allocation8 + $0xa8] sm:$0xff]
    %v584 = vld [vmem:[#allocation8 + $0xb0] sm:$0xff]
    %v585 = vld [vmem:[#allocation8 + $0xb8] sm:$0xff]
    %v586 = vld [vmem:[#allocation8 + $0xc0] sm:$0xff]
    %v587 = vld [vmem:[#allocation8 + $0xc8] sm:$0xff]
    %v588 = vld [vmem:[#allocation8 + $0xd0] sm:$0xff]
    %v589 = vld [vmem:[#allocation8 + $0xd8] sm:$0xff]
    %v590 = vld [vmem:[#allocation8 + $0xe0] sm:$0xff]
    %v591 = vld [vmem:[#allocation8 + $0xe8] sm:$0xff]
    %v592 = vld [vmem:[#allocation8 + $0xf0] sm:$0xff]
    %v593 = vld [vmem:[#allocation8 + $0xf8] sm:$0xff]
    %v594 = vld [vmem:[#allocation8 + $0x100] sm:$0xff]
    %v595 = vld [vmem:[#allocation8 + $0x108] sm:$0xff]
    %v596 = vld [vmem:[#allocation8 + $0x110] sm:$0xff]
    %v597 = vld [vmem:[#allocation8 + $0x118] sm:$0xff]
    %v598 = vld [vmem:[#allocation8 + $0x120] sm:$0xff]
    %v599 = vld [vmem:[#allocation8 + $0x128] sm:$0xff]
    %v600 = vld [vmem:[#allocation8 + $0x130] sm:$0xff]
    %v601 = vld [vmem:[#allocation8 + $0x138] sm:$0xff]
    %v602 = vld [vmem:[#allocation8 + $0x140] sm:$0xff]
    %v603 = vld [vmem:[#allocation8 + $0x148] sm:$0xff]
    %v604 = vld [vmem:[#allocation8 + $0x150] sm:$0xff]
    %v605 = vld [vmem:[#allocation8 + $0x158] sm:$0xff]
    %v606 = vld [vmem:[#allocation8 + $0x160] sm:$0xff]
    %v607 = vld [vmem:[#allocation8 + $0x168] sm:$0xff]
    %v608 = vld [vmem:[#allocation8 + $0x170] sm:$0xff]
    %v609 = vld [vmem:[#allocation8 + $0x178] sm:$0xff]
    %v610 = vld [vmem:[#allocation8 + $0x180] sm:$0xff]
    %v611 = vld [vmem:[#allocation8 + $0x188] sm:$0xff]
    %v612 = vld [vmem:[#allocation8 + $0x190] sm:$0xff]
    %v613 = vld [vmem:[#allocation8 + $0x198] sm:$0xff]
    %v614 = vld [vmem:[#allocation8 + $0x1a0] sm:$0xff]
    %v615 = vld [vmem:[#allocation8 + $0x1a8] sm:$0xff]
    %v616 = vld [vmem:[#allocation8 + $0x1b0] sm:$0xff]
    %v617 = vld [vmem:[#allocation8 + $0x1b8] sm:$0xff]
    %v618 = vld [vmem:[#allocation8 + $0x1c0] sm:$0xff]
    %v619 = vld [vmem:[#allocation8 + $0x1c8] sm:$0xff]
    %v620 = vld [vmem:[#allocation8 + $0x1d0] sm:$0xff]
    %v621 = vld [vmem:[#allocation8 + $0x1d8] sm:$0xff]
    %v622 = vld [vmem:[#allocation8 + $0x1e0] sm:$0xff]
    %v623 = vld [vmem:[#allocation8 + $0x1e8] sm:$0xff]
    %v624 = vld [vmem:[#allocation8 + $0x1f0] sm:$0xff]
    %v625 = vld [vmem:[#allocation8 + $0x1f8] sm:$0xff]
    %626 = vmatprep.subr.mxu0 %v623
    %627 = vmatpush1.msra.mxu0 %v622
    %628 = vmatprep.subr.mxu0 %v619
    %629 = vmatpush1.msra.mxu0 %v618
    %630 = vmatprep.subr.mxu0 %v615
    %631 = vmatpush1.msra.mxu0 %v614
    %632 = vmatprep.subr.mxu0 %v611
    %633 = vmatpush1.msra.mxu0 %v610
    %634 = vmatprep.subr.mxu0 %v607
    %635 = vmatpush1.msra.mxu0 %v606
    %636 = vmatprep.subr.mxu0 %v603
    %637 = vmatpush1.msra.mxu0 %v602
    %638 = vmatprep.subr.mxu0 %v599
    %639 = vmatpush1.msra.mxu0 %v598
    %640 = vmatprep.subr.mxu0 %v595
    %641 = vmatpush1.msra.mxu0 %v594
    %642 = vmatprep.subr.mxu0 %v591
    %643 = vmatpush1.msra.mxu0 %v590
    %644 = vmatprep.subr.mxu0 %v587
    %645 = vmatpush1.msra.mxu0 %v586
    %646 = vmatprep.subr.mxu0 %v583
    %647 = vmatpush1.msra.mxu0 %v582
    %648 = vmatprep.subr.mxu0 %v579
    %649 = vmatpush1.msra.mxu0 %v578
    %650 = vmatprep.subr.mxu0 %v575
    %651 = vmatpush1.msra.mxu0 %v574
    %652 = vmatprep.subr.mxu0 %v571
    %653 = vmatpush1.msra.mxu0 %v570
    %654 = vmatprep.subr.mxu0 %v567
    %655 = vmatpush1.msra.mxu0 %v566
    %656 = vmatprep.subr.mxu0 %v563
    %657 = vmatpush1.msra.mxu0 %v562
    %658 = vmatprep.subr.mxu0 0.0
    %659 = vmatpush2.msra.mxu0 0.0
    %660 = vmatprep.subr.mxu0 0.0
    %661 = vmatpush2.msra.mxu0 0.0
    %662 = vmatprep.subr.mxu0 0.0
    %663 = vmatpush2.msra.mxu0 0.0
    %664 = vmatprep.subr.mxu0 0.0
    %665 = vmatpush2.msra.mxu0 0.0
    %666 = vmatprep.subr.mxu0 0.0
    %667 = vmatpush2.msra.mxu0 0.0
    %668 = vmatprep.subr.mxu0 0.0
    %669 = vmatpush2.msra.mxu0 0.0
    %670 = vmatprep.subr.mxu0 0.0
    %671 = vmatpush2.msra.mxu0 0.0
    %672 = vmatprep.subr.mxu0 0.0
    %673 = vmatpush2.msra.mxu0 0.0
    %674 = vmatprep.subr.mxu0 0.0
    %675 = vmatpush2.msra.mxu0 0.0
    %676 = vmatprep.subr.mxu0 0.0
    %677 = vmatpush2.msra.mxu0 0.0
    %678 = vmatprep.subr.mxu0 0.0
    %679 = vmatpush2.msra.mxu0 0.0
    %680 = vmatprep.subr.mxu0 0.0
    %681 = vmatpush2.msra.mxu0 0.0
    %682 = vmatprep.subr.mxu0 0.0
    %683 = vmatpush2.msra.mxu0 0.0
    %684 = vmatprep.subr.mxu0 0.0
    %685 = vmatpush2.msra.mxu0 0.0
    %686 = vmatprep.subr.mxu0 0.0
    %687 = vmatpush2.msra.mxu0 0.0
    %688 = vmatprep.subr.mxu0 0.0
    %689 = vmatpush2.msra.mxu0 0.0
    %690 = vmatprep.mubr.f32.mxu0 0.0
    %691 = vmatmul.mubr.f32.gmra.mxu0 %v558
    %v692 = vpop.f32.mrf.mxu0
    %v693 = vadd.f32 0.0, %v692
    %v694 = vpop.f32.mrf.mxu0
    %v695 = vadd.f32 0.0, %v694
    %696 = vdwg.mxu0
    %697 = vmatprep.subr.mxu0 %v625
    %698 = vmatpush1.msra.mxu0 %v624
    %699 = vmatprep.subr.mxu0 %v621
    %700 = vmatpush1.msra.mxu0 %v620
    %701 = vmatprep.subr.mxu0 %v617
    %702 = vmatpush1.msra.mxu0 %v616
    %703 = vmatprep.subr.mxu0 %v613
    %704 = vmatpush1.msra.mxu0 %v612
    %705 = vmatprep.subr.mxu0 %v609
    %706 = vmatpush1.msra.mxu0 %v608
    %707 = vmatprep.subr.mxu0 %v605
    %708 = vmatpush1.msra.mxu0 %v604
    %709 = vmatprep.subr.mxu0 %v601
    %710 = vmatpush1.msra.mxu0 %v600
    %711 = vmatprep.subr.mxu0 %v597
    %712 = vmatpush1.msra.mxu0 %v596
    %713 = vmatprep.subr.mxu0 %v593
    %714 = vmatpush1.msra.mxu0 %v592
    %715 = vmatprep.subr.mxu0 %v589
    %716 = vmatpush1.msra.mxu0 %v588
    %717 = vmatprep.subr.mxu0 %v585
    %718 = vmatpush1.msra.mxu0 %v584
    %719 = vmatprep.subr.mxu0 %v581
    %720 = vmatpush1.msra.mxu0 %v580
    %721 = vmatprep.subr.mxu0 %v577
    %722 = vmatpush1.msra.mxu0 %v576
    %723 = vmatprep.subr.mxu0 %v573
    %724 = vmatpush1.msra.mxu0 %v572
    %725 = vmatprep.subr.mxu0 %v569
    %726 = vmatpush1.msra.mxu0 %v568
    %727 = vmatprep.subr.mxu0 %v565
    %728 = vmatpush1.msra.mxu0 %v564
    %729 = vmatprep.subr.mxu0 0.0
    %730 = vmatpush2.msra.mxu0 0.0
    %731 = vmatprep.subr.mxu0 0.0
    %732 = vmatpush2.msra.mxu0 0.0
    %733 = vmatprep.subr.mxu0 0.0
    %734 = vmatpush2.msra.mxu0 0.0
    %735 = vmatprep.subr.mxu0 0.0
    %736 = vmatpush2.msra.mxu0 0.0
    %737 = vmatprep.subr.mxu0 0.0
    %738 = vmatpush2.msra.mxu0 0.0
    %739 = vmatprep.subr.mxu0 0.0
    %740 = vmatpush2.msra.mxu0 0.0
    %741 = vmatprep.subr.mxu0 0.0
    %742 = vmatpush2.msra.mxu0 0.0
    %743 = vmatprep.subr.mxu0 0.0
    %744 = vmatpush2.msra.mxu0 0.0
    %745 = vmatprep.subr.mxu0 0.0
    %746 = vmatpush2.msra.mxu0 0.0
    %747 = vmatprep.subr.mxu0 0.0
    %748 = vmatpush2.msra.mxu0 0.0
    %749 = vmatprep.subr.mxu0 0.0
    %750 = vmatpush2.msra.mxu0 0.0
    %751 = vmatprep.subr.mxu0 0.0
    %752 = vmatpush2.msra.mxu0 0.0
    %753 = vmatprep.subr.mxu0 0.0
    %754 = vmatpush2.msra.mxu0 0.0
    %755 = vmatprep.subr.mxu0 0.0
    %756 = vmatpush2.msra.mxu0 0.0
    %757 = vmatprep.subr.mxu0 0.0
    %758 = vmatpush2.msra.mxu0 0.0
    %759 = vmatprep.subr.mxu0 0.0
    %760 = vmatpush2.msra.mxu0 0.0
    %761 = vmatprep.mubr.f32.mxu0 0.0
    %762 = vmatmul.mubr.f32.gmra.mxu0 %v558
    %v763 = vpop.f32.mrf.mxu0
    %v764 = vadd.f32 0.0, %v763
    %v765 = vpop.f32.mrf.mxu0
    %v766 = vadd.f32 0.0, %v765
    %767 = vdwg.mxu0
    %v772 = vcombine.low %v693, %v695
    %v773 = vcombine.low %v764, %v766
    %v775 = vunpack.c.l.s4 1966171168
    %v776 = vunpack.c.0.s8 %v775
    %v777 = vlaneseq
    %v778 = vshrl.u32 %v777, 7
    %v779 = vsub.s32 %v776, %v778
    %v780 = vrot.slane %v772, %v779
    %v782 = vunpack.c.l.s4 1966171168
    %v783 = vunpack.c.0.s8 %v782
    %v784 = vlaneseq
    %v785 = vshrl.u32 %v784, 7
    %v786 = vsub.s32 %v783, %v785
    %v787 = vrot.slane %v773, %v786
    %v788 = vcombine.low %v780, %v787
    %v790 = vunpack.c.l.s4 1966171168
    %v791 = vunpack.c.0.s8 %v790
    %v792 = vlaneseq
    %v793 = vshrl.u32 %v792, 7
    %v794 = vsub.s32 %v791, %v793
    %v795 = vrot.slane %v788, %v794
    %v797 = vadd.f32 %v561, %v795
    %v798 = vxor.u32 %v797, 2147483648
    %v799 = vmul.f32 %v798, 1.442695
    %v800 = vpow.pop %v799
    %v801 = vadd.f32 %v800, 1.0
    %v802 = vrcp.pop %v801
    %v803 = vmul.f32 1.0, %v802
    %v805 = vrot.slane %v797, 1
    %v807 = vxor.u32 %v805, 2147483648
    %v808 = vmul.f32 %v807, 1.442695
    %v809 = vpow.pop %v808
    %v810 = vadd.f32 %v809, 1.0
    %v811 = vrcp.pop %v810
    %v812 = vmul.f32 1.0, %v811
    %v813 = vrot.slane %v797, 2
    %v815 = vtanh.pop %v813
    %v816 = vrot.slane %v797, 3
    %v818 = vxor.u32 %v816, 2147483648
    %v819 = vmul.f32 %v818, 1.442695
    %v820 = vpow.pop %v819
    %v821 = vadd.f32 %v820, 1.0
    %v822 = vrcp.pop %v821
    %v823 = vmul.f32 1.0, %v822
    %v824 = vmul.f32 %v812, %v556
    %v825 = vmul.f32 %v803, %v815
    %v826 = vadd.f32 %v824, %v825
    %v827 = vtanh.pop %v826
    %v828 = vmul.f32 %v823, %v827
    %829 = vst [vmem:[#allocation2 + $0x1] sm:$0x1] %v828
    %s830 = scalar_lea.vmem [#allocation3], 2
    %v831 = vld [vmem:[%s830] ss:$8 sm:$0xf]
    %v832 = vld [vmem:[#allocation8] sm:$0xff]
    %v833 = vld [vmem:[#allocation8 + $0x8] sm:$0xff]
    %v834 = vld [vmem:[#allocation8 + $0x10] sm:$0xff]
    %v835 = vld [vmem:[#allocation8 + $0x18] sm:$0xff]
    %v836 = vld [vmem:[#allocation8 + $0x20] sm:$0xff]
    %v837 = vld [vmem:[#allocation8 + $0x28] sm:$0xff]
    %v838 = vld [vmem:[#allocation8 + $0x30] sm:$0xff]
    %v839 = vld [vmem:[#allocation8 + $0x38] sm:$0xff]
    %v840 = vld [vmem:[#allocation8 + $0x40] sm:$0xff]
    %v841 = vld [vmem:[#allocation8 + $0x48] sm:$0xff]
    %v842 = vld [vmem:[#allocation8 + $0x50] sm:$0xff]
    %v843 = vld [vmem:[#allocation8 + $0x58] sm:$0xff]
    %v844 = vld [vmem:[#allocation8 + $0x60] sm:$0xff]
    %v845 = vld [vmem:[#allocation8 + $0x68] sm:$0xff]
    %v846 = vld [vmem:[#allocation8 + $0x70] sm:$0xff]
    %v847 = vld [vmem:[#allocation8 + $0x78] sm:$0xff]
    %v848 = vld [vmem:[#allocation8 + $0x80] sm:$0xff]
    %v849 = vld [vmem:[#allocation8 + $0x88] sm:$0xff]
    %v850 = vld [vmem:[#allocation8 + $0x90] sm:$0xff]
    %v851 = vld [vmem:[#allocation8 + $0x98] sm:$0xff]
    %v852 = vld [vmem:[#allocation8 + $0xa0] sm:$0xff]
    %v853 = vld [vmem:[#allocation8 + $0xa8] sm:$0xff]
    %v854 = vld [vmem:[#allocation8 + $0xb0] sm:$0xff]
    %v855 = vld [vmem:[#allocation8 + $0xb8] sm:$0xff]
    %v856 = vld [vmem:[#allocation8 + $0xc0] sm:$0xff]
    %v857 = vld [vmem:[#allocation8 + $0xc8] sm:$0xff]
    %v858 = vld [vmem:[#allocation8 + $0xd0] sm:$0xff]
    %v859 = vld [vmem:[#allocation8 + $0xd8] sm:$0xff]
    %v860 = vld [vmem:[#allocation8 + $0xe0] sm:$0xff]
    %v861 = vld [vmem:[#allocation8 + $0xe8] sm:$0xff]
    %v862 = vld [vmem:[#allocation8 + $0xf0] sm:$0xff]
    %v863 = vld [vmem:[#allocation8 + $0xf8] sm:$0xff]
    %v864 = vld [vmem:[#allocation8 + $0x100] sm:$0xff]
    %v865 = vld [vmem:[#allocation8 + $0x108] sm:$0xff]
    %v866 = vld [vmem:[#allocation8 + $0x110] sm:$0xff]
    %v867 = vld [vmem:[#allocation8 + $0x118] sm:$0xff]
    %v868 = vld [vmem:[#allocation8 + $0x120] sm:$0xff]
    %v869 = vld [vmem:[#allocation8 + $0x128] sm:$0xff]
    %v870 = vld [vmem:[#allocation8 + $0x130] sm:$0xff]
    %v871 = vld [vmem:[#allocation8 + $0x138] sm:$0xff]
    %v872 = vld [vmem:[#allocation8 + $0x140] sm:$0xff]
    %v873 = vld [vmem:[#allocation8 + $0x148] sm:$0xff]
    %v874 = vld [vmem:[#allocation8 + $0x150] sm:$0xff]
    %v875 = vld [vmem:[#allocation8 + $0x158] sm:$0xff]
    %v876 = vld [vmem:[#allocation8 + $0x160] sm:$0xff]
    %v877 = vld [vmem:[#allocation8 + $0x168] sm:$0xff]
    %v878 = vld [vmem:[#allocation8 + $0x170] sm:$0xff]
    %v879 = vld [vmem:[#allocation8 + $0x178] sm:$0xff]
    %v880 = vld [vmem:[#allocation8 + $0x180] sm:$0xff]
    %v881 = vld [vmem:[#allocation8 + $0x188] sm:$0xff]
    %v882 = vld [vmem:[#allocation8 + $0x190] sm:$0xff]
    %v883 = vld [vmem:[#allocation8 + $0x198] sm:$0xff]
    %v884 = vld [vmem:[#allocation8 + $0x1a0] sm:$0xff]
    %v885 = vld [vmem:[#allocation8 + $0x1a8] sm:$0xff]
    %v886 = vld [vmem:[#allocation8 + $0x1b0] sm:$0xff]
    %v887 = vld [vmem:[#allocation8 + $0x1b8] sm:$0xff]
    %v888 = vld [vmem:[#allocation8 + $0x1c0] sm:$0xff]
    %v889 = vld [vmem:[#allocation8 + $0x1c8] sm:$0xff]
    %v890 = vld [vmem:[#allocation8 + $0x1d0] sm:$0xff]
    %v891 = vld [vmem:[#allocation8 + $0x1d8] sm:$0xff]
    %v892 = vld [vmem:[#allocation8 + $0x1e0] sm:$0xff]
    %v893 = vld [vmem:[#allocation8 + $0x1e8] sm:$0xff]
    %v894 = vld [vmem:[#allocation8 + $0x1f0] sm:$0xff]
    %v895 = vld [vmem:[#allocation8 + $0x1f8] sm:$0xff]
    %896 = vmatprep.subr.mxu0 %v893
    %897 = vmatpush1.msra.mxu0 %v892
    %898 = vmatprep.subr.mxu0 %v889
    %899 = vmatpush1.msra.mxu0 %v888
    %900 = vmatprep.subr.mxu0 %v885
    %901 = vmatpush1.msra.mxu0 %v884
    %902 = vmatprep.subr.mxu0 %v881
    %903 = vmatpush1.msra.mxu0 %v880
    %904 = vmatprep.subr.mxu0 %v877
    %905 = vmatpush1.msra.mxu0 %v876
    %906 = vmatprep.subr.mxu0 %v873
    %907 = vmatpush1.msra.mxu0 %v872
    %908 = vmatprep.subr.mxu0 %v869
    %909 = vmatpush1.msra.mxu0 %v868
    %910 = vmatprep.subr.mxu0 %v865
    %911 = vmatpush1.msra.mxu0 %v864
    %912 = vmatprep.subr.mxu0 %v861
    %913 = vmatpush1.msra.mxu0 %v860
    %914 = vmatprep.subr.mxu0 %v857
    %915 = vmatpush1.msra.mxu0 %v856
    %916 = vmatprep.subr.mxu0 %v853
    %917 = vmatpush1.msra.mxu0 %v852
    %918 = vmatprep.subr.mxu0 %v849
    %919 = vmatpush1.msra.mxu0 %v848
    %920 = vmatprep.subr.mxu0 %v845
    %921 = vmatpush1.msra.mxu0 %v844
    %922 = vmatprep.subr.mxu0 %v841
    %923 = vmatpush1.msra.mxu0 %v840
    %924 = vmatprep.subr.mxu0 %v837
    %925 = vmatpush1.msra.mxu0 %v836
    %926 = vmatprep.subr.mxu0 %v833
    %927 = vmatpush1.msra.mxu0 %v832
    %928 = vmatprep.subr.mxu0 0.0
    %929 = vmatpush2.msra.mxu0 0.0
    %930 = vmatprep.subr.mxu0 0.0
    %931 = vmatpush2.msra.mxu0 0.0
    %932 = vmatprep.subr.mxu0 0.0
    %933 = vmatpush2.msra.mxu0 0.0
    %934 = vmatprep.subr.mxu0 0.0
    %935 = vmatpush2.msra.mxu0 0.0
    %936 = vmatprep.subr.mxu0 0.0
    %937 = vmatpush2.msra.mxu0 0.0
    %938 = vmatprep.subr.mxu0 0.0
    %939 = vmatpush2.msra.mxu0 0.0
    %940 = vmatprep.subr.mxu0 0.0
    %941 = vmatpush2.msra.mxu0 0.0
    %942 = vmatprep.subr.mxu0 0.0
    %943 = vmatpush2.msra.mxu0 0.0
    %944 = vmatprep.subr.mxu0 0.0
    %945 = vmatpush2.msra.mxu0 0.0
    %946 = vmatprep.subr.mxu0 0.0
    %947 = vmatpush2.msra.mxu0 0.0
    %948 = vmatprep.subr.mxu0 0.0
    %949 = vmatpush2.msra.mxu0 0.0
    %950 = vmatprep.subr.mxu0 0.0
    %951 = vmatpush2.msra.mxu0 0.0
    %952 = vmatprep.subr.mxu0 0.0
    %953 = vmatpush2.msra.mxu0 0.0
    %954 = vmatprep.subr.mxu0 0.0
    %955 = vmatpush2.msra.mxu0 0.0
    %956 = vmatprep.subr.mxu0 0.0
    %957 = vmatpush2.msra.mxu0 0.0
    %958 = vmatprep.subr.mxu0 0.0
    %959 = vmatpush2.msra.mxu0 0.0
    %960 = vmatprep.mubr.f32.mxu0 0.0
    %961 = vmatmul.mubr.f32.gmra.mxu0 %v828
    %v962 = vpop.f32.mrf.mxu0
    %v963 = vadd.f32 0.0, %v962
    %v964 = vpop.f32.mrf.mxu0
    %v965 = vadd.f32 0.0, %v964
    %966 = vdwg.mxu0
    %967 = vmatprep.subr.mxu0 %v895
    %968 = vmatpush1.msra.mxu0 %v894
    %969 = vmatprep.subr.mxu0 %v891
    %970 = vmatpush1.msra.mxu0 %v890
    %971 = vmatprep.subr.mxu0 %v887
    %972 = vmatpush1.msra.mxu0 %v886
    %973 = vmatprep.subr.mxu0 %v883
    %974 = vmatpush1.msra.mxu0 %v882
    %975 = vmatprep.subr.mxu0 %v879
    %976 = vmatpush1.msra.mxu0 %v878
    %977 = vmatprep.subr.mxu0 %v875
    %978 = vmatpush1.msra.mxu0 %v874
    %979 = vmatprep.subr.mxu0 %v871
    %980 = vmatpush1.msra.mxu0 %v870
    %981 = vmatprep.subr.mxu0 %v867
    %982 = vmatpush1.msra.mxu0 %v866
    %983 = vmatprep.subr.mxu0 %v863
    %984 = vmatpush1.msra.mxu0 %v862
    %985 = vmatprep.subr.mxu0 %v859
    %986 = vmatpush1.msra.mxu0 %v858
    %987 = vmatprep.subr.mxu0 %v855
    %988 = vmatpush1.msra.mxu0 %v854
    %989 = vmatprep.subr.mxu0 %v851
    %990 = vmatpush1.msra.mxu0 %v850
    %991 = vmatprep.subr.mxu0 %v847
    %992 = vmatpush1.msra.mxu0 %v846
    %993 = vmatprep.subr.mxu0 %v843
    %994 = vmatpush1.msra.mxu0 %v842
    %995 = vmatprep.subr.mxu0 %v839
    %996 = vmatpush1.msra.mxu0 %v838
    %997 = vmatprep.subr.mxu0 %v835
    %998 = vmatpush1.msra.mxu0 %v834
    %999 = vmatprep.subr.mxu0 0.0
    %1000 = vmatpush2.msra.mxu0 0.0
    %1001 = vmatprep.subr.mxu0 0.0
    %1002 = vmatpush2.msra.mxu0 0.0
    %1003 = vmatprep.subr.mxu0 0.0
    %1004 = vmatpush2.msra.mxu0 0.0
    %1005 = vmatprep.subr.mxu0 0.0
    %1006 = vmatpush2.msra.mxu0 0.0
    %1007 = vmatprep.subr.mxu0 0.0
    %1008 = vmatpush2.msra.mxu0 0.0
    %1009 = vmatprep.subr.mxu0 0.0
    %1010 = vmatpush2.msra.mxu0 0.0
    %1011 = vmatprep.subr.mxu0 0.0
    %1012 = vmatpush2.msra.mxu0 0.0
    %1013 = vmatprep.subr.mxu0 0.0
    %1014 = vmatpush2.msra.mxu0 0.0
    %1015 = vmatprep.subr.mxu0 0.0
    %1016 = vmatpush2.msra.mxu0 0.0
    %1017 = vmatprep.subr.mxu0 0.0
    %1018 = vmatpush2.msra.mxu0 0.0
    %1019 = vmatprep.subr.mxu0 0.0
    %1020 = vmatpush2.msra.mxu0 0.0
    %1021 = vmatprep.subr.mxu0 0.0
    %1022 = vmatpush2.msra.mxu0 0.0
    %1023 = vmatprep.subr.mxu0 0.0
    %1024 = vmatpush2.msra.mxu0 0.0
    %1025 = vmatprep.subr.mxu0 0.0
    %1026 = vmatpush2.msra.mxu0 0.0
    %1027 = vmatprep.subr.mxu0 0.0
    %1028 = vmatpush2.msra.mxu0 0.0
    %1029 = vmatprep.subr.mxu0 0.0
    %1030 = vmatpush2.msra.mxu0 0.0
    %1031 = vmatprep.mubr.f32.mxu0 0.0
    %1032 = vmatmul.mubr.f32.gmra.mxu0 %v828
    %v1033 = vpop.f32.mrf.mxu0
    %v1034 = vadd.f32 0.0, %v1033
    %v1035 = vpop.f32.mrf.mxu0
    %v1036 = vadd.f32 0.0, %v1035
    %1037 = vdwg.mxu0
    %v1042 = vcombine.low %v963, %v965
    %v1043 = vcombine.low %v1034, %v1036
    %v1045 = vunpack.c.l.s4 1966171168
    %v1046 = vunpack.c.0.s8 %v1045
    %v1047 = vlaneseq
    %v1048 = vshrl.u32 %v1047, 7
    %v1049 = vsub.s32 %v1046, %v1048
    %v1050 = vrot.slane %v1042, %v1049
    %v1052 = vunpack.c.l.s4 1966171168
    %v1053 = vunpack.c.0.s8 %v1052
    %v1054 = vlaneseq
    %v1055 = vshrl.u32 %v1054, 7
    %v1056 = vsub.s32 %v1053, %v1055
    %v1057 = vrot.slane %v1043, %v1056
    %v1058 = vcombine.low %v1050, %v1057
    %v1060 = vunpack.c.l.s4 1966171168
    %v1061 = vunpack.c.0.s8 %v1060
    %v1062 = vlaneseq
    %v1063 = vshrl.u32 %v1062, 7
    %v1064 = vsub.s32 %v1061, %v1063
    %v1065 = vrot.slane %v1058, %v1064
    %v1067 = vadd.f32 %v831, %v1065
    %v1068 = vxor.u32 %v1067, 2147483648
    %v1069 = vmul.f32 %v1068, 1.442695
    %v1070 = vpow.pop %v1069
    %v1071 = vadd.f32 %v1070, 1.0
    %v1072 = vrcp.pop %v1071
    %v1073 = vmul.f32 1.0, %v1072
    %v1075 = vrot.slane %v1067, 1
    %v1077 = vxor.u32 %v1075, 2147483648
    %v1078 = vmul.f32 %v1077, 1.442695
    %v1079 = vpow.pop %v1078
    %v1080 = vadd.f32 %v1079, 1.0
    %v1081 = vrcp.pop %v1080
    %v1082 = vmul.f32 1.0, %v1081
    %v1083 = vrot.slane %v1067, 2
    %v1085 = vtanh.pop %v1083
    %v1086 = vrot.slane %v1067, 3
    %v1088 = vxor.u32 %v1086, 2147483648
    %v1089 = vmul.f32 %v1088, 1.442695
    %v1090 = vpow.pop %v1089
    %v1091 = vadd.f32 %v1090, 1.0
    %v1092 = vrcp.pop %v1091
    %v1093 = vmul.f32 1.0, %v1092
    %v1094 = vmul.f32 %v1082, %v826
    %v1095 = vmul.f32 %v1073, %v1085
    %v1096 = vadd.f32 %v1094, %v1095
    %v1097 = vtanh.pop %v1096
    %v1098 = vmul.f32 %v1093, %v1097
    %1099 = vst [vmem:[#allocation2 + $0x2] sm:$0x1] %v1098
    %s1100 = scalar_lea.vmem [#allocation3], 3
    %v1101 = vld [vmem:[%s1100] ss:$8 sm:$0xf]
    %v1102 = vld [vmem:[#allocation8] sm:$0xff]
    %v1103 = vld [vmem:[#allocation8 + $0x8] sm:$0xff]
    %v1104 = vld [vmem:[#allocation8 + $0x10] sm:$0xff]
    %v1105 = vld [vmem:[#allocation8 + $0x18] sm:$0xff]
    %v1106 = vld [vmem:[#allocation8 + $0x20] sm:$0xff]
    %v1107 = vld [vmem:[#allocation8 + $0x28] sm:$0xff]
    %v1108 = vld [vmem:[#allocation8 + $0x30] sm:$0xff]
    %v1109 = vld [vmem:[#allocation8 + $0x38] sm:$0xff]
    %v1110 = vld [vmem:[#allocation8 + $0x40] sm:$0xff]
    %v1111 = vld [vmem:[#allocation8 + $0x48] sm:$0xff]
    %v1112 = vld [vmem:[#allocation8 + $0x50] sm:$0xff]
    %v1113 = vld [vmem:[#allocation8 + $0x58] sm:$0xff]
    %v1114 = vld [vmem:[#allocation8 + $0x60] sm:$0xff]
    %v1115 = vld [vmem:[#allocation8 + $0x68] sm:$0xff]
    %v1116 = vld [vmem:[#allocation8 + $0x70] sm:$0xff]
    %v1117 = vld [vmem:[#allocation8 + $0x78] sm:$0xff]
    %v1118 = vld [vmem:[#allocation8 + $0x80] sm:$0xff]
    %v1119 = vld [vmem:[#allocation8 + $0x88] sm:$0xff]
    %v1120 = vld [vmem:[#allocation8 + $0x90] sm:$0xff]
    %v1121 = vld [vmem:[#allocation8 + $0x98] sm:$0xff]
    %v1122 = vld [vmem:[#allocation8 + $0xa0] sm:$0xff]
    %v1123 = vld [vmem:[#allocation8 + $0xa8] sm:$0xff]
    %v1124 = vld [vmem:[#allocation8 + $0xb0] sm:$0xff]
    %v1125 = vld [vmem:[#allocation8 + $0xb8] sm:$0xff]
    %v1126 = vld [vmem:[#allocation8 + $0xc0] sm:$0xff]
    %v1127 = vld [vmem:[#allocation8 + $0xc8] sm:$0xff]
    %v1128 = vld [vmem:[#allocation8 + $0xd0] sm:$0xff]
    %v1129 = vld [vmem:[#allocation8 + $0xd8] sm:$0xff]
    %v1130 = vld [vmem:[#allocation8 + $0xe0] sm:$0xff]
    %v1131 = vld [vmem:[#allocation8 + $0xe8] sm:$0xff]
    %v1132 = vld [vmem:[#allocation8 + $0xf0] sm:$0xff]
    %v1133 = vld [vmem:[#allocation8 + $0xf8] sm:$0xff]
    %v1134 = vld [vmem:[#allocation8 + $0x100] sm:$0xff]
    %v1135 = vld [vmem:[#allocation8 + $0x108] sm:$0xff]
    %v1136 = vld [vmem:[#allocation8 + $0x110] sm:$0xff]
    %v1137 = vld [vmem:[#allocation8 + $0x118] sm:$0xff]
    %v1138 = vld [vmem:[#allocation8 + $0x120] sm:$0xff]
    %v1139 = vld [vmem:[#allocation8 + $0x128] sm:$0xff]
    %v1140 = vld [vmem:[#allocation8 + $0x130] sm:$0xff]
    %v1141 = vld [vmem:[#allocation8 + $0x138] sm:$0xff]
    %v1142 = vld [vmem:[#allocation8 + $0x140] sm:$0xff]
    %v1143 = vld [vmem:[#allocation8 + $0x148] sm:$0xff]
    %v1144 = vld [vmem:[#allocation8 + $0x150] sm:$0xff]
    %v1145 = vld [vmem:[#allocation8 + $0x158] sm:$0xff]
    %v1146 = vld [vmem:[#allocation8 + $0x160] sm:$0xff]
    %v1147 = vld [vmem:[#allocation8 + $0x168] sm:$0xff]
    %v1148 = vld [vmem:[#allocation8 + $0x170] sm:$0xff]
    %v1149 = vld [vmem:[#allocation8 + $0x178] sm:$0xff]
    %v1150 = vld [vmem:[#allocation8 + $0x180] sm:$0xff]
    %v1151 = vld [vmem:[#allocation8 + $0x188] sm:$0xff]
    %v1152 = vld [vmem:[#allocation8 + $0x190] sm:$0xff]
    %v1153 = vld [vmem:[#allocation8 + $0x198] sm:$0xff]
    %v1154 = vld [vmem:[#allocation8 + $0x1a0] sm:$0xff]
    %v1155 = vld [vmem:[#allocation8 + $0x1a8] sm:$0xff]
    %v1156 = vld [vmem:[#allocation8 + $0x1b0] sm:$0xff]
    %v1157 = vld [vmem:[#allocation8 + $0x1b8] sm:$0xff]
    %v1158 = vld [vmem:[#allocation8 + $0x1c0] sm:$0xff]
    %v1159 = vld [vmem:[#allocation8 + $0x1c8] sm:$0xff]
    %v1160 = vld [vmem:[#allocation8 + $0x1d0] sm:$0xff]
    %v1161 = vld [vmem:[#allocation8 + $0x1d8] sm:$0xff]
    %v1162 = vld [vmem:[#allocation8 + $0x1e0] sm:$0xff]
    %v1163 = vld [vmem:[#allocation8 + $0x1e8] sm:$0xff]
    %v1164 = vld [vmem:[#allocation8 + $0x1f0] sm:$0xff]
    %v1165 = vld [vmem:[#allocation8 + $0x1f8] sm:$0xff]
    %1166 = vmatprep.subr.mxu0 %v1163
    %1167 = vmatpush1.msra.mxu0 %v1162
    %1168 = vmatprep.subr.mxu0 %v1159
    %1169 = vmatpush1.msra.mxu0 %v1158
    %1170 = vmatprep.subr.mxu0 %v1155
    %1171 = vmatpush1.msra.mxu0 %v1154
    %1172 = vmatprep.subr.mxu0 %v1151
    %1173 = vmatpush1.msra.mxu0 %v1150
    %1174 = vmatprep.subr.mxu0 %v1147
    %1175 = vmatpush1.msra.mxu0 %v1146
    %1176 = vmatprep.subr.mxu0 %v1143
    %1177 = vmatpush1.msra.mxu0 %v1142
    %1178 = vmatprep.subr.mxu0 %v1139
    %1179 = vmatpush1.msra.mxu0 %v1138
    %1180 = vmatprep.subr.mxu0 %v1135
    %1181 = vmatpush1.msra.mxu0 %v1134
    %1182 = vmatprep.subr.mxu0 %v1131
    %1183 = vmatpush1.msra.mxu0 %v1130
    %1184 = vmatprep.subr.mxu0 %v1127
    %1185 = vmatpush1.msra.mxu0 %v1126
    %1186 = vmatprep.subr.mxu0 %v1123
    %1187 = vmatpush1.msra.mxu0 %v1122
    %1188 = vmatprep.subr.mxu0 %v1119
    %1189 = vmatpush1.msra.mxu0 %v1118
    %1190 = vmatprep.subr.mxu0 %v1115
    %1191 = vmatpush1.msra.mxu0 %v1114
    %1192 = vmatprep.subr.mxu0 %v1111
    %1193 = vmatpush1.msra.mxu0 %v1110
    %1194 = vmatprep.subr.mxu0 %v1107
    %1195 = vmatpush1.msra.mxu0 %v1106
    %1196 = vmatprep.subr.mxu0 %v1103
    %1197 = vmatpush1.msra.mxu0 %v1102
    %1198 = vmatprep.subr.mxu0 0.0
    %1199 = vmatpush2.msra.mxu0 0.0
    %1200 = vmatprep.subr.mxu0 0.0
    %1201 = vmatpush2.msra.mxu0 0.0
    %1202 = vmatprep.subr.mxu0 0.0
    %1203 = vmatpush2.msra.mxu0 0.0
    %1204 = vmatprep.subr.mxu0 0.0
    %1205 = vmatpush2.msra.mxu0 0.0
    %1206 = vmatprep.subr.mxu0 0.0
    %1207 = vmatpush2.msra.mxu0 0.0
    %1208 = vmatprep.subr.mxu0 0.0
    %1209 = vmatpush2.msra.mxu0 0.0
    %1210 = vmatprep.subr.mxu0 0.0
    %1211 = vmatpush2.msra.mxu0 0.0
    %1212 = vmatprep.subr.mxu0 0.0
    %1213 = vmatpush2.msra.mxu0 0.0
    %1214 = vmatprep.subr.mxu0 0.0
    %1215 = vmatpush2.msra.mxu0 0.0
    %1216 = vmatprep.subr.mxu0 0.0
    %1217 = vmatpush2.msra.mxu0 0.0
    %1218 = vmatprep.subr.mxu0 0.0
    %1219 = vmatpush2.msra.mxu0 0.0
    %1220 = vmatprep.subr.mxu0 0.0
    %1221 = vmatpush2.msra.mxu0 0.0
    %1222 = vmatprep.subr.mxu0 0.0
    %1223 = vmatpush2.msra.mxu0 0.0
    %1224 = vmatprep.subr.mxu0 0.0
    %1225 = vmatpush2.msra.mxu0 0.0
    %1226 = vmatprep.subr.mxu0 0.0
    %1227 = vmatpush2.msra.mxu0 0.0
    %1228 = vmatprep.subr.mxu0 0.0
    %1229 = vmatpush2.msra.mxu0 0.0
    %1230 = vmatprep.mubr.f32.mxu0 0.0
    %1231 = vmatmul.mubr.f32.gmra.mxu0 %v1098
    %v1232 = vpop.f32.mrf.mxu0
    %v1233 = vadd.f32 0.0, %v1232
    %v1234 = vpop.f32.mrf.mxu0
    %v1235 = vadd.f32 0.0, %v1234
    %1236 = vdwg.mxu0
    %1237 = vmatprep.subr.mxu0 %v1165
    %1238 = vmatpush1.msra.mxu0 %v1164
    %1239 = vmatprep.subr.mxu0 %v1161
    %1240 = vmatpush1.msra.mxu0 %v1160
    %1241 = vmatprep.subr.mxu0 %v1157
    %1242 = vmatpush1.msra.mxu0 %v1156
    %1243 = vmatprep.subr.mxu0 %v1153
    %1244 = vmatpush1.msra.mxu0 %v1152
    %1245 = vmatprep.subr.mxu0 %v1149
    %1246 = vmatpush1.msra.mxu0 %v1148
    %1247 = vmatprep.subr.mxu0 %v1145
    %1248 = vmatpush1.msra.mxu0 %v1144
    %1249 = vmatprep.subr.mxu0 %v1141
    %1250 = vmatpush1.msra.mxu0 %v1140
    %1251 = vmatprep.subr.mxu0 %v1137
    %1252 = vmatpush1.msra.mxu0 %v1136
    %1253 = vmatprep.subr.mxu0 %v1133
    %1254 = vmatpush1.msra.mxu0 %v1132
    %1255 = vmatprep.subr.mxu0 %v1129
    %1256 = vmatpush1.msra.mxu0 %v1128
    %1257 = vmatprep.subr.mxu0 %v1125
    %1258 = vmatpush1.msra.mxu0 %v1124
    %1259 = vmatprep.subr.mxu0 %v1121
    %1260 = vmatpush1.msra.mxu0 %v1120
    %1261 = vmatprep.subr.mxu0 %v1117
    %1262 = vmatpush1.msra.mxu0 %v1116
    %1263 = vmatprep.subr.mxu0 %v1113
    %1264 = vmatpush1.msra.mxu0 %v1112
    %1265 = vmatprep.subr.mxu0 %v1109
    %1266 = vmatpush1.msra.mxu0 %v1108
    %1267 = vmatprep.subr.mxu0 %v1105
    %1268 = vmatpush1.msra.mxu0 %v1104
    %1269 = vmatprep.subr.mxu0 0.0
    %1270 = vmatpush2.msra.mxu0 0.0
    %1271 = vmatprep.subr.mxu0 0.0
    %1272 = vmatpush2.msra.mxu0 0.0
    %1273 = vmatprep.subr.mxu0 0.0
    %1274 = vmatpush2.msra.mxu0 0.0
    %1275 = vmatprep.subr.mxu0 0.0
    %1276 = vmatpush2.msra.mxu0 0.0
    %1277 = vmatprep.subr.mxu0 0.0
    %1278 = vmatpush2.msra.mxu0 0.0
    %1279 = vmatprep.subr.mxu0 0.0
    %1280 = vmatpush2.msra.mxu0 0.0
    %1281 = vmatprep.subr.mxu0 0.0
    %1282 = vmatpush2.msra.mxu0 0.0
    %1283 = vmatprep.subr.mxu0 0.0
    %1284 = vmatpush2.msra.mxu0 0.0
    %1285 = vmatprep.subr.mxu0 0.0
    %1286 = vmatpush2.msra.mxu0 0.0
    %1287 = vmatprep.subr.mxu0 0.0
    %1288 = vmatpush2.msra.mxu0 0.0
    %1289 = vmatprep.subr.mxu0 0.0
    %1290 = vmatpush2.msra.mxu0 0.0
    %1291 = vmatprep.subr.mxu0 0.0
    %1292 = vmatpush2.msra.mxu0 0.0
    %1293 = vmatprep.subr.mxu0 0.0
    %1294 = vmatpush2.msra.mxu0 0.0
    %1295 = vmatprep.subr.mxu0 0.0
    %1296 = vmatpush2.msra.mxu0 0.0
    %1297 = vmatprep.subr.mxu0 0.0
    %1298 = vmatpush2.msra.mxu0 0.0
    %1299 = vmatprep.subr.mxu0 0.0
    %1300 = vmatpush2.msra.mxu0 0.0
    %1301 = vmatprep.mubr.f32.mxu0 0.0
    %1302 = vmatmul.mubr.f32.gmra.mxu0 %v1098
    %v1303 = vpop.f32.mrf.mxu0
    %v1304 = vadd.f32 0.0, %v1303
    %v1305 = vpop.f32.mrf.mxu0
    %v1306 = vadd.f32 0.0, %v1305
    %1307 = vdwg.mxu0
    %v1312 = vcombine.low %v1233, %v1235
    %v1313 = vcombine.low %v1304, %v1306
    %v1315 = vunpack.c.l.s4 1966171168
    %v1316 = vunpack.c.0.s8 %v1315
    %v1317 = vlaneseq
    %v1318 = vshrl.u32 %v1317, 7
    %v1319 = vsub.s32 %v1316, %v1318
    %v1320 = vrot.slane %v1312, %v1319
    %v1322 = vunpack.c.l.s4 1966171168
    %v1323 = vunpack.c.0.s8 %v1322
    %v1324 = vlaneseq
    %v1325 = vshrl.u32 %v1324, 7
    %v1326 = vsub.s32 %v1323, %v1325
    %v1327 = vrot.slane %v1313, %v1326
    %v1328 = vcombine.low %v1320, %v1327
    %v1330 = vunpack.c.l.s4 1966171168
    %v1331 = vunpack.c.0.s8 %v1330
    %v1332 = vlaneseq
    %v1333 = vshrl.u32 %v1332, 7
    %v1334 = vsub.s32 %v1331, %v1333
    %v1335 = vrot.slane %v1328, %v1334
    %v1337 = vadd.f32 %v1101, %v1335
    %v1338 = vxor.u32 %v1337, 2147483648
    %v1339 = vmul.f32 %v1338, 1.442695
    %v1340 = vpow.pop %v1339
    %v1341 = vadd.f32 %v1340, 1.0
    %v1342 = vrcp.pop %v1341
    %v1343 = vmul.f32 1.0, %v1342
    %v1345 = vrot.slane %v1337, 1
    %v1347 = vxor.u32 %v1345, 2147483648
    %v1348 = vmul.f32 %v1347, 1.442695
    %v1349 = vpow.pop %v1348
    %v1350 = vadd.f32 %v1349, 1.0
    %v1351 = vrcp.pop %v1350
    %v1352 = vmul.f32 1.0, %v1351
    %v1353 = vrot.slane %v1337, 2
    %v1355 = vtanh.pop %v1353
    %v1356 = vrot.slane %v1337, 3
    %v1358 = vxor.u32 %v1356, 2147483648
    %v1359 = vmul.f32 %v1358, 1.442695
    %v1360 = vpow.pop %v1359
    %v1361 = vadd.f32 %v1360, 1.0
    %v1362 = vrcp.pop %v1361
    %v1363 = vmul.f32 1.0, %v1362
    %v1364 = vmul.f32 %v1352, %v1096
    %v1365 = vmul.f32 %v1343, %v1355
    %v1366 = vadd.f32 %v1364, %v1365
    %v1367 = vtanh.pop %v1366
    %v1368 = vmul.f32 %v1363, %v1367
    %1369 = vst [vmem:[#allocation2 + $0x3] sm:$0x1] %v1368
    %s1370 = scalar_lea.vmem [#allocation3], 4
    %v1371 = vld [vmem:[%s1370] ss:$8 sm:$0xf]
    %v1372 = vld [vmem:[#allocation8] sm:$0xff]
    %v1373 = vld [vmem:[#allocation8 + $0x8] sm:$0xff]
    %v1374 = vld [vmem:[#allocation8 + $0x10] sm:$0xff]
    %v1375 = vld [vmem:[#allocation8 + $0x18] sm:$0xff]
    %v1376 = vld [vmem:[#allocation8 + $0x20] sm:$0xff]
    %v1377 = vld [vmem:[#allocation8 + $0x28] sm:$0xff]
    %v1378 = vld [vmem:[#allocation8 + $0x30] sm:$0xff]
    %v1379 = vld [vmem:[#allocation8 + $0x38] sm:$0xff]
    %v1380 = vld [vmem:[#allocation8 + $0x40] sm:$0xff]
    %v1381 = vld [vmem:[#allocation8 + $0x48] sm:$0xff]
    %v1382 = vld [vmem:[#allocation8 + $0x50] sm:$0xff]
    %v1383 = vld [vmem:[#allocation8 + $0x58] sm:$0xff]
    %v1384 = vld [vmem:[#allocation8 + $0x60] sm:$0xff]
    %v1385 = vld [vmem:[#allocation8 + $0x68] sm:$0xff]
    %v1386 = vld [vmem:[#allocation8 + $0x70] sm:$0xff]
    %v1387 = vld [vmem:[#allocation8 + $0x78] sm:$0xff]
    %v1388 = vld [vmem:[#allocation8 + $0x80] sm:$0xff]
    %v1389 = vld [vmem:[#allocation8 + $0x88] sm:$0xff]
    %v1390 = vld [vmem:[#allocation8 + $0x90] sm:$0xff]
    %v1391 = vld [vmem:[#allocation8 + $0x98] sm:$0xff]
    %v1392 = vld [vmem:[#allocation8 + $0xa0] sm:$0xff]
    %v1393 = vld [vmem:[#allocation8 + $0xa8] sm:$0xff]
    %v1394 = vld [vmem:[#allocation8 + $0xb0] sm:$0xff]
    %v1395 = vld [vmem:[#allocation8 + $0xb8] sm:$0xff]
    %v1396 = vld [vmem:[#allocation8 + $0xc0] sm:$0xff]
    %v1397 = vld [vmem:[#allocation8 + $0xc8] sm:$0xff]
    %v1398 = vld [vmem:[#allocation8 + $0xd0] sm:$0xff]
    %v1399 = vld [vmem:[#allocation8 + $0xd8] sm:$0xff]
    %v1400 = vld [vmem:[#allocation8 + $0xe0] sm:$0xff]
    %v1401 = vld [vmem:[#allocation8 + $0xe8] sm:$0xff]
    %v1402 = vld [vmem:[#allocation8 + $0xf0] sm:$0xff]
    %v1403 = vld [vmem:[#allocation8 + $0xf8] sm:$0xff]
    %v1404 = vld [vmem:[#allocation8 + $0x100] sm:$0xff]
    %v1405 = vld [vmem:[#allocation8 + $0x108] sm:$0xff]
    %v1406 = vld [vmem:[#allocation8 + $0x110] sm:$0xff]
    %v1407 = vld [vmem:[#allocation8 + $0x118] sm:$0xff]
    %v1408 = vld [vmem:[#allocation8 + $0x120] sm:$0xff]
    %v1409 = vld [vmem:[#allocation8 + $0x128] sm:$0xff]
    %v1410 = vld [vmem:[#allocation8 + $0x130] sm:$0xff]
    %v1411 = vld [vmem:[#allocation8 + $0x138] sm:$0xff]
    %v1412 = vld [vmem:[#allocation8 + $0x140] sm:$0xff]
    %v1413 = vld [vmem:[#allocation8 + $0x148] sm:$0xff]
    %v1414 = vld [vmem:[#allocation8 + $0x150] sm:$0xff]
    %v1415 = vld [vmem:[#allocation8 + $0x158] sm:$0xff]
    %v1416 = vld [vmem:[#allocation8 + $0x160] sm:$0xff]
    %v1417 = vld [vmem:[#allocation8 + $0x168] sm:$0xff]
    %v1418 = vld [vmem:[#allocation8 + $0x170] sm:$0xff]
    %v1419 = vld [vmem:[#allocation8 + $0x178] sm:$0xff]
    %v1420 = vld [vmem:[#allocation8 + $0x180] sm:$0xff]
    %v1421 = vld [vmem:[#allocation8 + $0x188] sm:$0xff]
    %v1422 = vld [vmem:[#allocation8 + $0x190] sm:$0xff]
    %v1423 = vld [vmem:[#allocation8 + $0x198] sm:$0xff]
    %v1424 = vld [vmem:[#allocation8 + $0x1a0] sm:$0xff]
    %v1425 = vld [vmem:[#allocation8 + $0x1a8] sm:$0xff]
    %v1426 = vld [vmem:[#allocation8 + $0x1b0] sm:$0xff]
    %v1427 = vld [vmem:[#allocation8 + $0x1b8] sm:$0xff]
    %v1428 = vld [vmem:[#allocation8 + $0x1c0] sm:$0xff]
    %v1429 = vld [vmem:[#allocation8 + $0x1c8] sm:$0xff]
    %v1430 = vld [vmem:[#allocation8 + $0x1d0] sm:$0xff]
    %v1431 = vld [vmem:[#allocation8 + $0x1d8] sm:$0xff]
    %v1432 = vld [vmem:[#allocation8 + $0x1e0] sm:$0xff]
    %v1433 = vld [vmem:[#allocation8 + $0x1e8] sm:$0xff]
    %v1434 = vld [vmem:[#allocation8 + $0x1f0] sm:$0xff]
    %v1435 = vld [vmem:[#allocation8 + $0x1f8] sm:$0xff]
    %1436 = vmatprep.subr.mxu0 %v1433
    %1437 = vmatpush1.msra.mxu0 %v1432
    %1438 = vmatprep.subr.mxu0 %v1429
    %1439 = vmatpush1.msra.mxu0 %v1428
    %1440 = vmatprep.subr.mxu0 %v1425
    %1441 = vmatpush1.msra.mxu0 %v1424
    %1442 = vmatprep.subr.mxu0 %v1421
    %1443 = vmatpush1.msra.mxu0 %v1420
    %1444 = vmatprep.subr.mxu0 %v1417
    %1445 = vmatpush1.msra.mxu0 %v1416
    %1446 = vmatprep.subr.mxu0 %v1413
    %1447 = vmatpush1.msra.mxu0 %v1412
    %1448 = vmatprep.subr.mxu0 %v1409
    %1449 = vmatpush1.msra.mxu0 %v1408
    %1450 = vmatprep.subr.mxu0 %v1405
    %1451 = vmatpush1.msra.mxu0 %v1404
    %1452 = vmatprep.subr.mxu0 %v1401
    %1453 = vmatpush1.msra.mxu0 %v1400
    %1454 = vmatprep.subr.mxu0 %v1397
    %1455 = vmatpush1.msra.mxu0 %v1396
    %1456 = vmatprep.subr.mxu0 %v1393
    %1457 = vmatpush1.msra.mxu0 %v1392
    %1458 = vmatprep.subr.mxu0 %v1389
    %1459 = vmatpush1.msra.mxu0 %v1388
    %1460 = vmatprep.subr.mxu0 %v1385
    %1461 = vmatpush1.msra.mxu0 %v1384
    %1462 = vmatprep.subr.mxu0 %v1381
    %1463 = vmatpush1.msra.mxu0 %v1380
    %1464 = vmatprep.subr.mxu0 %v1377
    %1465 = vmatpush1.msra.mxu0 %v1376
    %1466 = vmatprep.subr.mxu0 %v1373
    %1467 = vmatpush1.msra.mxu0 %v1372
    %1468 = vmatprep.subr.mxu0 0.0
    %1469 = vmatpush2.msra.mxu0 0.0
    %1470 = vmatprep.subr.mxu0 0.0
    %1471 = vmatpush2.msra.mxu0 0.0
    %1472 = vmatprep.subr.mxu0 0.0
    %1473 = vmatpush2.msra.mxu0 0.0
    %1474 = vmatprep.subr.mxu0 0.0
    %1475 = vmatpush2.msra.mxu0 0.0
    %1476 = vmatprep.subr.mxu0 0.0
    %1477 = vmatpush2.msra.mxu0 0.0
    %1478 = vmatprep.subr.mxu0 0.0
    %1479 = vmatpush2.msra.mxu0 0.0
    %1480 = vmatprep.subr.mxu0 0.0
    %1481 = vmatpush2.msra.mxu0 0.0
    %1482 = vmatprep.subr.mxu0 0.0
    %1483 = vmatpush2.msra.mxu0 0.0
    %1484 = vmatprep.subr.mxu0 0.0
    %1485 = vmatpush2.msra.mxu0 0.0
    %1486 = vmatprep.subr.mxu0 0.0
    %1487 = vmatpush2.msra.mxu0 0.0
    %1488 = vmatprep.subr.mxu0 0.0
    %1489 = vmatpush2.msra.mxu0 0.0
    %1490 = vmatprep.subr.mxu0 0.0
    %1491 = vmatpush2.msra.mxu0 0.0
    %1492 = vmatprep.subr.mxu0 0.0
    %1493 = vmatpush2.msra.mxu0 0.0
    %1494 = vmatprep.subr.mxu0 0.0
    %1495 = vmatpush2.msra.mxu0 0.0
    %1496 = vmatprep.subr.mxu0 0.0
    %1497 = vmatpush2.msra.mxu0 0.0
    %1498 = vmatprep.subr.mxu0 0.0
    %1499 = vmatpush2.msra.mxu0 0.0
    %1500 = vmatprep.mubr.f32.mxu0 0.0
    %1501 = vmatmul.mubr.f32.gmra.mxu0 %v1368
    %v1502 = vpop.f32.mrf.mxu0
    %v1503 = vadd.f32 0.0, %v1502
    %v1504 = vpop.f32.mrf.mxu0
    %v1505 = vadd.f32 0.0, %v1504
    %1506 = vdwg.mxu0
    %1507 = vmatprep.subr.mxu0 %v1435
    %1508 = vmatpush1.msra.mxu0 %v1434
    %1509 = vmatprep.subr.mxu0 %v1431
    %1510 = vmatpush1.msra.mxu0 %v1430
    %1511 = vmatprep.subr.mxu0 %v1427
    %1512 = vmatpush1.msra.mxu0 %v1426
    %1513 = vmatprep.subr.mxu0 %v1423
    %1514 = vmatpush1.msra.mxu0 %v1422
    %1515 = vmatprep.subr.mxu0 %v1419
    %1516 = vmatpush1.msra.mxu0 %v1418
    %1517 = vmatprep.subr.mxu0 %v1415
    %1518 = vmatpush1.msra.mxu0 %v1414
    %1519 = vmatprep.subr.mxu0 %v1411
    %1520 = vmatpush1.msra.mxu0 %v1410
    %1521 = vmatprep.subr.mxu0 %v1407
    %1522 = vmatpush1.msra.mxu0 %v1406
    %1523 = vmatprep.subr.mxu0 %v1403
    %1524 = vmatpush1.msra.mxu0 %v1402
    %1525 = vmatprep.subr.mxu0 %v1399
    %1526 = vmatpush1.msra.mxu0 %v1398
    %1527 = vmatprep.subr.mxu0 %v1395
    %1528 = vmatpush1.msra.mxu0 %v1394
    %1529 = vmatprep.subr.mxu0 %v1391
    %1530 = vmatpush1.msra.mxu0 %v1390
    %1531 = vmatprep.subr.mxu0 %v1387
    %1532 = vmatpush1.msra.mxu0 %v1386
    %1533 = vmatprep.subr.mxu0 %v1383
    %1534 = vmatpush1.msra.mxu0 %v1382
    %1535 = vmatprep.subr.mxu0 %v1379
    %1536 = vmatpush1.msra.mxu0 %v1378
    %1537 = vmatprep.subr.mxu0 %v1375
    %1538 = vmatpush1.msra.mxu0 %v1374
    %1539 = vmatprep.subr.mxu0 0.0
    %1540 = vmatpush2.msra.mxu0 0.0
    %1541 = vmatprep.subr.mxu0 0.0
    %1542 = vmatpush2.msra.mxu0 0.0
    %1543 = vmatprep.subr.mxu0 0.0
    %1544 = vmatpush2.msra.mxu0 0.0
    %1545 = vmatprep.subr.mxu0 0.0
    %1546 = vmatpush2.msra.mxu0 0.0
    %1547 = vmatprep.subr.mxu0 0.0
    %1548 = vmatpush2.msra.mxu0 0.0
    %1549 = vmatprep.subr.mxu0 0.0
    %1550 = vmatpush2.msra.mxu0 0.0
    %1551 = vmatprep.subr.mxu0 0.0
    %1552 = vmatpush2.msra.mxu0 0.0
    %1553 = vmatprep.subr.mxu0 0.0
    %1554 = vmatpush2.msra.mxu0 0.0
    %1555 = vmatprep.subr.mxu0 0.0
    %1556 = vmatpush2.msra.mxu0 0.0
    %1557 = vmatprep.subr.mxu0 0.0
    %1558 = vmatpush2.msra.mxu0 0.0
    %1559 = vmatprep.subr.mxu0 0.0
    %1560 = vmatpush2.msra.mxu0 0.0
    %1561 = vmatprep.subr.mxu0 0.0
    %1562 = vmatpush2.msra.mxu0 0.0
    %1563 = vmatprep.subr.mxu0 0.0
    %1564 = vmatpush2.msra.mxu0 0.0
    %1565 = vmatprep.subr.mxu0 0.0
    %1566 = vmatpush2.msra.mxu0 0.0
    %1567 = vmatprep.subr.mxu0 0.0
    %1568 = vmatpush2.msra.mxu0 0.0
    %1569 = vmatprep.subr.mxu0 0.0
    %1570 = vmatpush2.msra.mxu0 0.0
    %1571 = vmatprep.mubr.f32.mxu0 0.0
    %1572 = vmatmul.mubr.f32.gmra.mxu0 %v1368
    %v1573 = vpop.f32.mrf.mxu0
    %v1574 = vadd.f32 0.0, %v1573
    %v1575 = vpop.f32.mrf.mxu0
    %v1576 = vadd.f32 0.0, %v1575
    %1577 = vdwg.mxu0
    %v1582 = vcombine.low %v1503, %v1505
    %v1583 = vcombine.low %v1574, %v1576
    %v1585 = vunpack.c.l.s4 1966171168
    %v1586 = vunpack.c.0.s8 %v1585
    %v1587 = vlaneseq
    %v1588 = vshrl.u32 %v1587, 7
    %v1589 = vsub.s32 %v1586, %v1588
    %v1590 = vrot.slane %v1582, %v1589
    %v1592 = vunpack.c.l.s4 1966171168
    %v1593 = vunpack.c.0.s8 %v1592
    %v1594 = vlaneseq
    %v1595 = vshrl.u32 %v1594, 7
    %v1596 = vsub.s32 %v1593, %v1595
    %v1597 = vrot.slane %v1583, %v1596
    %v1598 = vcombine.low %v1590, %v1597
    %v1600 = vunpack.c.l.s4 1966171168
    %v1601 = vunpack.c.0.s8 %v1600
    %v1602 = vlaneseq
    %v1603 = vshrl.u32 %v1602, 7
    %v1604 = vsub.s32 %v1601, %v1603
    %v1605 = vrot.slane %v1598, %v1604
    %v1607 = vadd.f32 %v1371, %v1605
    %v1608 = vxor.u32 %v1607, 2147483648
    %v1609 = vmul.f32 %v1608, 1.442695
    %v1610 = vpow.pop %v1609
    %v1611 = vadd.f32 %v1610, 1.0
    %v1612 = vrcp.pop %v1611
    %v1613 = vmul.f32 1.0, %v1612
    %v1615 = vrot.slane %v1607, 1
    %v1617 = vxor.u32 %v1615, 2147483648
    %v1618 = vmul.f32 %v1617, 1.442695
    %v1619 = vpow.pop %v1618
    %v1620 = vadd.f32 %v1619, 1.0
    %v1621 = vrcp.pop %v1620
    %v1622 = vmul.f32 1.0, %v1621
    %v1623 = vrot.slane %v1607, 2
    %v1625 = vtanh.pop %v1623
    %v1626 = vrot.slane %v1607, 3
    %v1628 = vxor.u32 %v1626, 2147483648
    %v1629 = vmul.f32 %v1628, 1.442695
    %v1630 = vpow.pop %v1629
    %v1631 = vadd.f32 %v1630, 1.0
    %v1632 = vrcp.pop %v1631
    %v1633 = vmul.f32 1.0, %v1632
    %v1634 = vmul.f32 %v1622, %v1366
    %v1635 = vmul.f32 %v1613, %v1625
    %v1636 = vadd.f32 %v1634, %v1635
    %v1637 = vtanh.pop %v1636
    %v1638 = vmul.f32 %v1633, %v1637
    %1639 = vst [vmem:[#allocation2 + $0x4] sm:$0x1] %v1638
    %s1640 = scalar_lea.vmem [#allocation3], 5
    %v1641 = vld [vmem:[%s1640] ss:$8 sm:$0xf]
    %v1642 = vld [vmem:[#allocation8] sm:$0xff]
    %v1643 = vld [vmem:[#allocation8 + $0x8] sm:$0xff]
    %v1644 = vld [vmem:[#allocation8 + $0x10] sm:$0xff]
    %v1645 = vld [vmem:[#allocation8 + $0x18] sm:$0xff]
    %v1646 = vld [vmem:[#allocation8 + $0x20] sm:$0xff]
    %v1647 = vld [vmem:[#allocation8 + $0x28] sm:$0xff]
    %v1648 = vld [vmem:[#allocation8 + $0x30] sm:$0xff]
    %v1649 = vld [vmem:[#allocation8 + $0x38] sm:$0xff]
    %v1650 = vld [vmem:[#allocation8 + $0x40] sm:$0xff]
    %v1651 = vld [vmem:[#allocation8 + $0x48] sm:$0xff]
    %v1652 = vld [vmem:[#allocation8 + $0x50] sm:$0xff]
    %v1653 = vld [vmem:[#allocation8 + $0x58] sm:$0xff]
    %v1654 = vld [vmem:[#allocation8 + $0x60] sm:$0xff]
    %v1655 = vld [vmem:[#allocation8 + $0x68] sm:$0xff]
    %v1656 = vld [vmem:[#allocation8 + $0x70] sm:$0xff]
    %v1657 = vld [vmem:[#allocation8 + $0x78] sm:$0xff]
    %v1658 = vld [vmem:[#allocation8 + $0x80] sm:$0xff]
    %v1659 = vld [vmem:[#allocation8 + $0x88] sm:$0xff]
    %v1660 = vld [vmem:[#allocation8 + $0x90] sm:$0xff]
    %v1661 = vld [vmem:[#allocation8 + $0x98] sm:$0xff]
    %v1662 = vld [vmem:[#allocation8 + $0xa0] sm:$0xff]
    %v1663 = vld [vmem:[#allocation8 + $0xa8] sm:$0xff]
    %v1664 = vld [vmem:[#allocation8 + $0xb0] sm:$0xff]
    %v1665 = vld [vmem:[#allocation8 + $0xb8] sm:$0xff]
    %v1666 = vld [vmem:[#allocation8 + $0xc0] sm:$0xff]
    %v1667 = vld [vmem:[#allocation8 + $0xc8] sm:$0xff]
    %v1668 = vld [vmem:[#allocation8 + $0xd0] sm:$0xff]
    %v1669 = vld [vmem:[#allocation8 + $0xd8] sm:$0xff]
    %v1670 = vld [vmem:[#allocation8 + $0xe0] sm:$0xff]
    %v1671 = vld [vmem:[#allocation8 + $0xe8] sm:$0xff]
    %v1672 = vld [vmem:[#allocation8 + $0xf0] sm:$0xff]
    %v1673 = vld [vmem:[#allocation8 + $0xf8] sm:$0xff]
    %v1674 = vld [vmem:[#allocation8 + $0x100] sm:$0xff]
    %v1675 = vld [vmem:[#allocation8 + $0x108] sm:$0xff]
    %v1676 = vld [vmem:[#allocation8 + $0x110] sm:$0xff]
    %v1677 = vld [vmem:[#allocation8 + $0x118] sm:$0xff]
    %v1678 = vld [vmem:[#allocation8 + $0x120] sm:$0xff]
    %v1679 = vld [vmem:[#allocation8 + $0x128] sm:$0xff]
    %v1680 = vld [vmem:[#allocation8 + $0x130] sm:$0xff]
    %v1681 = vld [vmem:[#allocation8 + $0x138] sm:$0xff]
    %v1682 = vld [vmem:[#allocation8 + $0x140] sm:$0xff]
    %v1683 = vld [vmem:[#allocation8 + $0x148] sm:$0xff]
    %v1684 = vld [vmem:[#allocation8 + $0x150] sm:$0xff]
    %v1685 = vld [vmem:[#allocation8 + $0x158] sm:$0xff]
    %v1686 = vld [vmem:[#allocation8 + $0x160] sm:$0xff]
    %v1687 = vld [vmem:[#allocation8 + $0x168] sm:$0xff]
    %v1688 = vld [vmem:[#allocation8 + $0x170] sm:$0xff]
    %v1689 = vld [vmem:[#allocation8 + $0x178] sm:$0xff]
    %v1690 = vld [vmem:[#allocation8 + $0x180] sm:$0xff]
    %v1691 = vld [vmem:[#allocation8 + $0x188] sm:$0xff]
    %v1692 = vld [vmem:[#allocation8 + $0x190] sm:$0xff]
    %v1693 = vld [vmem:[#allocation8 + $0x198] sm:$0xff]
    %v1694 = vld [vmem:[#allocation8 + $0x1a0] sm:$0xff]
    %v1695 = vld [vmem:[#allocation8 + $0x1a8] sm:$0xff]
    %v1696 = vld [vmem:[#allocation8 + $0x1b0] sm:$0xff]
    %v1697 = vld [vmem:[#allocation8 + $0x1b8] sm:$0xff]
    %v1698 = vld [vmem:[#allocation8 + $0x1c0] sm:$0xff]
    %v1699 = vld [vmem:[#allocation8 + $0x1c8] sm:$0xff]
    %v1700 = vld [vmem:[#allocation8 + $0x1d0] sm:$0xff]
    %v1701 = vld [vmem:[#allocation8 + $0x1d8] sm:$0xff]
    %v1702 = vld [vmem:[#allocation8 + $0x1e0] sm:$0xff]
    %v1703 = vld [vmem:[#allocation8 + $0x1e8] sm:$0xff]
    %v1704 = vld [vmem:[#allocation8 + $0x1f0] sm:$0xff]
    %v1705 = vld [vmem:[#allocation8 + $0x1f8] sm:$0xff]
    %1706 = vmatprep.subr.mxu0 %v1703
    %1707 = vmatpush1.msra.mxu0 %v1702
    %1708 = vmatprep.subr.mxu0 %v1699
    %1709 = vmatpush1.msra.mxu0 %v1698
    %1710 = vmatprep.subr.mxu0 %v1695
    %1711 = vmatpush1.msra.mxu0 %v1694
    %1712 = vmatprep.subr.mxu0 %v1691
    %1713 = vmatpush1.msra.mxu0 %v1690
    %1714 = vmatprep.subr.mxu0 %v1687
    %1715 = vmatpush1.msra.mxu0 %v1686
    %1716 = vmatprep.subr.mxu0 %v1683
    %1717 = vmatpush1.msra.mxu0 %v1682
    %1718 = vmatprep.subr.mxu0 %v1679
    %1719 = vmatpush1.msra.mxu0 %v1678
    %1720 = vmatprep.subr.mxu0 %v1675
    %1721 = vmatpush1.msra.mxu0 %v1674
    %1722 = vmatprep.subr.mxu0 %v1671
    %1723 = vmatpush1.msra.mxu0 %v1670
    %1724 = vmatprep.subr.mxu0 %v1667
    %1725 = vmatpush1.msra.mxu0 %v1666
    %1726 = vmatprep.subr.mxu0 %v1663
    %1727 = vmatpush1.msra.mxu0 %v1662
    %1728 = vmatprep.subr.mxu0 %v1659
    %1729 = vmatpush1.msra.mxu0 %v1658
    %1730 = vmatprep.subr.mxu0 %v1655
    %1731 = vmatpush1.msra.mxu0 %v1654
    %1732 = vmatprep.subr.mxu0 %v1651
    %1733 = vmatpush1.msra.mxu0 %v1650
    %1734 = vmatprep.subr.mxu0 %v1647
    %1735 = vmatpush1.msra.mxu0 %v1646
    %1736 = vmatprep.subr.mxu0 %v1643
    %1737 = vmatpush1.msra.mxu0 %v1642
    %1738 = vmatprep.subr.mxu0 0.0
    %1739 = vmatpush2.msra.mxu0 0.0
    %1740 = vmatprep.subr.mxu0 0.0
    %1741 = vmatpush2.msra.mxu0 0.0
    %1742 = vmatprep.subr.mxu0 0.0
    %1743 = vmatpush2.msra.mxu0 0.0
    %1744 = vmatprep.subr.mxu0 0.0
    %1745 = vmatpush2.msra.mxu0 0.0
    %1746 = vmatprep.subr.mxu0 0.0
    %1747 = vmatpush2.msra.mxu0 0.0
    %1748 = vmatprep.subr.mxu0 0.0
    %1749 = vmatpush2.msra.mxu0 0.0
    %1750 = vmatprep.subr.mxu0 0.0
    %1751 = vmatpush2.msra.mxu0 0.0
    %1752 = vmatprep.subr.mxu0 0.0
    %1753 = vmatpush2.msra.mxu0 0.0
    %1754 = vmatprep.subr.mxu0 0.0
    %1755 = vmatpush2.msra.mxu0 0.0
    %1756 = vmatprep.subr.mxu0 0.0
    %1757 = vmatpush2.msra.mxu0 0.0
    %1758 = vmatprep.subr.mxu0 0.0
    %1759 = vmatpush2.msra.mxu0 0.0
    %1760 = vmatprep.subr.mxu0 0.0
    %1761 = vmatpush2.msra.mxu0 0.0
    %1762 = vmatprep.subr.mxu0 0.0
    %1763 = vmatpush2.msra.mxu0 0.0
    %1764 = vmatprep.subr.mxu0 0.0
    %1765 = vmatpush2.msra.mxu0 0.0
    %1766 = vmatprep.subr.mxu0 0.0
    %1767 = vmatpush2.msra.mxu0 0.0
    %1768 = vmatprep.subr.mxu0 0.0
    %1769 = vmatpush2.msra.mxu0 0.0
    %1770 = vmatprep.mubr.f32.mxu0 0.0
    %1771 = vmatmul.mubr.f32.gmra.mxu0 %v1638
    %v1772 = vpop.f32.mrf.mxu0
    %v1773 = vadd.f32 0.0, %v1772
    %v1774 = vpop.f32.mrf.mxu0
    %v1775 = vadd.f32 0.0, %v1774
    %1776 = vdwg.mxu0
    %1777 = vmatprep.subr.mxu0 %v1705
    %1778 = vmatpush1.msra.mxu0 %v1704
    %1779 = vmatprep.subr.mxu0 %v1701
    %1780 = vmatpush1.msra.mxu0 %v1700
    %1781 = vmatprep.subr.mxu0 %v1697
    %1782 = vmatpush1.msra.mxu0 %v1696
    %1783 = vmatprep.subr.mxu0 %v1693
    %1784 = vmatpush1.msra.mxu0 %v1692
    %1785 = vmatprep.subr.mxu0 %v1689
    %1786 = vmatpush1.msra.mxu0 %v1688
    %1787 = vmatprep.subr.mxu0 %v1685
    %1788 = vmatpush1.msra.mxu0 %v1684
    %1789 = vmatprep.subr.mxu0 %v1681
    %1790 = vmatpush1.msra.mxu0 %v1680
    %1791 = vmatprep.subr.mxu0 %v1677
    %1792 = vmatpush1.msra.mxu0 %v1676
    %1793 = vmatprep.subr.mxu0 %v1673
    %1794 = vmatpush1.msra.mxu0 %v1672
    %1795 = vmatprep.subr.mxu0 %v1669
    %1796 = vmatpush1.msra.mxu0 %v1668
    %1797 = vmatprep.subr.mxu0 %v1665
    %1798 = vmatpush1.msra.mxu0 %v1664
    %1799 = vmatprep.subr.mxu0 %v1661
    %1800 = vmatpush1.msra.mxu0 %v1660
    %1801 = vmatprep.subr.mxu0 %v1657
    %1802 = vmatpush1.msra.mxu0 %v1656
    %1803 = vmatprep.subr.mxu0 %v1653
    %1804 = vmatpush1.msra.mxu0 %v1652
    %1805 = vmatprep.subr.mxu0 %v1649
    %1806 = vmatpush1.msra.mxu0 %v1648
    %1807 = vmatprep.subr.mxu0 %v1645
    %1808 = vmatpush1.msra.mxu0 %v1644
    %1809 = vmatprep.subr.mxu0 0.0
    %1810 = vmatpush2.msra.mxu0 0.0
    %1811 = vmatprep.subr.mxu0 0.0
    %1812 = vmatpush2.msra.mxu0 0.0
    %1813 = vmatprep.subr.mxu0 0.0
    %1814 = vmatpush2.msra.mxu0 0.0
    %1815 = vmatprep.subr.mxu0 0.0
    %1816 = vmatpush2.msra.mxu0 0.0
    %1817 = vmatprep.subr.mxu0 0.0
    %1818 = vmatpush2.msra.mxu0 0.0
    %1819 = vmatprep.subr.mxu0 0.0
    %1820 = vmatpush2.msra.mxu0 0.0
    %1821 = vmatprep.subr.mxu0 0.0
    %1822 = vmatpush2.msra.mxu0 0.0
    %1823 = vmatprep.subr.mxu0 0.0
    %1824 = vmatpush2.msra.mxu0 0.0
    %1825 = vmatprep.subr.mxu0 0.0
    %1826 = vmatpush2.msra.mxu0 0.0
    %1827 = vmatprep.subr.mxu0 0.0
    %1828 = vmatpush2.msra.mxu0 0.0
    %1829 = vmatprep.subr.mxu0 0.0
    %1830 = vmatpush2.msra.mxu0 0.0
    %1831 = vmatprep.subr.mxu0 0.0
    %1832 = vmatpush2.msra.mxu0 0.0
    %1833 = vmatprep.subr.mxu0 0.0
    %1834 = vmatpush2.msra.mxu0 0.0
    %1835 = vmatprep.subr.mxu0 0.0
    %1836 = vmatpush2.msra.mxu0 0.0
    %1837 = vmatprep.subr.mxu0 0.0
    %1838 = vmatpush2.msra.mxu0 0.0
    %1839 = vmatprep.subr.mxu0 0.0
    %1840 = vmatpush2.msra.mxu0 0.0
    %1841 = vmatprep.mubr.f32.mxu0 0.0
    %1842 = vmatmul.mubr.f32.gmra.mxu0 %v1638
    %v1843 = vpop.f32.mrf.mxu0
    %v1844 = vadd.f32 0.0, %v1843
    %v1845 = vpop.f32.mrf.mxu0
    %v1846 = vadd.f32 0.0, %v1845
    %1847 = vdwg.mxu0
    %v1852 = vcombine.low %v1773, %v1775
    %v1853 = vcombine.low %v1844, %v1846
    %v1855 = vunpack.c.l.s4 1966171168
    %v1856 = vunpack.c.0.s8 %v1855
    %v1857 = vlaneseq
    %v1858 = vshrl.u32 %v1857, 7
    %v1859 = vsub.s32 %v1856, %v1858
    %v1860 = vrot.slane %v1852, %v1859
    %v1862 = vunpack.c.l.s4 1966171168
    %v1863 = vunpack.c.0.s8 %v1862
    %v1864 = vlaneseq
    %v1865 = vshrl.u32 %v1864, 7
    %v1866 = vsub.s32 %v1863, %v1865
    %v1867 = vrot.slane %v1853, %v1866
    %v1868 = vcombine.low %v1860, %v1867
    %v1870 = vunpack.c.l.s4 1966171168
    %v1871 = vunpack.c.0.s8 %v1870
    %v1872 = vlaneseq
    %v1873 = vshrl.u32 %v1872, 7
    %v1874 = vsub.s32 %v1871, %v1873
    %v1875 = vrot.slane %v1868, %v1874
    %v1877 = vadd.f32 %v1641, %v1875
    %v1878 = vxor.u32 %v1877, 2147483648
    %v1879 = vmul.f32 %v1878, 1.442695
    %v1880 = vpow.pop %v1879
    %v1881 = vadd.f32 %v1880, 1.0
    %v1882 = vrcp.pop %v1881
    %v1883 = vmul.f32 1.0, %v1882
    %v1885 = vrot.slane %v1877, 1
    %v1887 = vxor.u32 %v1885, 2147483648
    %v1888 = vmul.f32 %v1887, 1.442695
    %v1889 = vpow.pop %v1888
    %v1890 = vadd.f32 %v1889, 1.0
    %v1891 = vrcp.pop %v1890
    %v1892 = vmul.f32 1.0, %v1891
    %v1893 = vrot.slane %v1877, 2
    %v1895 = vtanh.pop %v1893
    %v1896 = vrot.slane %v1877, 3
    %v1898 = vxor.u32 %v1896, 2147483648
    %v1899 = vmul.f32 %v1898, 1.442695
    %v1900 = vpow.pop %v1899
    %v1901 = vadd.f32 %v1900, 1.0
    %v1902 = vrcp.pop %v1901
    %v1903 = vmul.f32 1.0, %v1902
    %v1904 = vmul.f32 %v1892, %v1636
    %v1905 = vmul.f32 %v1883, %v1895
    %v1906 = vadd.f32 %v1904, %v1905
    %v1907 = vtanh.pop %v1906
    %v1908 = vmul.f32 %v1903, %v1907
    %1909 = vst [vmem:[#allocation2 + $0x5] sm:$0x1] %v1908
    %s1910 = scalar_lea.vmem [#allocation3], 6
    %v1911 = vld [vmem:[%s1910] ss:$8 sm:$0xf]
    %v1912 = vld [vmem:[#allocation8] sm:$0xff]
    %v1913 = vld [vmem:[#allocation8 + $0x8] sm:$0xff]
    %v1914 = vld [vmem:[#allocation8 + $0x10] sm:$0xff]
    %v1915 = vld [vmem:[#allocation8 + $0x18] sm:$0xff]
    %v1916 = vld [vmem:[#allocation8 + $0x20] sm:$0xff]
    %v1917 = vld [vmem:[#allocation8 + $0x28] sm:$0xff]
    %v1918 = vld [vmem:[#allocation8 + $0x30] sm:$0xff]
    %v1919 = vld [vmem:[#allocation8 + $0x38] sm:$0xff]
    %v1920 = vld [vmem:[#allocation8 + $0x40] sm:$0xff]
    %v1921 = vld [vmem:[#allocation8 + $0x48] sm:$0xff]
    %v1922 = vld [vmem:[#allocation8 + $0x50] sm:$0xff]
    %v1923 = vld [vmem:[#allocation8 + $0x58] sm:$0xff]
    %v1924 = vld [vmem:[#allocation8 + $0x60] sm:$0xff]
    %v1925 = vld [vmem:[#allocation8 + $0x68] sm:$0xff]
    %v1926 = vld [vmem:[#allocation8 + $0x70] sm:$0xff]
    %v1927 = vld [vmem:[#allocation8 + $0x78] sm:$0xff]
    %v1928 = vld [vmem:[#allocation8 + $0x80] sm:$0xff]
    %v1929 = vld [vmem:[#allocation8 + $0x88] sm:$0xff]
    %v1930 = vld [vmem:[#allocation8 + $0x90] sm:$0xff]
    %v1931 = vld [vmem:[#allocation8 + $0x98] sm:$0xff]
    %v1932 = vld [vmem:[#allocation8 + $0xa0] sm:$0xff]
    %v1933 = vld [vmem:[#allocation8 + $0xa8] sm:$0xff]
    %v1934 = vld [vmem:[#allocation8 + $0xb0] sm:$0xff]
    %v1935 = vld [vmem:[#allocation8 + $0xb8] sm:$0xff]
    %v1936 = vld [vmem:[#allocation8 + $0xc0] sm:$0xff]
    %v1937 = vld [vmem:[#allocation8 + $0xc8] sm:$0xff]
    %v1938 = vld [vmem:[#allocation8 + $0xd0] sm:$0xff]
    %v1939 = vld [vmem:[#allocation8 + $0xd8] sm:$0xff]
    %v1940 = vld [vmem:[#allocation8 + $0xe0] sm:$0xff]
    %v1941 = vld [vmem:[#allocation8 + $0xe8] sm:$0xff]
    %v1942 = vld [vmem:[#allocation8 + $0xf0] sm:$0xff]
    %v1943 = vld [vmem:[#allocation8 + $0xf8] sm:$0xff]
    %v1944 = vld [vmem:[#allocation8 + $0x100] sm:$0xff]
    %v1945 = vld [vmem:[#allocation8 + $0x108] sm:$0xff]
    %v1946 = vld [vmem:[#allocation8 + $0x110] sm:$0xff]
    %v1947 = vld [vmem:[#allocation8 + $0x118] sm:$0xff]
    %v1948 = vld [vmem:[#allocation8 + $0x120] sm:$0xff]
    %v1949 = vld [vmem:[#allocation8 + $0x128] sm:$0xff]
    %v1950 = vld [vmem:[#allocation8 + $0x130] sm:$0xff]
    %v1951 = vld [vmem:[#allocation8 + $0x138] sm:$0xff]
    %v1952 = vld [vmem:[#allocation8 + $0x140] sm:$0xff]
    %v1953 = vld [vmem:[#allocation8 + $0x148] sm:$0xff]
    %v1954 = vld [vmem:[#allocation8 + $0x150] sm:$0xff]
    %v1955 = vld [vmem:[#allocation8 + $0x158] sm:$0xff]
    %v1956 = vld [vmem:[#allocation8 + $0x160] sm:$0xff]
    %v1957 = vld [vmem:[#allocation8 + $0x168] sm:$0xff]
    %v1958 = vld [vmem:[#allocation8 + $0x170] sm:$0xff]
    %v1959 = vld [vmem:[#allocation8 + $0x178] sm:$0xff]
    %v1960 = vld [vmem:[#allocation8 + $0x180] sm:$0xff]
    %v1961 = vld [vmem:[#allocation8 + $0x188] sm:$0xff]
    %v1962 = vld [vmem:[#allocation8 + $0x190] sm:$0xff]
    %v1963 = vld [vmem:[#allocation8 + $0x198] sm:$0xff]
    %v1964 = vld [vmem:[#allocation8 + $0x1a0] sm:$0xff]
    %v1965 = vld [vmem:[#allocation8 + $0x1a8] sm:$0xff]
    %v1966 = vld [vmem:[#allocation8 + $0x1b0] sm:$0xff]
    %v1967 = vld [vmem:[#allocation8 + $0x1b8] sm:$0xff]
    %v1968 = vld [vmem:[#allocation8 + $0x1c0] sm:$0xff]
    %v1969 = vld [vmem:[#allocation8 + $0x1c8] sm:$0xff]
    %v1970 = vld [vmem:[#allocation8 + $0x1d0] sm:$0xff]
    %v1971 = vld [vmem:[#allocation8 + $0x1d8] sm:$0xff]
    %v1972 = vld [vmem:[#allocation8 + $0x1e0] sm:$0xff]
    %v1973 = vld [vmem:[#allocation8 + $0x1e8] sm:$0xff]
    %v1974 = vld [vmem:[#allocation8 + $0x1f0] sm:$0xff]
    %v1975 = vld [vmem:[#allocation8 + $0x1f8] sm:$0xff]
    %1976 = vmatprep.subr.mxu0 %v1973
    %1977 = vmatpush1.msra.mxu0 %v1972
    %1978 = vmatprep.subr.mxu0 %v1969
    %1979 = vmatpush1.msra.mxu0 %v1968
    %1980 = vmatprep.subr.mxu0 %v1965
    %1981 = vmatpush1.msra.mxu0 %v1964
    %1982 = vmatprep.subr.mxu0 %v1961
    %1983 = vmatpush1.msra.mxu0 %v1960
    %1984 = vmatprep.subr.mxu0 %v1957
    %1985 = vmatpush1.msra.mxu0 %v1956
    %1986 = vmatprep.subr.mxu0 %v1953
    %1987 = vmatpush1.msra.mxu0 %v1952
    %1988 = vmatprep.subr.mxu0 %v1949
    %1989 = vmatpush1.msra.mxu0 %v1948
    %1990 = vmatprep.subr.mxu0 %v1945
    %1991 = vmatpush1.msra.mxu0 %v1944
    %1992 = vmatprep.subr.mxu0 %v1941
    %1993 = vmatpush1.msra.mxu0 %v1940
    %1994 = vmatprep.subr.mxu0 %v1937
    %1995 = vmatpush1.msra.mxu0 %v1936
    %1996 = vmatprep.subr.mxu0 %v1933
    %1997 = vmatpush1.msra.mxu0 %v1932
    %1998 = vmatprep.subr.mxu0 %v1929
    %1999 = vmatpush1.msra.mxu0 %v1928
    %2000 = vmatprep.subr.mxu0 %v1925
    %2001 = vmatpush1.msra.mxu0 %v1924
    %2002 = vmatprep.subr.mxu0 %v1921
    %2003 = vmatpush1.msra.mxu0 %v1920
    %2004 = vmatprep.subr.mxu0 %v1917
    %2005 = vmatpush1.msra.mxu0 %v1916
    %2006 = vmatprep.subr.mxu0 %v1913
    %2007 = vmatpush1.msra.mxu0 %v1912
    %2008 = vmatprep.subr.mxu0 0.0
    %2009 = vmatpush2.msra.mxu0 0.0
    %2010 = vmatprep.subr.mxu0 0.0
    %2011 = vmatpush2.msra.mxu0 0.0
    %2012 = vmatprep.subr.mxu0 0.0
    %2013 = vmatpush2.msra.mxu0 0.0
    %2014 = vmatprep.subr.mxu0 0.0
    %2015 = vmatpush2.msra.mxu0 0.0
    %2016 = vmatprep.subr.mxu0 0.0
    %2017 = vmatpush2.msra.mxu0 0.0
    %2018 = vmatprep.subr.mxu0 0.0
    %2019 = vmatpush2.msra.mxu0 0.0
    %2020 = vmatprep.subr.mxu0 0.0
    %2021 = vmatpush2.msra.mxu0 0.0
    %2022 = vmatprep.subr.mxu0 0.0
    %2023 = vmatpush2.msra.mxu0 0.0
    %2024 = vmatprep.subr.mxu0 0.0
    %2025 = vmatpush2.msra.mxu0 0.0
    %2026 = vmatprep.subr.mxu0 0.0
    %2027 = vmatpush2.msra.mxu0 0.0
    %2028 = vmatprep.subr.mxu0 0.0
    %2029 = vmatpush2.msra.mxu0 0.0
    %2030 = vmatprep.subr.mxu0 0.0
    %2031 = vmatpush2.msra.mxu0 0.0
    %2032 = vmatprep.subr.mxu0 0.0
    %2033 = vmatpush2.msra.mxu0 0.0
    %2034 = vmatprep.subr.mxu0 0.0
    %2035 = vmatpush2.msra.mxu0 0.0
    %2036 = vmatprep.subr.mxu0 0.0
    %2037 = vmatpush2.msra.mxu0 0.0
    %2038 = vmatprep.subr.mxu0 0.0
    %2039 = vmatpush2.msra.mxu0 0.0
    %2040 = vmatprep.mubr.f32.mxu0 0.0
    %2041 = vmatmul.mubr.f32.gmra.mxu0 %v1908
    %v2042 = vpop.f32.mrf.mxu0
    %v2043 = vadd.f32 0.0, %v2042
    %v2044 = vpop.f32.mrf.mxu0
    %v2045 = vadd.f32 0.0, %v2044
    %2046 = vdwg.mxu0
    %2047 = vmatprep.subr.mxu0 %v1975
    %2048 = vmatpush1.msra.mxu0 %v1974
    %2049 = vmatprep.subr.mxu0 %v1971
    %2050 = vmatpush1.msra.mxu0 %v1970
    %2051 = vmatprep.subr.mxu0 %v1967
    %2052 = vmatpush1.msra.mxu0 %v1966
    %2053 = vmatprep.subr.mxu0 %v1963
    %2054 = vmatpush1.msra.mxu0 %v1962
    %2055 = vmatprep.subr.mxu0 %v1959
    %2056 = vmatpush1.msra.mxu0 %v1958
    %2057 = vmatprep.subr.mxu0 %v1955
    %2058 = vmatpush1.msra.mxu0 %v1954
    %2059 = vmatprep.subr.mxu0 %v1951
    %2060 = vmatpush1.msra.mxu0 %v1950
    %2061 = vmatprep.subr.mxu0 %v1947
    %2062 = vmatpush1.msra.mxu0 %v1946
    %2063 = vmatprep.subr.mxu0 %v1943
    %2064 = vmatpush1.msra.mxu0 %v1942
    %2065 = vmatprep.subr.mxu0 %v1939
    %2066 = vmatpush1.msra.mxu0 %v1938
    %2067 = vmatprep.subr.mxu0 %v1935
    %2068 = vmatpush1.msra.mxu0 %v1934
    %2069 = vmatprep.subr.mxu0 %v1931
    %2070 = vmatpush1.msra.mxu0 %v1930
    %2071 = vmatprep.subr.mxu0 %v1927
    %2072 = vmatpush1.msra.mxu0 %v1926
    %2073 = vmatprep.subr.mxu0 %v1923
    %2074 = vmatpush1.msra.mxu0 %v1922
    %2075 = vmatprep.subr.mxu0 %v1919
    %2076 = vmatpush1.msra.mxu0 %v1918
    %2077 = vmatprep.subr.mxu0 %v1915
    %2078 = vmatpush1.msra.mxu0 %v1914
    %2079 = vmatprep.subr.mxu0 0.0
    %2080 = vmatpush2.msra.mxu0 0.0
    %2081 = vmatprep.subr.mxu0 0.0
    %2082 = vmatpush2.msra.mxu0 0.0
    %2083 = vmatprep.subr.mxu0 0.0
    %2084 = vmatpush2.msra.mxu0 0.0
    %2085 = vmatprep.subr.mxu0 0.0
    %2086 = vmatpush2.msra.mxu0 0.0
    %2087 = vmatprep.subr.mxu0 0.0
    %2088 = vmatpush2.msra.mxu0 0.0
    %2089 = vmatprep.subr.mxu0 0.0
    %2090 = vmatpush2.msra.mxu0 0.0
    %2091 = vmatprep.subr.mxu0 0.0
    %2092 = vmatpush2.msra.mxu0 0.0
    %2093 = vmatprep.subr.mxu0 0.0
    %2094 = vmatpush2.msra.mxu0 0.0
    %2095 = vmatprep.subr.mxu0 0.0
    %2096 = vmatpush2.msra.mxu0 0.0
    %2097 = vmatprep.subr.mxu0 0.0
    %2098 = vmatpush2.msra.mxu0 0.0
    %2099 = vmatprep.subr.mxu0 0.0
    %2100 = vmatpush2.msra.mxu0 0.0
    %2101 = vmatprep.subr.mxu0 0.0
    %2102 = vmatpush2.msra.mxu0 0.0
    %2103 = vmatprep.subr.mxu0 0.0
    %2104 = vmatpush2.msra.mxu0 0.0
    %2105 = vmatprep.subr.mxu0 0.0
    %2106 = vmatpush2.msra.mxu0 0.0
    %2107 = vmatprep.subr.mxu0 0.0
    %2108 = vmatpush2.msra.mxu0 0.0
    %2109 = vmatprep.subr.mxu0 0.0
    %2110 = vmatpush2.msra.mxu0 0.0
    %2111 = vmatprep.mubr.f32.mxu0 0.0
    %2112 = vmatmul.mubr.f32.gmra.mxu0 %v1908
    %v2113 = vpop.f32.mrf.mxu0
    %v2114 = vadd.f32 0.0, %v2113
    %v2115 = vpop.f32.mrf.mxu0
    %v2116 = vadd.f32 0.0, %v2115
    %2117 = vdwg.mxu0
    %v2122 = vcombine.low %v2043, %v2045
    %v2123 = vcombine.low %v2114, %v2116
    %v2125 = vunpack.c.l.s4 1966171168
    %v2126 = vunpack.c.0.s8 %v2125
    %v2127 = vlaneseq
    %v2128 = vshrl.u32 %v2127, 7
    %v2129 = vsub.s32 %v2126, %v2128
    %v2130 = vrot.slane %v2122, %v2129
    %v2132 = vunpack.c.l.s4 1966171168
    %v2133 = vunpack.c.0.s8 %v2132
    %v2134 = vlaneseq
    %v2135 = vshrl.u32 %v2134, 7
    %v2136 = vsub.s32 %v2133, %v2135
    %v2137 = vrot.slane %v2123, %v2136
    %v2138 = vcombine.low %v2130, %v2137
    %v2140 = vunpack.c.l.s4 1966171168
    %v2141 = vunpack.c.0.s8 %v2140
    %v2142 = vlaneseq
    %v2143 = vshrl.u32 %v2142, 7
    %v2144 = vsub.s32 %v2141, %v2143
    %v2145 = vrot.slane %v2138, %v2144
    %v2147 = vadd.f32 %v1911, %v2145
    %v2148 = vxor.u32 %v2147, 2147483648
    %v2149 = vmul.f32 %v2148, 1.442695
    %v2150 = vpow.pop %v2149
    %v2151 = vadd.f32 %v2150, 1.0
    %v2152 = vrcp.pop %v2151
    %v2153 = vmul.f32 1.0, %v2152
    %v2155 = vrot.slane %v2147, 1
    %v2157 = vxor.u32 %v2155, 2147483648
    %v2158 = vmul.f32 %v2157, 1.442695
    %v2159 = vpow.pop %v2158
    %v2160 = vadd.f32 %v2159, 1.0
    %v2161 = vrcp.pop %v2160
    %v2162 = vmul.f32 1.0, %v2161
    %v2163 = vrot.slane %v2147, 2
    %v2165 = vtanh.pop %v2163
    %v2166 = vrot.slane %v2147, 3
    %v2168 = vxor.u32 %v2166, 2147483648
    %v2169 = vmul.f32 %v2168, 1.442695
    %v2170 = vpow.pop %v2169
    %v2171 = vadd.f32 %v2170, 1.0
    %v2172 = vrcp.pop %v2171
    %v2173 = vmul.f32 1.0, %v2172
    %v2174 = vmul.f32 %v2162, %v1906
    %v2175 = vmul.f32 %v2153, %v2165
    %v2176 = vadd.f32 %v2174, %v2175
    %v2177 = vtanh.pop %v2176
    %v2178 = vmul.f32 %v2173, %v2177
    %2179 = vst [vmem:[#allocation2 + $0x6] sm:$0x1] %v2178
    %s2180 = scalar_lea.vmem [#allocation3], 7
    %v2181 = vld [vmem:[%s2180] ss:$8 sm:$0xf]
    %v2182 = vld [vmem:[#allocation8] sm:$0xff]
    %v2183 = vld [vmem:[#allocation8 + $0x8] sm:$0xff]
    %v2184 = vld [vmem:[#allocation8 + $0x10] sm:$0xff]
    %v2185 = vld [vmem:[#allocation8 + $0x18] sm:$0xff]
    %v2186 = vld [vmem:[#allocation8 + $0x20] sm:$0xff]
    %v2187 = vld [vmem:[#allocation8 + $0x28] sm:$0xff]
    %v2188 = vld [vmem:[#allocation8 + $0x30] sm:$0xff]
    %v2189 = vld [vmem:[#allocation8 + $0x38] sm:$0xff]
    %v2190 = vld [vmem:[#allocation8 + $0x40] sm:$0xff]
    %v2191 = vld [vmem:[#allocation8 + $0x48] sm:$0xff]
    %v2192 = vld [vmem:[#allocation8 + $0x50] sm:$0xff]
    %v2193 = vld [vmem:[#allocation8 + $0x58] sm:$0xff]
    %v2194 = vld [vmem:[#allocation8 + $0x60] sm:$0xff]
    %v2195 = vld [vmem:[#allocation8 + $0x68] sm:$0xff]
    %v2196 = vld [vmem:[#allocation8 + $0x70] sm:$0xff]
    %v2197 = vld [vmem:[#allocation8 + $0x78] sm:$0xff]
    %v2198 = vld [vmem:[#allocation8 + $0x80] sm:$0xff]
    %v2199 = vld [vmem:[#allocation8 + $0x88] sm:$0xff]
    %v2200 = vld [vmem:[#allocation8 + $0x90] sm:$0xff]
    %v2201 = vld [vmem:[#allocation8 + $0x98] sm:$0xff]
    %v2202 = vld [vmem:[#allocation8 + $0xa0] sm:$0xff]
    %v2203 = vld [vmem:[#allocation8 + $0xa8] sm:$0xff]
    %v2204 = vld [vmem:[#allocation8 + $0xb0] sm:$0xff]
    %v2205 = vld [vmem:[#allocation8 + $0xb8] sm:$0xff]
    %v2206 = vld [vmem:[#allocation8 + $0xc0] sm:$0xff]
    %v2207 = vld [vmem:[#allocation8 + $0xc8] sm:$0xff]
    %v2208 = vld [vmem:[#allocation8 + $0xd0] sm:$0xff]
    %v2209 = vld [vmem:[#allocation8 + $0xd8] sm:$0xff]
    %v2210 = vld [vmem:[#allocation8 + $0xe0] sm:$0xff]
    %v2211 = vld [vmem:[#allocation8 + $0xe8] sm:$0xff]
    %v2212 = vld [vmem:[#allocation8 + $0xf0] sm:$0xff]
    %v2213 = vld [vmem:[#allocation8 + $0xf8] sm:$0xff]
    %v2214 = vld [vmem:[#allocation8 + $0x100] sm:$0xff]
    %v2215 = vld [vmem:[#allocation8 + $0x108] sm:$0xff]
    %v2216 = vld [vmem:[#allocation8 + $0x110] sm:$0xff]
    %v2217 = vld [vmem:[#allocation8 + $0x118] sm:$0xff]
    %v2218 = vld [vmem:[#allocation8 + $0x120] sm:$0xff]
    %v2219 = vld [vmem:[#allocation8 + $0x128] sm:$0xff]
    %v2220 = vld [vmem:[#allocation8 + $0x130] sm:$0xff]
    %v2221 = vld [vmem:[#allocation8 + $0x138] sm:$0xff]
    %v2222 = vld [vmem:[#allocation8 + $0x140] sm:$0xff]
    %v2223 = vld [vmem:[#allocation8 + $0x148] sm:$0xff]
    %v2224 = vld [vmem:[#allocation8 + $0x150] sm:$0xff]
    %v2225 = vld [vmem:[#allocation8 + $0x158] sm:$0xff]
    %v2226 = vld [vmem:[#allocation8 + $0x160] sm:$0xff]
    %v2227 = vld [vmem:[#allocation8 + $0x168] sm:$0xff]
    %v2228 = vld [vmem:[#allocation8 + $0x170] sm:$0xff]
    %v2229 = vld [vmem:[#allocation8 + $0x178] sm:$0xff]
    %v2230 = vld [vmem:[#allocation8 + $0x180] sm:$0xff]
    %v2231 = vld [vmem:[#allocation8 + $0x188] sm:$0xff]
    %v2232 = vld [vmem:[#allocation8 + $0x190] sm:$0xff]
    %v2233 = vld [vmem:[#allocation8 + $0x198] sm:$0xff]
    %v2234 = vld [vmem:[#allocation8 + $0x1a0] sm:$0xff]
    %v2235 = vld [vmem:[#allocation8 + $0x1a8] sm:$0xff]
    %v2236 = vld [vmem:[#allocation8 + $0x1b0] sm:$0xff]
    %v2237 = vld [vmem:[#allocation8 + $0x1b8] sm:$0xff]
    %v2238 = vld [vmem:[#allocation8 + $0x1c0] sm:$0xff]
    %v2239 = vld [vmem:[#allocation8 + $0x1c8] sm:$0xff]
    %v2240 = vld [vmem:[#allocation8 + $0x1d0] sm:$0xff]
    %v2241 = vld [vmem:[#allocation8 + $0x1d8] sm:$0xff]
    %v2242 = vld [vmem:[#allocation8 + $0x1e0] sm:$0xff]
    %v2243 = vld [vmem:[#allocation8 + $0x1e8] sm:$0xff]
    %v2244 = vld [vmem:[#allocation8 + $0x1f0] sm:$0xff]
    %v2245 = vld [vmem:[#allocation8 + $0x1f8] sm:$0xff]
    %2246 = vmatprep.subr.mxu0 %v2243
    %2247 = vmatpush1.msra.mxu0 %v2242
    %2248 = vmatprep.subr.mxu0 %v2239
    %2249 = vmatpush1.msra.mxu0 %v2238
    %2250 = vmatprep.subr.mxu0 %v2235
    %2251 = vmatpush1.msra.mxu0 %v2234
    %2252 = vmatprep.subr.mxu0 %v2231
    %2253 = vmatpush1.msra.mxu0 %v2230
    %2254 = vmatprep.subr.mxu0 %v2227
    %2255 = vmatpush1.msra.mxu0 %v2226
    %2256 = vmatprep.subr.mxu0 %v2223
    %2257 = vmatpush1.msra.mxu0 %v2222
    %2258 = vmatprep.subr.mxu0 %v2219
    %2259 = vmatpush1.msra.mxu0 %v2218
    %2260 = vmatprep.subr.mxu0 %v2215
    %2261 = vmatpush1.msra.mxu0 %v2214
    %2262 = vmatprep.subr.mxu0 %v2211
    %2263 = vmatpush1.msra.mxu0 %v2210
    %2264 = vmatprep.subr.mxu0 %v2207
    %2265 = vmatpush1.msra.mxu0 %v2206
    %2266 = vmatprep.subr.mxu0 %v2203
    %2267 = vmatpush1.msra.mxu0 %v2202
    %2268 = vmatprep.subr.mxu0 %v2199
    %2269 = vmatpush1.msra.mxu0 %v2198
    %2270 = vmatprep.subr.mxu0 %v2195
    %2271 = vmatpush1.msra.mxu0 %v2194
    %2272 = vmatprep.subr.mxu0 %v2191
    %2273 = vmatpush1.msra.mxu0 %v2190
    %2274 = vmatprep.subr.mxu0 %v2187
    %2275 = vmatpush1.msra.mxu0 %v2186
    %2276 = vmatprep.subr.mxu0 %v2183
    %2277 = vmatpush1.msra.mxu0 %v2182
    %2278 = vmatprep.subr.mxu0 0.0
    %2279 = vmatpush2.msra.mxu0 0.0
    %2280 = vmatprep.subr.mxu0 0.0
    %2281 = vmatpush2.msra.mxu0 0.0
    %2282 = vmatprep.subr.mxu0 0.0
    %2283 = vmatpush2.msra.mxu0 0.0
    %2284 = vmatprep.subr.mxu0 0.0
    %2285 = vmatpush2.msra.mxu0 0.0
    %2286 = vmatprep.subr.mxu0 0.0
    %2287 = vmatpush2.msra.mxu0 0.0
    %2288 = vmatprep.subr.mxu0 0.0
    %2289 = vmatpush2.msra.mxu0 0.0
    %2290 = vmatprep.subr.mxu0 0.0
    %2291 = vmatpush2.msra.mxu0 0.0
    %2292 = vmatprep.subr.mxu0 0.0
    %2293 = vmatpush2.msra.mxu0 0.0
    %2294 = vmatprep.subr.mxu0 0.0
    %2295 = vmatpush2.msra.mxu0 0.0
    %2296 = vmatprep.subr.mxu0 0.0
    %2297 = vmatpush2.msra.mxu0 0.0
    %2298 = vmatprep.subr.mxu0 0.0
    %2299 = vmatpush2.msra.mxu0 0.0
    %2300 = vmatprep.subr.mxu0 0.0
    %2301 = vmatpush2.msra.mxu0 0.0
    %2302 = vmatprep.subr.mxu0 0.0
    %2303 = vmatpush2.msra.mxu0 0.0
    %2304 = vmatprep.subr.mxu0 0.0
    %2305 = vmatpush2.msra.mxu0 0.0
    %2306 = vmatprep.subr.mxu0 0.0
    %2307 = vmatpush2.msra.mxu0 0.0
    %2308 = vmatprep.subr.mxu0 0.0
    %2309 = vmatpush2.msra.mxu0 0.0
    %2310 = vmatprep.mubr.f32.mxu0 0.0
    %2311 = vmatmul.mubr.f32.gmra.mxu0 %v2178
    %v2312 = vpop.f32.mrf.mxu0
    %v2313 = vadd.f32 0.0, %v2312
    %v2314 = vpop.f32.mrf.mxu0
    %v2315 = vadd.f32 0.0, %v2314
    %2316 = vdwg.mxu0
    %2317 = vmatprep.subr.mxu0 %v2245
    %2318 = vmatpush1.msra.mxu0 %v2244
    %2319 = vmatprep.subr.mxu0 %v2241
    %2320 = vmatpush1.msra.mxu0 %v2240
    %2321 = vmatprep.subr.mxu0 %v2237
    %2322 = vmatpush1.msra.mxu0 %v2236
    %2323 = vmatprep.subr.mxu0 %v2233
    %2324 = vmatpush1.msra.mxu0 %v2232
    %2325 = vmatprep.subr.mxu0 %v2229
    %2326 = vmatpush1.msra.mxu0 %v2228
    %2327 = vmatprep.subr.mxu0 %v2225
    %2328 = vmatpush1.msra.mxu0 %v2224
    %2329 = vmatprep.subr.mxu0 %v2221
    %2330 = vmatpush1.msra.mxu0 %v2220
    %2331 = vmatprep.subr.mxu0 %v2217
    %2332 = vmatpush1.msra.mxu0 %v2216
    %2333 = vmatprep.subr.mxu0 %v2213
    %2334 = vmatpush1.msra.mxu0 %v2212
    %2335 = vmatprep.subr.mxu0 %v2209
    %2336 = vmatpush1.msra.mxu0 %v2208
    %2337 = vmatprep.subr.mxu0 %v2205
    %2338 = vmatpush1.msra.mxu0 %v2204
    %2339 = vmatprep.subr.mxu0 %v2201
    %2340 = vmatpush1.msra.mxu0 %v2200
    %2341 = vmatprep.subr.mxu0 %v2197
    %2342 = vmatpush1.msra.mxu0 %v2196
    %2343 = vmatprep.subr.mxu0 %v2193
    %2344 = vmatpush1.msra.mxu0 %v2192
    %2345 = vmatprep.subr.mxu0 %v2189
    %2346 = vmatpush1.msra.mxu0 %v2188
    %2347 = vmatprep.subr.mxu0 %v2185
    %2348 = vmatpush1.msra.mxu0 %v2184
    %2349 = vmatprep.subr.mxu0 0.0
    %2350 = vmatpush2.msra.mxu0 0.0
    %2351 = vmatprep.subr.mxu0 0.0
    %2352 = vmatpush2.msra.mxu0 0.0
    %2353 = vmatprep.subr.mxu0 0.0
    %2354 = vmatpush2.msra.mxu0 0.0
    %2355 = vmatprep.subr.mxu0 0.0
    %2356 = vmatpush2.msra.mxu0 0.0
    %2357 = vmatprep.subr.mxu0 0.0
    %2358 = vmatpush2.msra.mxu0 0.0
    %2359 = vmatprep.subr.mxu0 0.0
    %2360 = vmatpush2.msra.mxu0 0.0
    %2361 = vmatprep.subr.mxu0 0.0
    %2362 = vmatpush2.msra.mxu0 0.0
    %2363 = vmatprep.subr.mxu0 0.0
    %2364 = vmatpush2.msra.mxu0 0.0
    %2365 = vmatprep.subr.mxu0 0.0
    %2366 = vmatpush2.msra.mxu0 0.0
    %2367 = vmatprep.subr.mxu0 0.0
    %2368 = vmatpush2.msra.mxu0 0.0
    %2369 = vmatprep.subr.mxu0 0.0
    %2370 = vmatpush2.msra.mxu0 0.0
    %2371 = vmatprep.subr.mxu0 0.0
    %2372 = vmatpush2.msra.mxu0 0.0
    %2373 = vmatprep.subr.mxu0 0.0
    %2374 = vmatpush2.msra.mxu0 0.0
    %2375 = vmatprep.subr.mxu0 0.0
    %2376 = vmatpush2.msra.mxu0 0.0
    %2377 = vmatprep.subr.mxu0 0.0
    %2378 = vmatpush2.msra.mxu0 0.0
    %2379 = vmatprep.subr.mxu0 0.0
    %2380 = vmatpush2.msra.mxu0 0.0
    %2381 = vmatprep.mubr.f32.mxu0 0.0
    %2382 = vmatmul.mubr.f32.gmra.mxu0 %v2178
    %v2383 = vpop.f32.mrf.mxu0
    %v2384 = vadd.f32 0.0, %v2383
    %v2385 = vpop.f32.mrf.mxu0
    %v2386 = vadd.f32 0.0, %v2385
    %2387 = vdwg.mxu0
    %v2392 = vcombine.low %v2313, %v2315
    %v2393 = vcombine.low %v2384, %v2386
    %v2395 = vunpack.c.l.s4 1966171168
    %v2396 = vunpack.c.0.s8 %v2395
    %v2397 = vlaneseq
    %v2398 = vshrl.u32 %v2397, 7
    %v2399 = vsub.s32 %v2396, %v2398
    %v2400 = vrot.slane %v2392, %v2399
    %v2402 = vunpack.c.l.s4 1966171168
    %v2403 = vunpack.c.0.s8 %v2402
    %v2404 = vlaneseq
    %v2405 = vshrl.u32 %v2404, 7
    %v2406 = vsub.s32 %v2403, %v2405
    %v2407 = vrot.slane %v2393, %v2406
    %v2408 = vcombine.low %v2400, %v2407
    %v2410 = vunpack.c.l.s4 1966171168
    %v2411 = vunpack.c.0.s8 %v2410
    %v2412 = vlaneseq
    %v2413 = vshrl.u32 %v2412, 7
    %v2414 = vsub.s32 %v2411, %v2413
    %v2415 = vrot.slane %v2408, %v2414
    %v2417 = vadd.f32 %v2181, %v2415
    %v2418 = vxor.u32 %v2417, 2147483648
    %v2419 = vmul.f32 %v2418, 1.442695
    %v2420 = vpow.pop %v2419
    %v2421 = vadd.f32 %v2420, 1.0
    %v2422 = vrcp.pop %v2421
    %v2423 = vmul.f32 1.0, %v2422
    %v2425 = vrot.slane %v2417, 1
    %v2427 = vxor.u32 %v2425, 2147483648
    %v2428 = vmul.f32 %v2427, 1.442695
    %v2429 = vpow.pop %v2428
    %v2430 = vadd.f32 %v2429, 1.0
    %v2431 = vrcp.pop %v2430
    %v2432 = vmul.f32 1.0, %v2431
    %v2433 = vrot.slane %v2417, 2
    %v2435 = vtanh.pop %v2433
    %v2436 = vrot.slane %v2417, 3
    %v2438 = vxor.u32 %v2436, 2147483648
    %v2439 = vmul.f32 %v2438, 1.442695
    %v2440 = vpow.pop %v2439
    %v2441 = vadd.f32 %v2440, 1.0
    %v2442 = vrcp.pop %v2441
    %v2443 = vmul.f32 1.0, %v2442
    %v2444 = vmul.f32 %v2432, %v2176
    %v2445 = vmul.f32 %v2423, %v2435
    %v2446 = vadd.f32 %v2444, %v2445
    %v2447 = vtanh.pop %v2446
    %v2448 = vmul.f32 %v2443, %v2447
    %2449 = vst [vmem:[#allocation2 + $0x7] sm:$0x1] %v2448
    %v2450 = vld [vmem:[#allocation2] sm:$0xff]
    %v2451 = vld [vmem:[#allocation10] sm:$0xff]
    %v2452 = vld [vmem:[#allocation10 + $0x8] sm:$0xff]
    %v2453 = vld [vmem:[#allocation10 + $0x10] sm:$0xff]
    %v2454 = vld [vmem:[#allocation10 + $0x18] sm:$0xff]
    %v2455 = vld [vmem:[#allocation10 + $0x20] sm:$0xff]
    %v2456 = vld [vmem:[#allocation10 + $0x28] sm:$0xff]
    %v2457 = vld [vmem:[#allocation10 + $0x30] sm:$0xff]
    %v2458 = vld [vmem:[#allocation10 + $0x38] sm:$0xff]
    %v2459 = vld [vmem:[#allocation10 + $0x40] sm:$0xff]
    %v2460 = vld [vmem:[#allocation10 + $0x48] sm:$0xff]
    %v2461 = vld [vmem:[#allocation10 + $0x50] sm:$0xff]
    %v2462 = vld [vmem:[#allocation10 + $0x58] sm:$0xff]
    %v2463 = vld [vmem:[#allocation10 + $0x60] sm:$0xff]
    %v2464 = vld [vmem:[#allocation10 + $0x68] sm:$0xff]
    %v2465 = vld [vmem:[#allocation10 + $0x70] sm:$0xff]
    %v2466 = vld [vmem:[#allocation10 + $0x78] sm:$0xff]
    %v2467 = vld [vmem:[#allocation10 + $0x80] sm:$0xff]
    %v2468 = vld [vmem:[#allocation10 + $0x88] sm:$0xff]
    %v2469 = vld [vmem:[#allocation10 + $0x90] sm:$0xff]
    %v2470 = vld [vmem:[#allocation10 + $0x98] sm:$0xff]
    %v2471 = vld [vmem:[#allocation10 + $0xa0] sm:$0xff]
    %v2472 = vld [vmem:[#allocation10 + $0xa8] sm:$0xff]
    %v2473 = vld [vmem:[#allocation10 + $0xb0] sm:$0xff]
    %v2474 = vld [vmem:[#allocation10 + $0xb8] sm:$0xff]
    %v2475 = vld [vmem:[#allocation10 + $0xc0] sm:$0xff]
    %v2476 = vld [vmem:[#allocation10 + $0xc8] sm:$0xff]
    %v2477 = vld [vmem:[#allocation10 + $0xd0] sm:$0xff]
    %v2478 = vld [vmem:[#allocation10 + $0xd8] sm:$0xff]
    %v2479 = vld [vmem:[#allocation10 + $0xe0] sm:$0xff]
    %v2480 = vld [vmem:[#allocation10 + $0xe8] sm:$0xff]
    %v2481 = vld [vmem:[#allocation10 + $0xf0] sm:$0xff]
    %v2482 = vld [vmem:[#allocation10 + $0xf8] sm:$0xff]
    %v2483 = vld [vmem:[#allocation10 + $0x100] sm:$0xff]
    %v2484 = vld [vmem:[#allocation10 + $0x108] sm:$0xff]
    %v2485 = vld [vmem:[#allocation10 + $0x110] sm:$0xff]
    %v2486 = vld [vmem:[#allocation10 + $0x118] sm:$0xff]
    %v2487 = vld [vmem:[#allocation10 + $0x120] sm:$0xff]
    %v2488 = vld [vmem:[#allocation10 + $0x128] sm:$0xff]
    %v2489 = vld [vmem:[#allocation10 + $0x130] sm:$0xff]
    %v2490 = vld [vmem:[#allocation10 + $0x138] sm:$0xff]
    %v2491 = vld [vmem:[#allocation10 + $0x140] sm:$0xff]
    %v2492 = vld [vmem:[#allocation10 + $0x148] sm:$0xff]
    %v2493 = vld [vmem:[#allocation10 + $0x150] sm:$0xff]
    %v2494 = vld [vmem:[#allocation10 + $0x158] sm:$0xff]
    %v2495 = vld [vmem:[#allocation10 + $0x160] sm:$0xff]
    %v2496 = vld [vmem:[#allocation10 + $0x168] sm:$0xff]
    %v2497 = vld [vmem:[#allocation10 + $0x170] sm:$0xff]
    %v2498 = vld [vmem:[#allocation10 + $0x178] sm:$0xff]
    %v2499 = vld [vmem:[#allocation10 + $0x180] sm:$0xff]
    %v2500 = vld [vmem:[#allocation10 + $0x188] sm:$0xff]
    %v2501 = vld [vmem:[#allocation10 + $0x190] sm:$0xff]
    %v2502 = vld [vmem:[#allocation10 + $0x198] sm:$0xff]
    %v2503 = vld [vmem:[#allocation10 + $0x1a0] sm:$0xff]
    %v2504 = vld [vmem:[#allocation10 + $0x1a8] sm:$0xff]
    %v2505 = vld [vmem:[#allocation10 + $0x1b0] sm:$0xff]
    %v2506 = vld [vmem:[#allocation10 + $0x1b8] sm:$0xff]
    %v2507 = vld [vmem:[#allocation10 + $0x1c0] sm:$0xff]
    %v2508 = vld [vmem:[#allocation10 + $0x1c8] sm:$0xff]
    %v2509 = vld [vmem:[#allocation10 + $0x1d0] sm:$0xff]
    %v2510 = vld [vmem:[#allocation10 + $0x1d8] sm:$0xff]
    %v2511 = vld [vmem:[#allocation10 + $0x1e0] sm:$0xff]
    %v2512 = vld [vmem:[#allocation10 + $0x1e8] sm:$0xff]
    %v2513 = vld [vmem:[#allocation10 + $0x1f0] sm:$0xff]
    %v2514 = vld [vmem:[#allocation10 + $0x1f8] sm:$0xff]
    %v2515 = vld [vmem:[%s6] sm:$0xf]
    %v2517 = vlaneseq
    %v2518 = vshrl.u32 %v2517, 7
    %v2519 = vsub.s32 0, %v2518
    %v2520 = vrot.slane %v2515, %v2519
    %v2521 = vlaneseq
    %v2522 = vshrl.u32 %v2521, 7
    %v2523 = vsub.s32 1, %v2522
    %v2524 = vrot.slane %v2515, %v2523
    %v2525 = vlaneseq
    %v2526 = vshrl.u32 %v2525, 7
    %v2527 = vsub.s32 2, %v2526
    %v2528 = vrot.slane %v2515, %v2527
    %v2529 = vlaneseq
    %v2530 = vshrl.u32 %v2529, 7
    %v2531 = vsub.s32 3, %v2530
    %v2532 = vrot.slane %v2515, %v2531
    %2537 = vmatprep.subr.mxu0 %v2512
    %2538 = vmatpush1.msra.mxu0 %v2511
    %2539 = vmatprep.subr.mxu0 %v2508
    %2540 = vmatpush1.msra.mxu0 %v2507
    %2541 = vmatprep.subr.mxu0 %v2504
    %2542 = vmatpush1.msra.mxu0 %v2503
    %2543 = vmatprep.subr.mxu0 %v2500
    %2544 = vmatpush1.msra.mxu0 %v2499
    %2545 = vmatprep.subr.mxu0 %v2496
    %2546 = vmatpush1.msra.mxu0 %v2495
    %2547 = vmatprep.subr.mxu0 %v2492
    %2548 = vmatpush1.msra.mxu0 %v2491
    %2549 = vmatprep.subr.mxu0 %v2488
    %2550 = vmatpush1.msra.mxu0 %v2487
    %2551 = vmatprep.subr.mxu0 %v2484
    %2552 = vmatpush1.msra.mxu0 %v2483
    %2553 = vmatprep.subr.mxu0 %v2480
    %2554 = vmatpush1.msra.mxu0 %v2479
    %2555 = vmatprep.subr.mxu0 %v2476
    %2556 = vmatpush1.msra.mxu0 %v2475
    %2557 = vmatprep.subr.mxu0 %v2472
    %2558 = vmatpush1.msra.mxu0 %v2471
    %2559 = vmatprep.subr.mxu0 %v2468
    %2560 = vmatpush1.msra.mxu0 %v2467
    %2561 = vmatprep.subr.mxu0 %v2464
    %2562 = vmatpush1.msra.mxu0 %v2463
    %2563 = vmatprep.subr.mxu0 %v2460
    %2564 = vmatpush1.msra.mxu0 %v2459
    %2565 = vmatprep.subr.mxu0 %v2456
    %2566 = vmatpush1.msra.mxu0 %v2455
    %2567 = vmatprep.subr.mxu0 %v2452
    %2568 = vmatpush1.msra.mxu0 %v2451
    %2569 = vmatprep.subr.mxu0 0.0
    %2570 = vmatpush2.msra.mxu0 0.0
    %2571 = vmatprep.subr.mxu0 0.0
    %2572 = vmatpush2.msra.mxu0 0.0
    %2573 = vmatprep.subr.mxu0 0.0
    %2574 = vmatpush2.msra.mxu0 0.0
    %2575 = vmatprep.subr.mxu0 0.0
    %2576 = vmatpush2.msra.mxu0 0.0
    %2577 = vmatprep.subr.mxu0 0.0
    %2578 = vmatpush2.msra.mxu0 0.0
    %2579 = vmatprep.subr.mxu0 0.0
    %2580 = vmatpush2.msra.mxu0 0.0
    %2581 = vmatprep.subr.mxu0 0.0
    %2582 = vmatpush2.msra.mxu0 0.0
    %2583 = vmatprep.subr.mxu0 0.0
    %2584 = vmatpush2.msra.mxu0 0.0
    %2585 = vmatprep.subr.mxu0 0.0
    %2586 = vmatpush2.msra.mxu0 0.0
    %2587 = vmatprep.subr.mxu0 0.0
    %2588 = vmatpush2.msra.mxu0 0.0
    %2589 = vmatprep.subr.mxu0 0.0
    %2590 = vmatpush2.msra.mxu0 0.0
    %2591 = vmatprep.subr.mxu0 0.0
    %2592 = vmatpush2.msra.mxu0 0.0
    %2593 = vmatprep.subr.mxu0 0.0
    %2594 = vmatpush2.msra.mxu0 0.0
    %2595 = vmatprep.subr.mxu0 0.0
    %2596 = vmatpush2.msra.mxu0 0.0
    %2597 = vmatprep.subr.mxu0 0.0
    %2598 = vmatpush2.msra.mxu0 0.0
    %2599 = vmatprep.subr.mxu0 0.0
    %2600 = vmatpush2.msra.mxu0 0.0
    %2601 = vmatprep.mubr.f32.mxu0 0.0
    %2602 = vmatmul.mubr.f32.gmra.mxu0 %v2450
    %v2603 = vpop.f32.mrf.mxu0
    %v2604 = vadd.f32 %v2520, %v2603
    %v2605 = vpop.f32.mrf.mxu0
    %v2606 = vadd.f32 %v2524, %v2605
    %2607 = vdwg.mxu0
    %2608 = vmatprep.subr.mxu0 %v2514
    %2609 = vmatpush1.msra.mxu0 %v2513
    %2610 = vmatprep.subr.mxu0 %v2510
    %2611 = vmatpush1.msra.mxu0 %v2509
    %2612 = vmatprep.subr.mxu0 %v2506
    %2613 = vmatpush1.msra.mxu0 %v2505
    %2614 = vmatprep.subr.mxu0 %v2502
    %2615 = vmatpush1.msra.mxu0 %v2501
    %2616 = vmatprep.subr.mxu0 %v2498
    %2617 = vmatpush1.msra.mxu0 %v2497
    %2618 = vmatprep.subr.mxu0 %v2494
    %2619 = vmatpush1.msra.mxu0 %v2493
    %2620 = vmatprep.subr.mxu0 %v2490
    %2621 = vmatpush1.msra.mxu0 %v2489
    %2622 = vmatprep.subr.mxu0 %v2486
    %2623 = vmatpush1.msra.mxu0 %v2485
    %2624 = vmatprep.subr.mxu0 %v2482
    %2625 = vmatpush1.msra.mxu0 %v2481
    %2626 = vmatprep.subr.mxu0 %v2478
    %2627 = vmatpush1.msra.mxu0 %v2477
    %2628 = vmatprep.subr.mxu0 %v2474
    %2629 = vmatpush1.msra.mxu0 %v2473
    %2630 = vmatprep.subr.mxu0 %v2470
    %2631 = vmatpush1.msra.mxu0 %v2469
    %2632 = vmatprep.subr.mxu0 %v2466
    %2633 = vmatpush1.msra.mxu0 %v2465
    %2634 = vmatprep.subr.mxu0 %v2462
    %2635 = vmatpush1.msra.mxu0 %v2461
    %2636 = vmatprep.subr.mxu0 %v2458
    %2637 = vmatpush1.msra.mxu0 %v2457
    %2638 = vmatprep.subr.mxu0 %v2454
    %2639 = vmatpush1.msra.mxu0 %v2453
    %2640 = vmatprep.subr.mxu0 0.0
    %2641 = vmatpush2.msra.mxu0 0.0
    %2642 = vmatprep.subr.mxu0 0.0
    %2643 = vmatpush2.msra.mxu0 0.0
    %2644 = vmatprep.subr.mxu0 0.0
    %2645 = vmatpush2.msra.mxu0 0.0
    %2646 = vmatprep.subr.mxu0 0.0
    %2647 = vmatpush2.msra.mxu0 0.0
    %2648 = vmatprep.subr.mxu0 0.0
    %2649 = vmatpush2.msra.mxu0 0.0
    %2650 = vmatprep.subr.mxu0 0.0
    %2651 = vmatpush2.msra.mxu0 0.0
    %2652 = vmatprep.subr.mxu0 0.0
    %2653 = vmatpush2.msra.mxu0 0.0
    %2654 = vmatprep.subr.mxu0 0.0
    %2655 = vmatpush2.msra.mxu0 0.0
    %2656 = vmatprep.subr.mxu0 0.0
    %2657 = vmatpush2.msra.mxu0 0.0
    %2658 = vmatprep.subr.mxu0 0.0
    %2659 = vmatpush2.msra.mxu0 0.0
    %2660 = vmatprep.subr.mxu0 0.0
    %2661 = vmatpush2.msra.mxu0 0.0
    %2662 = vmatprep.subr.mxu0 0.0
    %2663 = vmatpush2.msra.mxu0 0.0
    %2664 = vmatprep.subr.mxu0 0.0
    %2665 = vmatpush2.msra.mxu0 0.0
    %2666 = vmatprep.subr.mxu0 0.0
    %2667 = vmatpush2.msra.mxu0 0.0
    %2668 = vmatprep.subr.mxu0 0.0
    %2669 = vmatpush2.msra.mxu0 0.0
    %2670 = vmatprep.subr.mxu0 0.0
    %2671 = vmatpush2.msra.mxu0 0.0
    %2672 = vmatprep.mubr.f32.mxu0 0.0
    %2673 = vmatmul.mubr.f32.gmra.mxu0 %v2450
    %v2674 = vpop.f32.mrf.mxu0
    %v2675 = vadd.f32 %v2528, %v2674
    %v2676 = vpop.f32.mrf.mxu0
    %v2677 = vadd.f32 %v2532, %v2676
    %2678 = vdwg.mxu0
    %2679 = vst [vmem:[#allocation3] sm:$0xff] %v2604
    %2680 = vst [vmem:[#allocation3 + $0x8] sm:$0xff] %v2606
    %2681 = vst [vmem:[#allocation3 + $0x10] sm:$0xff] %v2675
    %2682 = vst [vmem:[#allocation3 + $0x18] sm:$0xff] %v2677
    %v2683 = vld [vmem:[#allocation3] ss:$8 sm:$0xf]
    %v2684 = vld [vmem:[#allocation11] sm:$0xff]
    %v2685 = vld [vmem:[#allocation11 + $0x8] sm:$0xff]
    %v2686 = vld [vmem:[#allocation11 + $0x10] sm:$0xff]
    %v2687 = vld [vmem:[#allocation11 + $0x18] sm:$0xff]
    %v2688 = vld [vmem:[#allocation11 + $0x20] sm:$0xff]
    %v2689 = vld [vmem:[#allocation11 + $0x28] sm:$0xff]
    %v2690 = vld [vmem:[#allocation11 + $0x30] sm:$0xff]
    %v2691 = vld [vmem:[#allocation11 + $0x38] sm:$0xff]
    %v2692 = vld [vmem:[#allocation11 + $0x40] sm:$0xff]
    %v2693 = vld [vmem:[#allocation11 + $0x48] sm:$0xff]
    %v2694 = vld [vmem:[#allocation11 + $0x50] sm:$0xff]
    %v2695 = vld [vmem:[#allocation11 + $0x58] sm:$0xff]
    %v2696 = vld [vmem:[#allocation11 + $0x60] sm:$0xff]
    %v2697 = vld [vmem:[#allocation11 + $0x68] sm:$0xff]
    %v2698 = vld [vmem:[#allocation11 + $0x70] sm:$0xff]
    %v2699 = vld [vmem:[#allocation11 + $0x78] sm:$0xff]
    %v2700 = vld [vmem:[#allocation11 + $0x80] sm:$0xff]
    %v2701 = vld [vmem:[#allocation11 + $0x88] sm:$0xff]
    %v2702 = vld [vmem:[#allocation11 + $0x90] sm:$0xff]
    %v2703 = vld [vmem:[#allocation11 + $0x98] sm:$0xff]
    %v2704 = vld [vmem:[#allocation11 + $0xa0] sm:$0xff]
    %v2705 = vld [vmem:[#allocation11 + $0xa8] sm:$0xff]
    %v2706 = vld [vmem:[#allocation11 + $0xb0] sm:$0xff]
    %v2707 = vld [vmem:[#allocation11 + $0xb8] sm:$0xff]
    %v2708 = vld [vmem:[#allocation11 + $0xc0] sm:$0xff]
    %v2709 = vld [vmem:[#allocation11 + $0xc8] sm:$0xff]
    %v2710 = vld [vmem:[#allocation11 + $0xd0] sm:$0xff]
    %v2711 = vld [vmem:[#allocation11 + $0xd8] sm:$0xff]
    %v2712 = vld [vmem:[#allocation11 + $0xe0] sm:$0xff]
    %v2713 = vld [vmem:[#allocation11 + $0xe8] sm:$0xff]
    %v2714 = vld [vmem:[#allocation11 + $0xf0] sm:$0xff]
    %v2715 = vld [vmem:[#allocation11 + $0xf8] sm:$0xff]
    %v2716 = vld [vmem:[#allocation11 + $0x100] sm:$0xff]
    %v2717 = vld [vmem:[#allocation11 + $0x108] sm:$0xff]
    %v2718 = vld [vmem:[#allocation11 + $0x110] sm:$0xff]
    %v2719 = vld [vmem:[#allocation11 + $0x118] sm:$0xff]
    %v2720 = vld [vmem:[#allocation11 + $0x120] sm:$0xff]
    %v2721 = vld [vmem:[#allocation11 + $0x128] sm:$0xff]
    %v2722 = vld [vmem:[#allocation11 + $0x130] sm:$0xff]
    %v2723 = vld [vmem:[#allocation11 + $0x138] sm:$0xff]
    %v2724 = vld [vmem:[#allocation11 + $0x140] sm:$0xff]
    %v2725 = vld [vmem:[#allocation11 + $0x148] sm:$0xff]
    %v2726 = vld [vmem:[#allocation11 + $0x150] sm:$0xff]
    %v2727 = vld [vmem:[#allocation11 + $0x158] sm:$0xff]
    %v2728 = vld [vmem:[#allocation11 + $0x160] sm:$0xff]
    %v2729 = vld [vmem:[#allocation11 + $0x168] sm:$0xff]
    %v2730 = vld [vmem:[#allocation11 + $0x170] sm:$0xff]
    %v2731 = vld [vmem:[#allocation11 + $0x178] sm:$0xff]
    %v2732 = vld [vmem:[#allocation11 + $0x180] sm:$0xff]
    %v2733 = vld [vmem:[#allocation11 + $0x188] sm:$0xff]
    %v2734 = vld [vmem:[#allocation11 + $0x190] sm:$0xff]
    %v2735 = vld [vmem:[#allocation11 + $0x198] sm:$0xff]
    %v2736 = vld [vmem:[#allocation11 + $0x1a0] sm:$0xff]
    %v2737 = vld [vmem:[#allocation11 + $0x1a8] sm:$0xff]
    %v2738 = vld [vmem:[#allocation11 + $0x1b0] sm:$0xff]
    %v2739 = vld [vmem:[#allocation11 + $0x1b8] sm:$0xff]
    %v2740 = vld [vmem:[#allocation11 + $0x1c0] sm:$0xff]
    %v2741 = vld [vmem:[#allocation11 + $0x1c8] sm:$0xff]
    %v2742 = vld [vmem:[#allocation11 + $0x1d0] sm:$0xff]
    %v2743 = vld [vmem:[#allocation11 + $0x1d8] sm:$0xff]
    %v2744 = vld [vmem:[#allocation11 + $0x1e0] sm:$0xff]
    %v2745 = vld [vmem:[#allocation11 + $0x1e8] sm:$0xff]
    %v2746 = vld [vmem:[#allocation11 + $0x1f0] sm:$0xff]
    %v2747 = vld [vmem:[#allocation11 + $0x1f8] sm:$0xff]
    %2748 = vmatprep.subr.mxu0 %v2745
    %2749 = vmatpush1.msra.mxu0 %v2744
    %2750 = vmatprep.subr.mxu0 %v2741
    %2751 = vmatpush1.msra.mxu0 %v2740
    %2752 = vmatprep.subr.mxu0 %v2737
    %2753 = vmatpush1.msra.mxu0 %v2736
    %2754 = vmatprep.subr.mxu0 %v2733
    %2755 = vmatpush1.msra.mxu0 %v2732
    %2756 = vmatprep.subr.mxu0 %v2729
    %2757 = vmatpush1.msra.mxu0 %v2728
    %2758 = vmatprep.subr.mxu0 %v2725
    %2759 = vmatpush1.msra.mxu0 %v2724
    %2760 = vmatprep.subr.mxu0 %v2721
    %2761 = vmatpush1.msra.mxu0 %v2720
    %2762 = vmatprep.subr.mxu0 %v2717
    %2763 = vmatpush1.msra.mxu0 %v2716
    %2764 = vmatprep.subr.mxu0 %v2713
    %2765 = vmatpush1.msra.mxu0 %v2712
    %2766 = vmatprep.subr.mxu0 %v2709
    %2767 = vmatpush1.msra.mxu0 %v2708
    %2768 = vmatprep.subr.mxu0 %v2705
    %2769 = vmatpush1.msra.mxu0 %v2704
    %2770 = vmatprep.subr.mxu0 %v2701
    %2771 = vmatpush1.msra.mxu0 %v2700
    %2772 = vmatprep.subr.mxu0 %v2697
    %2773 = vmatpush1.msra.mxu0 %v2696
    %2774 = vmatprep.subr.mxu0 %v2693
    %2775 = vmatpush1.msra.mxu0 %v2692
    %2776 = vmatprep.subr.mxu0 %v2689
    %2777 = vmatpush1.msra.mxu0 %v2688
    %2778 = vmatprep.subr.mxu0 %v2685
    %2779 = vmatpush1.msra.mxu0 %v2684
    %2780 = vmatprep.subr.mxu0 0.0
    %2781 = vmatpush2.msra.mxu0 0.0
    %2782 = vmatprep.subr.mxu0 0.0
    %2783 = vmatpush2.msra.mxu0 0.0
    %2784 = vmatprep.subr.mxu0 0.0
    %2785 = vmatpush2.msra.mxu0 0.0
    %2786 = vmatprep.subr.mxu0 0.0
    %2787 = vmatpush2.msra.mxu0 0.0
    %2788 = vmatprep.subr.mxu0 0.0
    %2789 = vmatpush2.msra.mxu0 0.0
    %2790 = vmatprep.subr.mxu0 0.0
    %2791 = vmatpush2.msra.mxu0 0.0
    %2792 = vmatprep.subr.mxu0 0.0
    %2793 = vmatpush2.msra.mxu0 0.0
    %2794 = vmatprep.subr.mxu0 0.0
    %2795 = vmatpush2.msra.mxu0 0.0
    %2796 = vmatprep.subr.mxu0 0.0
    %2797 = vmatpush2.msra.mxu0 0.0
    %2798 = vmatprep.subr.mxu0 0.0
    %2799 = vmatpush2.msra.mxu0 0.0
    %2800 = vmatprep.subr.mxu0 0.0
    %2801 = vmatpush2.msra.mxu0 0.0
    %2802 = vmatprep.subr.mxu0 0.0
    %2803 = vmatpush2.msra.mxu0 0.0
    %2804 = vmatprep.subr.mxu0 0.0
    %2805 = vmatpush2.msra.mxu0 0.0
    %2806 = vmatprep.subr.mxu0 0.0
    %2807 = vmatpush2.msra.mxu0 0.0
    %2808 = vmatprep.subr.mxu0 0.0
    %2809 = vmatpush2.msra.mxu0 0.0
    %2810 = vmatprep.subr.mxu0 0.0
    %2811 = vmatpush2.msra.mxu0 0.0
    %2812 = vmatprep.mubr.f32.mxu0 0.0
    %2813 = vmatmul.mubr.f32.gmra.mxu0 0.0
    %v2814 = vpop.f32.mrf.mxu0
    %v2815 = vadd.f32 0.0, %v2814
    %v2816 = vpop.f32.mrf.mxu0
    %v2817 = vadd.f32 0.0, %v2816
    %2818 = vdwg.mxu0
    %2819 = vmatprep.subr.mxu0 %v2747
    %2820 = vmatpush1.msra.mxu0 %v2746
    %2821 = vmatprep.subr.mxu0 %v2743
    %2822 = vmatpush1.msra.mxu0 %v2742
    %2823 = vmatprep.subr.mxu0 %v2739
    %2824 = vmatpush1.msra.mxu0 %v2738
    %2825 = vmatprep.subr.mxu0 %v2735
    %2826 = vmatpush1.msra.mxu0 %v2734
    %2827 = vmatprep.subr.mxu0 %v2731
    %2828 = vmatpush1.msra.mxu0 %v2730
    %2829 = vmatprep.subr.mxu0 %v2727
    %2830 = vmatpush1.msra.mxu0 %v2726
    %2831 = vmatprep.subr.mxu0 %v2723
    %2832 = vmatpush1.msra.mxu0 %v2722
    %2833 = vmatprep.subr.mxu0 %v2719
    %2834 = vmatpush1.msra.mxu0 %v2718
    %2835 = vmatprep.subr.mxu0 %v2715
    %2836 = vmatpush1.msra.mxu0 %v2714
    %2837 = vmatprep.subr.mxu0 %v2711
    %2838 = vmatpush1.msra.mxu0 %v2710
    %2839 = vmatprep.subr.mxu0 %v2707
    %2840 = vmatpush1.msra.mxu0 %v2706
    %2841 = vmatprep.subr.mxu0 %v2703
    %2842 = vmatpush1.msra.mxu0 %v2702
    %2843 = vmatprep.subr.mxu0 %v2699
    %2844 = vmatpush1.msra.mxu0 %v2698
    %2845 = vmatprep.subr.mxu0 %v2695
    %2846 = vmatpush1.msra.mxu0 %v2694
    %2847 = vmatprep.subr.mxu0 %v2691
    %2848 = vmatpush1.msra.mxu0 %v2690
    %2849 = vmatprep.subr.mxu0 %v2687
    %2850 = vmatpush1.msra.mxu0 %v2686
    %2851 = vmatprep.subr.mxu0 0.0
    %2852 = vmatpush2.msra.mxu0 0.0
    %2853 = vmatprep.subr.mxu0 0.0
    %2854 = vmatpush2.msra.mxu0 0.0
    %2855 = vmatprep.subr.mxu0 0.0
    %2856 = vmatpush2.msra.mxu0 0.0
    %2857 = vmatprep.subr.mxu0 0.0
    %2858 = vmatpush2.msra.mxu0 0.0
    %2859 = vmatprep.subr.mxu0 0.0
    %2860 = vmatpush2.msra.mxu0 0.0
    %2861 = vmatprep.subr.mxu0 0.0
    %2862 = vmatpush2.msra.mxu0 0.0
    %2863 = vmatprep.subr.mxu0 0.0
    %2864 = vmatpush2.msra.mxu0 0.0
    %2865 = vmatprep.subr.mxu0 0.0
    %2866 = vmatpush2.msra.mxu0 0.0
    %2867 = vmatprep.subr.mxu0 0.0
    %2868 = vmatpush2.msra.mxu0 0.0
    %2869 = vmatprep.subr.mxu0 0.0
    %2870 = vmatpush2.msra.mxu0 0.0
    %2871 = vmatprep.subr.mxu0 0.0
    %2872 = vmatpush2.msra.mxu0 0.0
    %2873 = vmatprep.subr.mxu0 0.0
    %2874 = vmatpush2.msra.mxu0 0.0
    %2875 = vmatprep.subr.mxu0 0.0
    %2876 = vmatpush2.msra.mxu0 0.0
    %2877 = vmatprep.subr.mxu0 0.0
    %2878 = vmatpush2.msra.mxu0 0.0
    %2879 = vmatprep.subr.mxu0 0.0
    %2880 = vmatpush2.msra.mxu0 0.0
    %2881 = vmatprep.subr.mxu0 0.0
    %2882 = vmatpush2.msra.mxu0 0.0
    %2883 = vmatprep.mubr.f32.mxu0 0.0
    %2884 = vmatmul.mubr.f32.gmra.mxu0 0.0
    %v2885 = vpop.f32.mrf.mxu0
    %v2886 = vadd.f32 0.0, %v2885
    %v2887 = vpop.f32.mrf.mxu0
    %v2888 = vadd.f32 0.0, %v2887
    %2889 = vdwg.mxu0
    %v2894 = vcombine.low %v2815, %v2817
    %v2895 = vcombine.low %v2886, %v2888
    %v2897 = vunpack.c.l.s4 1966171168
    %v2898 = vunpack.c.0.s8 %v2897
    %v2899 = vlaneseq
    %v2900 = vshrl.u32 %v2899, 7
    %v2901 = vsub.s32 %v2898, %v2900
    %v2902 = vrot.slane %v2894, %v2901
    %v2904 = vunpack.c.l.s4 1966171168
    %v2905 = vunpack.c.0.s8 %v2904
    %v2906 = vlaneseq
    %v2907 = vshrl.u32 %v2906, 7
    %v2908 = vsub.s32 %v2905, %v2907
    %v2909 = vrot.slane %v2895, %v2908
    %v2910 = vcombine.low %v2902, %v2909
    %v2912 = vunpack.c.l.s4 1966171168
    %v2913 = vunpack.c.0.s8 %v2912
    %v2914 = vlaneseq
    %v2915 = vshrl.u32 %v2914, 7
    %v2916 = vsub.s32 %v2913, %v2915
    %v2917 = vrot.slane %v2910, %v2916
    %v2919 = vadd.f32 %v2683, %v2917
    %v2920 = vxor.u32 %v2919, 2147483648
    %v2921 = vmul.f32 %v2920, 1.442695
    %v2922 = vpow.pop %v2921
    %v2923 = vadd.f32 %v2922, 1.0
    %v2924 = vrcp.pop %v2923
    %v2925 = vmul.f32 1.0, %v2924
    %v2927 = vrot.slane %v2919, 1
    %v2929 = vxor.u32 %v2927, 2147483648
    %v2930 = vmul.f32 %v2929, 1.442695
    %v2931 = vpow.pop %v2930
    %v2932 = vadd.f32 %v2931, 1.0
    %v2933 = vrcp.pop %v2932
    %v2934 = vmul.f32 1.0, %v2933
    %v2935 = vrot.slane %v2919, 2
    %v2937 = vtanh.pop %v2935
    %v2938 = vrot.slane %v2919, 3
    %v2940 = vxor.u32 %v2938, 2147483648
    %v2941 = vmul.f32 %v2940, 1.442695
    %v2942 = vpow.pop %v2941
    %v2943 = vadd.f32 %v2942, 1.0
    %v2944 = vrcp.pop %v2943
    %v2945 = vmul.f32 1.0, %v2944
    %v2946 = vmul.f32 %v2934, 0.0
    %v2947 = vmul.f32 %v2925, %v2937
    %v2948 = vadd.f32 %v2946, %v2947
    %v2949 = vtanh.pop %v2948
    %v2950 = vmul.f32 %v2945, %v2949
    %v2951 = vld [vmem:[%s560] ss:$8 sm:$0xf]
    %2952 = vmatprep.subr.mxu0 %v2745
    %2953 = vmatpush1.msra.mxu0 %v2744
    %2954 = vmatprep.subr.mxu0 %v2741
    %2955 = vmatpush1.msra.mxu0 %v2740
    %2956 = vmatprep.subr.mxu0 %v2737
    %2957 = vmatpush1.msra.mxu0 %v2736
    %2958 = vmatprep.subr.mxu0 %v2733
    %2959 = vmatpush1.msra.mxu0 %v2732
    %2960 = vmatprep.subr.mxu0 %v2729
    %2961 = vmatpush1.msra.mxu0 %v2728
    %2962 = vmatprep.subr.mxu0 %v2725
    %2963 = vmatpush1.msra.mxu0 %v2724
    %2964 = vmatprep.subr.mxu0 %v2721
    %2965 = vmatpush1.msra.mxu0 %v2720
    %2966 = vmatprep.subr.mxu0 %v2717
    %2967 = vmatpush1.msra.mxu0 %v2716
    %2968 = vmatprep.subr.mxu0 %v2713
    %2969 = vmatpush1.msra.mxu0 %v2712
    %2970 = vmatprep.subr.mxu0 %v2709
    %2971 = vmatpush1.msra.mxu0 %v2708
    %2972 = vmatprep.subr.mxu0 %v2705
    %2973 = vmatpush1.msra.mxu0 %v2704
    %2974 = vmatprep.subr.mxu0 %v2701
    %2975 = vmatpush1.msra.mxu0 %v2700
    %2976 = vmatprep.subr.mxu0 %v2697
    %2977 = vmatpush1.msra.mxu0 %v2696
    %2978 = vmatprep.subr.mxu0 %v2693
    %2979 = vmatpush1.msra.mxu0 %v2692
    %2980 = vmatprep.subr.mxu0 %v2689
    %2981 = vmatpush1.msra.mxu0 %v2688
    %2982 = vmatprep.subr.mxu0 %v2685
    %2983 = vmatpush1.msra.mxu0 %v2684
    %2984 = vmatprep.subr.mxu0 0.0
    %2985 = vmatpush2.msra.mxu0 0.0
    %2986 = vmatprep.subr.mxu0 0.0
    %2987 = vmatpush2.msra.mxu0 0.0
    %2988 = vmatprep.subr.mxu0 0.0
    %2989 = vmatpush2.msra.mxu0 0.0
    %2990 = vmatprep.subr.mxu0 0.0
    %2991 = vmatpush2.msra.mxu0 0.0
    %2992 = vmatprep.subr.mxu0 0.0
    %2993 = vmatpush2.msra.mxu0 0.0
    %2994 = vmatprep.subr.mxu0 0.0
    %2995 = vmatpush2.msra.mxu0 0.0
    %2996 = vmatprep.subr.mxu0 0.0
    %2997 = vmatpush2.msra.mxu0 0.0
    %2998 = vmatprep.subr.mxu0 0.0
    %2999 = vmatpush2.msra.mxu0 0.0
    %3000 = vmatprep.subr.mxu0 0.0
    %3001 = vmatpush2.msra.mxu0 0.0
    %3002 = vmatprep.subr.mxu0 0.0
    %3003 = vmatpush2.msra.mxu0 0.0
    %3004 = vmatprep.subr.mxu0 0.0
    %3005 = vmatpush2.msra.mxu0 0.0
    %3006 = vmatprep.subr.mxu0 0.0
    %3007 = vmatpush2.msra.mxu0 0.0
    %3008 = vmatprep.subr.mxu0 0.0
    %3009 = vmatpush2.msra.mxu0 0.0
    %3010 = vmatprep.subr.mxu0 0.0
    %3011 = vmatpush2.msra.mxu0 0.0
    %3012 = vmatprep.subr.mxu0 0.0
    %3013 = vmatpush2.msra.mxu0 0.0
    %3014 = vmatprep.subr.mxu0 0.0
    %3015 = vmatpush2.msra.mxu0 0.0
    %3016 = vmatprep.mubr.f32.mxu0 0.0
    %3017 = vmatmul.mubr.f32.gmra.mxu0 %v2950
    %v3018 = vpop.f32.mrf.mxu0
    %v3019 = vadd.f32 0.0, %v3018
    %v3020 = vpop.f32.mrf.mxu0
    %v3021 = vadd.f32 0.0, %v3020
    %3022 = vdwg.mxu0
    %3023 = vmatprep.subr.mxu0 %v2747
    %3024 = vmatpush1.msra.mxu0 %v2746
    %3025 = vmatprep.subr.mxu0 %v2743
    %3026 = vmatpush1.msra.mxu0 %v2742
    %3027 = vmatprep.subr.mxu0 %v2739
    %3028 = vmatpush1.msra.mxu0 %v2738
    %3029 = vmatprep.subr.mxu0 %v2735
    %3030 = vmatpush1.msra.mxu0 %v2734
    %3031 = vmatprep.subr.mxu0 %v2731
    %3032 = vmatpush1.msra.mxu0 %v2730
    %3033 = vmatprep.subr.mxu0 %v2727
    %3034 = vmatpush1.msra.mxu0 %v2726
    %3035 = vmatprep.subr.mxu0 %v2723
    %3036 = vmatpush1.msra.mxu0 %v2722
    %3037 = vmatprep.subr.mxu0 %v2719
    %3038 = vmatpush1.msra.mxu0 %v2718
    %3039 = vmatprep.subr.mxu0 %v2715
    %3040 = vmatpush1.msra.mxu0 %v2714
    %3041 = vmatprep.subr.mxu0 %v2711
    %3042 = vmatpush1.msra.mxu0 %v2710
    %3043 = vmatprep.subr.mxu0 %v2707
    %3044 = vmatpush1.msra.mxu0 %v2706
    %3045 = vmatprep.subr.mxu0 %v2703
    %3046 = vmatpush1.msra.mxu0 %v2702
    %3047 = vmatprep.subr.mxu0 %v2699
    %3048 = vmatpush1.msra.mxu0 %v2698
    %3049 = vmatprep.subr.mxu0 %v2695
    %3050 = vmatpush1.msra.mxu0 %v2694
    %3051 = vmatprep.subr.mxu0 %v2691
    %3052 = vmatpush1.msra.mxu0 %v2690
    %3053 = vmatprep.subr.mxu0 %v2687
    %3054 = vmatpush1.msra.mxu0 %v2686
    %3055 = vmatprep.subr.mxu0 0.0
    %3056 = vmatpush2.msra.mxu0 0.0
    %3057 = vmatprep.subr.mxu0 0.0
    %3058 = vmatpush2.msra.mxu0 0.0
    %3059 = vmatprep.subr.mxu0 0.0
    %3060 = vmatpush2.msra.mxu0 0.0
    %3061 = vmatprep.subr.mxu0 0.0
    %3062 = vmatpush2.msra.mxu0 0.0
    %3063 = vmatprep.subr.mxu0 0.0
    %3064 = vmatpush2.msra.mxu0 0.0
    %3065 = vmatprep.subr.mxu0 0.0
    %3066 = vmatpush2.msra.mxu0 0.0
    %3067 = vmatprep.subr.mxu0 0.0
    %3068 = vmatpush2.msra.mxu0 0.0
    %3069 = vmatprep.subr.mxu0 0.0
    %3070 = vmatpush2.msra.mxu0 0.0
    %3071 = vmatprep.subr.mxu0 0.0
    %3072 = vmatpush2.msra.mxu0 0.0
    %3073 = vmatprep.subr.mxu0 0.0
    %3074 = vmatpush2.msra.mxu0 0.0
    %3075 = vmatprep.subr.mxu0 0.0
    %3076 = vmatpush2.msra.mxu0 0.0
    %3077 = vmatprep.subr.mxu0 0.0
    %3078 = vmatpush2.msra.mxu0 0.0
    %3079 = vmatprep.subr.mxu0 0.0
    %3080 = vmatpush2.msra.mxu0 0.0
    %3081 = vmatprep.subr.mxu0 0.0
    %3082 = vmatpush2.msra.mxu0 0.0
    %3083 = vmatprep.subr.mxu0 0.0
    %3084 = vmatpush2.msra.mxu0 0.0
    %3085 = vmatprep.subr.mxu0 0.0
    %3086 = vmatpush2.msra.mxu0 0.0
    %3087 = vmatprep.mubr.f32.mxu0 0.0
    %3088 = vmatmul.mubr.f32.gmra.mxu0 %v2950
    %v3089 = vpop.f32.mrf.mxu0
    %v3090 = vadd.f32 0.0, %v3089
    %v3091 = vpop.f32.mrf.mxu0
    %v3092 = vadd.f32 0.0, %v3091
    %3093 = vdwg.mxu0
    %v3098 = vcombine.low %v3019, %v3021
    %v3099 = vcombine.low %v3090, %v3092
    %v3101 = vunpack.c.l.s4 1966171168
    %v3102 = vunpack.c.0.s8 %v3101
    %v3103 = vlaneseq
    %v3104 = vshrl.u32 %v3103, 7
    %v3105 = vsub.s32 %v3102, %v3104
    %v3106 = vrot.slane %v3098, %v3105
    %v3108 = vunpack.c.l.s4 1966171168
    %v3109 = vunpack.c.0.s8 %v3108
    %v3110 = vlaneseq
    %v3111 = vshrl.u32 %v3110, 7
    %v3112 = vsub.s32 %v3109, %v3111
    %v3113 = vrot.slane %v3099, %v3112
    %v3114 = vcombine.low %v3106, %v3113
    %v3116 = vunpack.c.l.s4 1966171168
    %v3117 = vunpack.c.0.s8 %v3116
    %v3118 = vlaneseq
    %v3119 = vshrl.u32 %v3118, 7
    %v3120 = vsub.s32 %v3117, %v3119
    %v3121 = vrot.slane %v3114, %v3120
    %v3123 = vadd.f32 %v2951, %v3121
    %v3124 = vxor.u32 %v3123, 2147483648
    %v3125 = vmul.f32 %v3124, 1.442695
    %v3126 = vpow.pop %v3125
    %v3127 = vadd.f32 %v3126, 1.0
    %v3128 = vrcp.pop %v3127
    %v3129 = vmul.f32 1.0, %v3128
    %v3131 = vrot.slane %v3123, 1
    %v3133 = vxor.u32 %v3131, 2147483648
    %v3134 = vmul.f32 %v3133, 1.442695
    %v3135 = vpow.pop %v3134
    %v3136 = vadd.f32 %v3135, 1.0
    %v3137 = vrcp.pop %v3136
    %v3138 = vmul.f32 1.0, %v3137
    %v3139 = vrot.slane %v3123, 2
    %v3141 = vtanh.pop %v3139
    %v3142 = vrot.slane %v3123, 3
    %v3144 = vxor.u32 %v3142, 2147483648
    %v3145 = vmul.f32 %v3144, 1.442695
    %v3146 = vpow.pop %v3145
    %v3147 = vadd.f32 %v3146, 1.0
    %v3148 = vrcp.pop %v3147
    %v3149 = vmul.f32 1.0, %v3148
    %v3150 = vmul.f32 %v3138, %v2948
    %v3151 = vmul.f32 %v3129, %v3141
    %v3152 = vadd.f32 %v3150, %v3151
    %v3153 = vtanh.pop %v3152
    %v3154 = vmul.f32 %v3149, %v3153
    %v3155 = vld [vmem:[%s830] ss:$8 sm:$0xf]
    %3156 = vmatprep.subr.mxu0 %v2745
    %3157 = vmatpush1.msra.mxu0 %v2744
    %3158 = vmatprep.subr.mxu0 %v2741
    %3159 = vmatpush1.msra.mxu0 %v2740
    %3160 = vmatprep.subr.mxu0 %v2737
    %3161 = vmatpush1.msra.mxu0 %v2736
    %3162 = vmatprep.subr.mxu0 %v2733
    %3163 = vmatpush1.msra.mxu0 %v2732
    %3164 = vmatprep.subr.mxu0 %v2729
    %3165 = vmatpush1.msra.mxu0 %v2728
    %3166 = vmatprep.subr.mxu0 %v2725
    %3167 = vmatpush1.msra.mxu0 %v2724
    %3168 = vmatprep.subr.mxu0 %v2721
    %3169 = vmatpush1.msra.mxu0 %v2720
    %3170 = vmatprep.subr.mxu0 %v2717
    %3171 = vmatpush1.msra.mxu0 %v2716
    %3172 = vmatprep.subr.mxu0 %v2713
    %3173 = vmatpush1.msra.mxu0 %v2712
    %3174 = vmatprep.subr.mxu0 %v2709
    %3175 = vmatpush1.msra.mxu0 %v2708
    %3176 = vmatprep.subr.mxu0 %v2705
    %3177 = vmatpush1.msra.mxu0 %v2704
    %3178 = vmatprep.subr.mxu0 %v2701
    %3179 = vmatpush1.msra.mxu0 %v2700
    %3180 = vmatprep.subr.mxu0 %v2697
    %3181 = vmatpush1.msra.mxu0 %v2696
    %3182 = vmatprep.subr.mxu0 %v2693
    %3183 = vmatpush1.msra.mxu0 %v2692
    %3184 = vmatprep.subr.mxu0 %v2689
    %3185 = vmatpush1.msra.mxu0 %v2688
    %3186 = vmatprep.subr.mxu0 %v2685
    %3187 = vmatpush1.msra.mxu0 %v2684
    %3188 = vmatprep.subr.mxu0 0.0
    %3189 = vmatpush2.msra.mxu0 0.0
    %3190 = vmatprep.subr.mxu0 0.0
    %3191 = vmatpush2.msra.mxu0 0.0
    %3192 = vmatprep.subr.mxu0 0.0
    %3193 = vmatpush2.msra.mxu0 0.0
    %3194 = vmatprep.subr.mxu0 0.0
    %3195 = vmatpush2.msra.mxu0 0.0
    %3196 = vmatprep.subr.mxu0 0.0
    %3197 = vmatpush2.msra.mxu0 0.0
    %3198 = vmatprep.subr.mxu0 0.0
    %3199 = vmatpush2.msra.mxu0 0.0
    %3200 = vmatprep.subr.mxu0 0.0
    %3201 = vmatpush2.msra.mxu0 0.0
    %3202 = vmatprep.subr.mxu0 0.0
    %3203 = vmatpush2.msra.mxu0 0.0
    %3204 = vmatprep.subr.mxu0 0.0
    %3205 = vmatpush2.msra.mxu0 0.0
    %3206 = vmatprep.subr.mxu0 0.0
    %3207 = vmatpush2.msra.mxu0 0.0
    %3208 = vmatprep.subr.mxu0 0.0
    %3209 = vmatpush2.msra.mxu0 0.0
    %3210 = vmatprep.subr.mxu0 0.0
    %3211 = vmatpush2.msra.mxu0 0.0
    %3212 = vmatprep.subr.mxu0 0.0
    %3213 = vmatpush2.msra.mxu0 0.0
    %3214 = vmatprep.subr.mxu0 0.0
    %3215 = vmatpush2.msra.mxu0 0.0
    %3216 = vmatprep.subr.mxu0 0.0
    %3217 = vmatpush2.msra.mxu0 0.0
    %3218 = vmatprep.subr.mxu0 0.0
    %3219 = vmatpush2.msra.mxu0 0.0
    %3220 = vmatprep.mubr.f32.mxu0 0.0
    %3221 = vmatmul.mubr.f32.gmra.mxu0 %v3154
    %v3222 = vpop.f32.mrf.mxu0
    %v3223 = vadd.f32 0.0, %v3222
    %v3224 = vpop.f32.mrf.mxu0
    %v3225 = vadd.f32 0.0, %v3224
    %3226 = vdwg.mxu0
    %3227 = vmatprep.subr.mxu0 %v2747
    %3228 = vmatpush1.msra.mxu0 %v2746
    %3229 = vmatprep.subr.mxu0 %v2743
    %3230 = vmatpush1.msra.mxu0 %v2742
    %3231 = vmatprep.subr.mxu0 %v2739
    %3232 = vmatpush1.msra.mxu0 %v2738
    %3233 = vmatprep.subr.mxu0 %v2735
    %3234 = vmatpush1.msra.mxu0 %v2734
    %3235 = vmatprep.subr.mxu0 %v2731
    %3236 = vmatpush1.msra.mxu0 %v2730
    %3237 = vmatprep.subr.mxu0 %v2727
    %3238 = vmatpush1.msra.mxu0 %v2726
    %3239 = vmatprep.subr.mxu0 %v2723
    %3240 = vmatpush1.msra.mxu0 %v2722
    %3241 = vmatprep.subr.mxu0 %v2719
    %3242 = vmatpush1.msra.mxu0 %v2718
    %3243 = vmatprep.subr.mxu0 %v2715
    %3244 = vmatpush1.msra.mxu0 %v2714
    %3245 = vmatprep.subr.mxu0 %v2711
    %3246 = vmatpush1.msra.mxu0 %v2710
    %3247 = vmatprep.subr.mxu0 %v2707
    %3248 = vmatpush1.msra.mxu0 %v2706
    %3249 = vmatprep.subr.mxu0 %v2703
    %3250 = vmatpush1.msra.mxu0 %v2702
    %3251 = vmatprep.subr.mxu0 %v2699
    %3252 = vmatpush1.msra.mxu0 %v2698
    %3253 = vmatprep.subr.mxu0 %v2695
    %3254 = vmatpush1.msra.mxu0 %v2694
    %3255 = vmatprep.subr.mxu0 %v2691
    %3256 = vmatpush1.msra.mxu0 %v2690
    %3257 = vmatprep.subr.mxu0 %v2687
    %3258 = vmatpush1.msra.mxu0 %v2686
    %3259 = vmatprep.subr.mxu0 0.0
    %3260 = vmatpush2.msra.mxu0 0.0
    %3261 = vmatprep.subr.mxu0 0.0
    %3262 = vmatpush2.msra.mxu0 0.0
    %3263 = vmatprep.subr.mxu0 0.0
    %3264 = vmatpush2.msra.mxu0 0.0
    %3265 = vmatprep.subr.mxu0 0.0
    %3266 = vmatpush2.msra.mxu0 0.0
    %3267 = vmatprep.subr.mxu0 0.0
    %3268 = vmatpush2.msra.mxu0 0.0
    %3269 = vmatprep.subr.mxu0 0.0
    %3270 = vmatpush2.msra.mxu0 0.0
    %3271 = vmatprep.subr.mxu0 0.0
    %3272 = vmatpush2.msra.mxu0 0.0
    %3273 = vmatprep.subr.mxu0 0.0
    %3274 = vmatpush2.msra.mxu0 0.0
    %3275 = vmatprep.subr.mxu0 0.0
    %3276 = vmatpush2.msra.mxu0 0.0
    %3277 = vmatprep.subr.mxu0 0.0
    %3278 = vmatpush2.msra.mxu0 0.0
    %3279 = vmatprep.subr.mxu0 0.0
    %3280 = vmatpush2.msra.mxu0 0.0
    %3281 = vmatprep.subr.mxu0 0.0
    %3282 = vmatpush2.msra.mxu0 0.0
    %3283 = vmatprep.subr.mxu0 0.0
    %3284 = vmatpush2.msra.mxu0 0.0
    %3285 = vmatprep.subr.mxu0 0.0
    %3286 = vmatpush2.msra.mxu0 0.0
    %3287 = vmatprep.subr.mxu0 0.0
    %3288 = vmatpush2.msra.mxu0 0.0
    %3289 = vmatprep.subr.mxu0 0.0
    %3290 = vmatpush2.msra.mxu0 0.0
    %3291 = vmatprep.mubr.f32.mxu0 0.0
    %3292 = vmatmul.mubr.f32.gmra.mxu0 %v3154
    %v3293 = vpop.f32.mrf.mxu0
    %v3294 = vadd.f32 0.0, %v3293
    %v3295 = vpop.f32.mrf.mxu0
    %v3296 = vadd.f32 0.0, %v3295
    %3297 = vdwg.mxu0
    %v3302 = vcombine.low %v3223, %v3225
    %v3303 = vcombine.low %v3294, %v3296
    %v3305 = vunpack.c.l.s4 1966171168
    %v3306 = vunpack.c.0.s8 %v3305
    %v3307 = vlaneseq
    %v3308 = vshrl.u32 %v3307, 7
    %v3309 = vsub.s32 %v3306, %v3308
    %v3310 = vrot.slane %v3302, %v3309
    %v3312 = vunpack.c.l.s4 1966171168
    %v3313 = vunpack.c.0.s8 %v3312
    %v3314 = vlaneseq
    %v3315 = vshrl.u32 %v3314, 7
    %v3316 = vsub.s32 %v3313, %v3315
    %v3317 = vrot.slane %v3303, %v3316
    %v3318 = vcombine.low %v3310, %v3317
    %v3320 = vunpack.c.l.s4 1966171168
    %v3321 = vunpack.c.0.s8 %v3320
    %v3322 = vlaneseq
    %v3323 = vshrl.u32 %v3322, 7
    %v3324 = vsub.s32 %v3321, %v3323
    %v3325 = vrot.slane %v3318, %v3324
    %v3327 = vadd.f32 %v3155, %v3325
    %v3328 = vxor.u32 %v3327, 2147483648
    %v3329 = vmul.f32 %v3328, 1.442695
    %v3330 = vpow.pop %v3329
    %v3331 = vadd.f32 %v3330, 1.0
    %v3332 = vrcp.pop %v3331
    %v3333 = vmul.f32 1.0, %v3332
    %v3335 = vrot.slane %v3327, 1
    %v3337 = vxor.u32 %v3335, 2147483648
    %v3338 = vmul.f32 %v3337, 1.442695
    %v3339 = vpow.pop %v3338
    %v3340 = vadd.f32 %v3339, 1.0
    %v3341 = vrcp.pop %v3340
    %v3342 = vmul.f32 1.0, %v3341
    %v3343 = vrot.slane %v3327, 2
    %v3345 = vtanh.pop %v3343
    %v3346 = vrot.slane %v3327, 3
    %v3348 = vxor.u32 %v3346, 2147483648
    %v3349 = vmul.f32 %v3348, 1.442695
    %v3350 = vpow.pop %v3349
    %v3351 = vadd.f32 %v3350, 1.0
    %v3352 = vrcp.pop %v3351
    %v3353 = vmul.f32 1.0, %v3352
    %v3354 = vmul.f32 %v3342, %v3152
    %v3355 = vmul.f32 %v3333, %v3345
    %v3356 = vadd.f32 %v3354, %v3355
    %v3357 = vtanh.pop %v3356
    %v3358 = vmul.f32 %v3353, %v3357
    %v3359 = vld [vmem:[%s1100] ss:$8 sm:$0xf]
    %3360 = vmatprep.subr.mxu0 %v2745
    %3361 = vmatpush1.msra.mxu0 %v2744
    %3362 = vmatprep.subr.mxu0 %v2741
    %3363 = vmatpush1.msra.mxu0 %v2740
    %3364 = vmatprep.subr.mxu0 %v2737
    %3365 = vmatpush1.msra.mxu0 %v2736
    %3366 = vmatprep.subr.mxu0 %v2733
    %3367 = vmatpush1.msra.mxu0 %v2732
    %3368 = vmatprep.subr.mxu0 %v2729
    %3369 = vmatpush1.msra.mxu0 %v2728
    %3370 = vmatprep.subr.mxu0 %v2725
    %3371 = vmatpush1.msra.mxu0 %v2724
    %3372 = vmatprep.subr.mxu0 %v2721
    %3373 = vmatpush1.msra.mxu0 %v2720
    %3374 = vmatprep.subr.mxu0 %v2717
    %3375 = vmatpush1.msra.mxu0 %v2716
    %3376 = vmatprep.subr.mxu0 %v2713
    %3377 = vmatpush1.msra.mxu0 %v2712
    %3378 = vmatprep.subr.mxu0 %v2709
    %3379 = vmatpush1.msra.mxu0 %v2708
    %3380 = vmatprep.subr.mxu0 %v2705
    %3381 = vmatpush1.msra.mxu0 %v2704
    %3382 = vmatprep.subr.mxu0 %v2701
    %3383 = vmatpush1.msra.mxu0 %v2700
    %3384 = vmatprep.subr.mxu0 %v2697
    %3385 = vmatpush1.msra.mxu0 %v2696
    %3386 = vmatprep.subr.mxu0 %v2693
    %3387 = vmatpush1.msra.mxu0 %v2692
    %3388 = vmatprep.subr.mxu0 %v2689
    %3389 = vmatpush1.msra.mxu0 %v2688
    %3390 = vmatprep.subr.mxu0 %v2685
    %3391 = vmatpush1.msra.mxu0 %v2684
    %3392 = vmatprep.subr.mxu0 0.0
    %3393 = vmatpush2.msra.mxu0 0.0
    %3394 = vmatprep.subr.mxu0 0.0
    %3395 = vmatpush2.msra.mxu0 0.0
    %3396 = vmatprep.subr.mxu0 0.0
    %3397 = vmatpush2.msra.mxu0 0.0
    %3398 = vmatprep.subr.mxu0 0.0
    %3399 = vmatpush2.msra.mxu0 0.0
    %3400 = vmatprep.subr.mxu0 0.0
    %3401 = vmatpush2.msra.mxu0 0.0
    %3402 = vmatprep.subr.mxu0 0.0
    %3403 = vmatpush2.msra.mxu0 0.0
    %3404 = vmatprep.subr.mxu0 0.0
    %3405 = vmatpush2.msra.mxu0 0.0
    %3406 = vmatprep.subr.mxu0 0.0
    %3407 = vmatpush2.msra.mxu0 0.0
    %3408 = vmatprep.subr.mxu0 0.0
    %3409 = vmatpush2.msra.mxu0 0.0
    %3410 = vmatprep.subr.mxu0 0.0
    %3411 = vmatpush2.msra.mxu0 0.0
    %3412 = vmatprep.subr.mxu0 0.0
    %3413 = vmatpush2.msra.mxu0 0.0
    %3414 = vmatprep.subr.mxu0 0.0
    %3415 = vmatpush2.msra.mxu0 0.0
    %3416 = vmatprep.subr.mxu0 0.0
    %3417 = vmatpush2.msra.mxu0 0.0
    %3418 = vmatprep.subr.mxu0 0.0
    %3419 = vmatpush2.msra.mxu0 0.0
    %3420 = vmatprep.subr.mxu0 0.0
    %3421 = vmatpush2.msra.mxu0 0.0
    %3422 = vmatprep.subr.mxu0 0.0
    %3423 = vmatpush2.msra.mxu0 0.0
    %3424 = vmatprep.mubr.f32.mxu0 0.0
    %3425 = vmatmul.mubr.f32.gmra.mxu0 %v3358
    %v3426 = vpop.f32.mrf.mxu0
    %v3427 = vadd.f32 0.0, %v3426
    %v3428 = vpop.f32.mrf.mxu0
    %v3429 = vadd.f32 0.0, %v3428
    %3430 = vdwg.mxu0
    %3431 = vmatprep.subr.mxu0 %v2747
    %3432 = vmatpush1.msra.mxu0 %v2746
    %3433 = vmatprep.subr.mxu0 %v2743
    %3434 = vmatpush1.msra.mxu0 %v2742
    %3435 = vmatprep.subr.mxu0 %v2739
    %3436 = vmatpush1.msra.mxu0 %v2738
    %3437 = vmatprep.subr.mxu0 %v2735
    %3438 = vmatpush1.msra.mxu0 %v2734
    %3439 = vmatprep.subr.mxu0 %v2731
    %3440 = vmatpush1.msra.mxu0 %v2730
    %3441 = vmatprep.subr.mxu0 %v2727
    %3442 = vmatpush1.msra.mxu0 %v2726
    %3443 = vmatprep.subr.mxu0 %v2723
    %3444 = vmatpush1.msra.mxu0 %v2722
    %3445 = vmatprep.subr.mxu0 %v2719
    %3446 = vmatpush1.msra.mxu0 %v2718
    %3447 = vmatprep.subr.mxu0 %v2715
    %3448 = vmatpush1.msra.mxu0 %v2714
    %3449 = vmatprep.subr.mxu0 %v2711
    %3450 = vmatpush1.msra.mxu0 %v2710
    %3451 = vmatprep.subr.mxu0 %v2707
    %3452 = vmatpush1.msra.mxu0 %v2706
    %3453 = vmatprep.subr.mxu0 %v2703
    %3454 = vmatpush1.msra.mxu0 %v2702
    %3455 = vmatprep.subr.mxu0 %v2699
    %3456 = vmatpush1.msra.mxu0 %v2698
    %3457 = vmatprep.subr.mxu0 %v2695
    %3458 = vmatpush1.msra.mxu0 %v2694
    %3459 = vmatprep.subr.mxu0 %v2691
    %3460 = vmatpush1.msra.mxu0 %v2690
    %3461 = vmatprep.subr.mxu0 %v2687
    %3462 = vmatpush1.msra.mxu0 %v2686
    %3463 = vmatprep.subr.mxu0 0.0
    %3464 = vmatpush2.msra.mxu0 0.0
    %3465 = vmatprep.subr.mxu0 0.0
    %3466 = vmatpush2.msra.mxu0 0.0
    %3467 = vmatprep.subr.mxu0 0.0
    %3468 = vmatpush2.msra.mxu0 0.0
    %3469 = vmatprep.subr.mxu0 0.0
    %3470 = vmatpush2.msra.mxu0 0.0
    %3471 = vmatprep.subr.mxu0 0.0
    %3472 = vmatpush2.msra.mxu0 0.0
    %3473 = vmatprep.subr.mxu0 0.0
    %3474 = vmatpush2.msra.mxu0 0.0
    %3475 = vmatprep.subr.mxu0 0.0
    %3476 = vmatpush2.msra.mxu0 0.0
    %3477 = vmatprep.subr.mxu0 0.0
    %3478 = vmatpush2.msra.mxu0 0.0
    %3479 = vmatprep.subr.mxu0 0.0
    %3480 = vmatpush2.msra.mxu0 0.0
    %3481 = vmatprep.subr.mxu0 0.0
    %3482 = vmatpush2.msra.mxu0 0.0
    %3483 = vmatprep.subr.mxu0 0.0
    %3484 = vmatpush2.msra.mxu0 0.0
    %3485 = vmatprep.subr.mxu0 0.0
    %3486 = vmatpush2.msra.mxu0 0.0
    %3487 = vmatprep.subr.mxu0 0.0
    %3488 = vmatpush2.msra.mxu0 0.0
    %3489 = vmatprep.subr.mxu0 0.0
    %3490 = vmatpush2.msra.mxu0 0.0
    %3491 = vmatprep.subr.mxu0 0.0
    %3492 = vmatpush2.msra.mxu0 0.0
    %3493 = vmatprep.subr.mxu0 0.0
    %3494 = vmatpush2.msra.mxu0 0.0
    %3495 = vmatprep.mubr.f32.mxu0 0.0
    %3496 = vmatmul.mubr.f32.gmra.mxu0 %v3358
    %v3497 = vpop.f32.mrf.mxu0
    %v3498 = vadd.f32 0.0, %v3497
    %v3499 = vpop.f32.mrf.mxu0
    %v3500 = vadd.f32 0.0, %v3499
    %3501 = vdwg.mxu0
    %v3506 = vcombine.low %v3427, %v3429
    %v3507 = vcombine.low %v3498, %v3500
    %v3509 = vunpack.c.l.s4 1966171168
    %v3510 = vunpack.c.0.s8 %v3509
    %v3511 = vlaneseq
    %v3512 = vshrl.u32 %v3511, 7
    %v3513 = vsub.s32 %v3510, %v3512
    %v3514 = vrot.slane %v3506, %v3513
    %v3516 = vunpack.c.l.s4 1966171168
    %v3517 = vunpack.c.0.s8 %v3516
    %v3518 = vlaneseq
    %v3519 = vshrl.u32 %v3518, 7
    %v3520 = vsub.s32 %v3517, %v3519
    %v3521 = vrot.slane %v3507, %v3520
    %v3522 = vcombine.low %v3514, %v3521
    %v3524 = vunpack.c.l.s4 1966171168
    %v3525 = vunpack.c.0.s8 %v3524
    %v3526 = vlaneseq
    %v3527 = vshrl.u32 %v3526, 7
    %v3528 = vsub.s32 %v3525, %v3527
    %v3529 = vrot.slane %v3522, %v3528
    %v3531 = vadd.f32 %v3359, %v3529
    %v3532 = vxor.u32 %v3531, 2147483648
    %v3533 = vmul.f32 %v3532, 1.442695
    %v3534 = vpow.pop %v3533
    %v3535 = vadd.f32 %v3534, 1.0
    %v3536 = vrcp.pop %v3535
    %v3537 = vmul.f32 1.0, %v3536
    %v3539 = vrot.slane %v3531, 1
    %v3541 = vxor.u32 %v3539, 2147483648
    %v3542 = vmul.f32 %v3541, 1.442695
    %v3543 = vpow.pop %v3542
    %v3544 = vadd.f32 %v3543, 1.0
    %v3545 = vrcp.pop %v3544
    %v3546 = vmul.f32 1.0, %v3545
    %v3547 = vrot.slane %v3531, 2
    %v3549 = vtanh.pop %v3547
    %v3550 = vrot.slane %v3531, 3
    %v3552 = vxor.u32 %v3550, 2147483648
    %v3553 = vmul.f32 %v3552, 1.442695
    %v3554 = vpow.pop %v3553
    %v3555 = vadd.f32 %v3554, 1.0
    %v3556 = vrcp.pop %v3555
    %v3557 = vmul.f32 1.0, %v3556
    %v3558 = vmul.f32 %v3546, %v3356
    %v3559 = vmul.f32 %v3537, %v3549
    %v3560 = vadd.f32 %v3558, %v3559
    %v3561 = vtanh.pop %v3560
    %v3562 = vmul.f32 %v3557, %v3561
    %v3563 = vld [vmem:[%s1370] ss:$8 sm:$0xf]
    %3564 = vmatprep.subr.mxu0 %v2745
    %3565 = vmatpush1.msra.mxu0 %v2744
    %3566 = vmatprep.subr.mxu0 %v2741
    %3567 = vmatpush1.msra.mxu0 %v2740
    %3568 = vmatprep.subr.mxu0 %v2737
    %3569 = vmatpush1.msra.mxu0 %v2736
    %3570 = vmatprep.subr.mxu0 %v2733
    %3571 = vmatpush1.msra.mxu0 %v2732
    %3572 = vmatprep.subr.mxu0 %v2729
    %3573 = vmatpush1.msra.mxu0 %v2728
    %3574 = vmatprep.subr.mxu0 %v2725
    %3575 = vmatpush1.msra.mxu0 %v2724
    %3576 = vmatprep.subr.mxu0 %v2721
    %3577 = vmatpush1.msra.mxu0 %v2720
    %3578 = vmatprep.subr.mxu0 %v2717
    %3579 = vmatpush1.msra.mxu0 %v2716
    %3580 = vmatprep.subr.mxu0 %v2713
    %3581 = vmatpush1.msra.mxu0 %v2712
    %3582 = vmatprep.subr.mxu0 %v2709
    %3583 = vmatpush1.msra.mxu0 %v2708
    %3584 = vmatprep.subr.mxu0 %v2705
    %3585 = vmatpush1.msra.mxu0 %v2704
    %3586 = vmatprep.subr.mxu0 %v2701
    %3587 = vmatpush1.msra.mxu0 %v2700
    %3588 = vmatprep.subr.mxu0 %v2697
    %3589 = vmatpush1.msra.mxu0 %v2696
    %3590 = vmatprep.subr.mxu0 %v2693
    %3591 = vmatpush1.msra.mxu0 %v2692
    %3592 = vmatprep.subr.mxu0 %v2689
    %3593 = vmatpush1.msra.mxu0 %v2688
    %3594 = vmatprep.subr.mxu0 %v2685
    %3595 = vmatpush1.msra.mxu0 %v2684
    %3596 = vmatprep.subr.mxu0 0.0
    %3597 = vmatpush2.msra.mxu0 0.0
    %3598 = vmatprep.subr.mxu0 0.0
    %3599 = vmatpush2.msra.mxu0 0.0
    %3600 = vmatprep.subr.mxu0 0.0
    %3601 = vmatpush2.msra.mxu0 0.0
    %3602 = vmatprep.subr.mxu0 0.0
    %3603 = vmatpush2.msra.mxu0 0.0
    %3604 = vmatprep.subr.mxu0 0.0
    %3605 = vmatpush2.msra.mxu0 0.0
    %3606 = vmatprep.subr.mxu0 0.0
    %3607 = vmatpush2.msra.mxu0 0.0
    %3608 = vmatprep.subr.mxu0 0.0
    %3609 = vmatpush2.msra.mxu0 0.0
    %3610 = vmatprep.subr.mxu0 0.0
    %3611 = vmatpush2.msra.mxu0 0.0
    %3612 = vmatprep.subr.mxu0 0.0
    %3613 = vmatpush2.msra.mxu0 0.0
    %3614 = vmatprep.subr.mxu0 0.0
    %3615 = vmatpush2.msra.mxu0 0.0
    %3616 = vmatprep.subr.mxu0 0.0
    %3617 = vmatpush2.msra.mxu0 0.0
    %3618 = vmatprep.subr.mxu0 0.0
    %3619 = vmatpush2.msra.mxu0 0.0
    %3620 = vmatprep.subr.mxu0 0.0
    %3621 = vmatpush2.msra.mxu0 0.0
    %3622 = vmatprep.subr.mxu0 0.0
    %3623 = vmatpush2.msra.mxu0 0.0
    %3624 = vmatprep.subr.mxu0 0.0
    %3625 = vmatpush2.msra.mxu0 0.0
    %3626 = vmatprep.subr.mxu0 0.0
    %3627 = vmatpush2.msra.mxu0 0.0
    %3628 = vmatprep.mubr.f32.mxu0 0.0
    %3629 = vmatmul.mubr.f32.gmra.mxu0 %v3562
    %v3630 = vpop.f32.mrf.mxu0
    %v3631 = vadd.f32 0.0, %v3630
    %v3632 = vpop.f32.mrf.mxu0
    %v3633 = vadd.f32 0.0, %v3632
    %3634 = vdwg.mxu0
    %3635 = vmatprep.subr.mxu0 %v2747
    %3636 = vmatpush1.msra.mxu0 %v2746
    %3637 = vmatprep.subr.mxu0 %v2743
    %3638 = vmatpush1.msra.mxu0 %v2742
    %3639 = vmatprep.subr.mxu0 %v2739
    %3640 = vmatpush1.msra.mxu0 %v2738
    %3641 = vmatprep.subr.mxu0 %v2735
    %3642 = vmatpush1.msra.mxu0 %v2734
    %3643 = vmatprep.subr.mxu0 %v2731
    %3644 = vmatpush1.msra.mxu0 %v2730
    %3645 = vmatprep.subr.mxu0 %v2727
    %3646 = vmatpush1.msra.mxu0 %v2726
    %3647 = vmatprep.subr.mxu0 %v2723
    %3648 = vmatpush1.msra.mxu0 %v2722
    %3649 = vmatprep.subr.mxu0 %v2719
    %3650 = vmatpush1.msra.mxu0 %v2718
    %3651 = vmatprep.subr.mxu0 %v2715
    %3652 = vmatpush1.msra.mxu0 %v2714
    %3653 = vmatprep.subr.mxu0 %v2711
    %3654 = vmatpush1.msra.mxu0 %v2710
    %3655 = vmatprep.subr.mxu0 %v2707
    %3656 = vmatpush1.msra.mxu0 %v2706
    %3657 = vmatprep.subr.mxu0 %v2703
    %3658 = vmatpush1.msra.mxu0 %v2702
    %3659 = vmatprep.subr.mxu0 %v2699
    %3660 = vmatpush1.msra.mxu0 %v2698
    %3661 = vmatprep.subr.mxu0 %v2695
    %3662 = vmatpush1.msra.mxu0 %v2694
    %3663 = vmatprep.subr.mxu0 %v2691
    %3664 = vmatpush1.msra.mxu0 %v2690
    %3665 = vmatprep.subr.mxu0 %v2687
    %3666 = vmatpush1.msra.mxu0 %v2686
    %3667 = vmatprep.subr.mxu0 0.0
    %3668 = vmatpush2.msra.mxu0 0.0
    %3669 = vmatprep.subr.mxu0 0.0
    %3670 = vmatpush2.msra.mxu0 0.0
    %3671 = vmatprep.subr.mxu0 0.0
    %3672 = vmatpush2.msra.mxu0 0.0
    %3673 = vmatprep.subr.mxu0 0.0
    %3674 = vmatpush2.msra.mxu0 0.0
    %3675 = vmatprep.subr.mxu0 0.0
    %3676 = vmatpush2.msra.mxu0 0.0
    %3677 = vmatprep.subr.mxu0 0.0
    %3678 = vmatpush2.msra.mxu0 0.0
    %3679 = vmatprep.subr.mxu0 0.0
    %3680 = vmatpush2.msra.mxu0 0.0
    %3681 = vmatprep.subr.mxu0 0.0
    %3682 = vmatpush2.msra.mxu0 0.0
    %3683 = vmatprep.subr.mxu0 0.0
    %3684 = vmatpush2.msra.mxu0 0.0
    %3685 = vmatprep.subr.mxu0 0.0
    %3686 = vmatpush2.msra.mxu0 0.0
    %3687 = vmatprep.subr.mxu0 0.0
    %3688 = vmatpush2.msra.mxu0 0.0
    %3689 = vmatprep.subr.mxu0 0.0
    %3690 = vmatpush2.msra.mxu0 0.0
    %3691 = vmatprep.subr.mxu0 0.0
    %3692 = vmatpush2.msra.mxu0 0.0
    %3693 = vmatprep.subr.mxu0 0.0
    %3694 = vmatpush2.msra.mxu0 0.0
    %3695 = vmatprep.subr.mxu0 0.0
    %3696 = vmatpush2.msra.mxu0 0.0
    %3697 = vmatprep.subr.mxu0 0.0
    %3698 = vmatpush2.msra.mxu0 0.0
    %3699 = vmatprep.mubr.f32.mxu0 0.0
    %3700 = vmatmul.mubr.f32.gmra.mxu0 %v3562
    %v3701 = vpop.f32.mrf.mxu0
    %v3702 = vadd.f32 0.0, %v3701
    %v3703 = vpop.f32.mrf.mxu0
    %v3704 = vadd.f32 0.0, %v3703
    %3705 = vdwg.mxu0
    %v3710 = vcombine.low %v3631, %v3633
    %v3711 = vcombine.low %v3702, %v3704
    %v3713 = vunpack.c.l.s4 1966171168
    %v3714 = vunpack.c.0.s8 %v3713
    %v3715 = vlaneseq
    %v3716 = vshrl.u32 %v3715, 7
    %v3717 = vsub.s32 %v3714, %v3716
    %v3718 = vrot.slane %v3710, %v3717
    %v3720 = vunpack.c.l.s4 1966171168
    %v3721 = vunpack.c.0.s8 %v3720
    %v3722 = vlaneseq
    %v3723 = vshrl.u32 %v3722, 7
    %v3724 = vsub.s32 %v3721, %v3723
    %v3725 = vrot.slane %v3711, %v3724
    %v3726 = vcombine.low %v3718, %v3725
    %v3728 = vunpack.c.l.s4 1966171168
    %v3729 = vunpack.c.0.s8 %v3728
    %v3730 = vlaneseq
    %v3731 = vshrl.u32 %v3730, 7
    %v3732 = vsub.s32 %v3729, %v3731
    %v3733 = vrot.slane %v3726, %v3732
    %v3735 = vadd.f32 %v3563, %v3733
    %v3736 = vxor.u32 %v3735, 2147483648
    %v3737 = vmul.f32 %v3736, 1.442695
    %v3738 = vpow.pop %v3737
    %v3739 = vadd.f32 %v3738, 1.0
    %v3740 = vrcp.pop %v3739
    %v3741 = vmul.f32 1.0, %v3740
    %v3743 = vrot.slane %v3735, 1
    %v3745 = vxor.u32 %v3743, 2147483648
    %v3746 = vmul.f32 %v3745, 1.442695
    %v3747 = vpow.pop %v3746
    %v3748 = vadd.f32 %v3747, 1.0
    %v3749 = vrcp.pop %v3748
    %v3750 = vmul.f32 1.0, %v3749
    %v3751 = vrot.slane %v3735, 2
    %v3753 = vtanh.pop %v3751
    %v3754 = vrot.slane %v3735, 3
    %v3756 = vxor.u32 %v3754, 2147483648
    %v3757 = vmul.f32 %v3756, 1.442695
    %v3758 = vpow.pop %v3757
    %v3759 = vadd.f32 %v3758, 1.0
    %v3760 = vrcp.pop %v3759
    %v3761 = vmul.f32 1.0, %v3760
    %v3762 = vmul.f32 %v3750, %v3560
    %v3763 = vmul.f32 %v3741, %v3753
    %v3764 = vadd.f32 %v3762, %v3763
    %v3765 = vtanh.pop %v3764
    %v3766 = vmul.f32 %v3761, %v3765
    %v3767 = vld [vmem:[%s1640] ss:$8 sm:$0xf]
    %3768 = vmatprep.subr.mxu0 %v2745
    %3769 = vmatpush1.msra.mxu0 %v2744
    %3770 = vmatprep.subr.mxu0 %v2741
    %3771 = vmatpush1.msra.mxu0 %v2740
    %3772 = vmatprep.subr.mxu0 %v2737
    %3773 = vmatpush1.msra.mxu0 %v2736
    %3774 = vmatprep.subr.mxu0 %v2733
    %3775 = vmatpush1.msra.mxu0 %v2732
    %3776 = vmatprep.subr.mxu0 %v2729
    %3777 = vmatpush1.msra.mxu0 %v2728
    %3778 = vmatprep.subr.mxu0 %v2725
    %3779 = vmatpush1.msra.mxu0 %v2724
    %3780 = vmatprep.subr.mxu0 %v2721
    %3781 = vmatpush1.msra.mxu0 %v2720
    %3782 = vmatprep.subr.mxu0 %v2717
    %3783 = vmatpush1.msra.mxu0 %v2716
    %3784 = vmatprep.subr.mxu0 %v2713
    %3785 = vmatpush1.msra.mxu0 %v2712
    %3786 = vmatprep.subr.mxu0 %v2709
    %3787 = vmatpush1.msra.mxu0 %v2708
    %3788 = vmatprep.subr.mxu0 %v2705
    %3789 = vmatpush1.msra.mxu0 %v2704
    %3790 = vmatprep.subr.mxu0 %v2701
    %3791 = vmatpush1.msra.mxu0 %v2700
    %3792 = vmatprep.subr.mxu0 %v2697
    %3793 = vmatpush1.msra.mxu0 %v2696
    %3794 = vmatprep.subr.mxu0 %v2693
    %3795 = vmatpush1.msra.mxu0 %v2692
    %3796 = vmatprep.subr.mxu0 %v2689
    %3797 = vmatpush1.msra.mxu0 %v2688
    %3798 = vmatprep.subr.mxu0 %v2685
    %3799 = vmatpush1.msra.mxu0 %v2684
    %3800 = vmatprep.subr.mxu0 0.0
    %3801 = vmatpush2.msra.mxu0 0.0
    %3802 = vmatprep.subr.mxu0 0.0
    %3803 = vmatpush2.msra.mxu0 0.0
    %3804 = vmatprep.subr.mxu0 0.0
    %3805 = vmatpush2.msra.mxu0 0.0
    %3806 = vmatprep.subr.mxu0 0.0
    %3807 = vmatpush2.msra.mxu0 0.0
    %3808 = vmatprep.subr.mxu0 0.0
    %3809 = vmatpush2.msra.mxu0 0.0
    %3810 = vmatprep.subr.mxu0 0.0
    %3811 = vmatpush2.msra.mxu0 0.0
    %3812 = vmatprep.subr.mxu0 0.0
    %3813 = vmatpush2.msra.mxu0 0.0
    %3814 = vmatprep.subr.mxu0 0.0
    %3815 = vmatpush2.msra.mxu0 0.0
    %3816 = vmatprep.subr.mxu0 0.0
    %3817 = vmatpush2.msra.mxu0 0.0
    %3818 = vmatprep.subr.mxu0 0.0
    %3819 = vmatpush2.msra.mxu0 0.0
    %3820 = vmatprep.subr.mxu0 0.0
    %3821 = vmatpush2.msra.mxu0 0.0
    %3822 = vmatprep.subr.mxu0 0.0
    %3823 = vmatpush2.msra.mxu0 0.0
    %3824 = vmatprep.subr.mxu0 0.0
    %3825 = vmatpush2.msra.mxu0 0.0
    %3826 = vmatprep.subr.mxu0 0.0
    %3827 = vmatpush2.msra.mxu0 0.0
    %3828 = vmatprep.subr.mxu0 0.0
    %3829 = vmatpush2.msra.mxu0 0.0
    %3830 = vmatprep.subr.mxu0 0.0
    %3831 = vmatpush2.msra.mxu0 0.0
    %3832 = vmatprep.mubr.f32.mxu0 0.0
    %3833 = vmatmul.mubr.f32.gmra.mxu0 %v3766
    %v3834 = vpop.f32.mrf.mxu0
    %v3835 = vadd.f32 0.0, %v3834
    %v3836 = vpop.f32.mrf.mxu0
    %v3837 = vadd.f32 0.0, %v3836
    %3838 = vdwg.mxu0
    %3839 = vmatprep.subr.mxu0 %v2747
    %3840 = vmatpush1.msra.mxu0 %v2746
    %3841 = vmatprep.subr.mxu0 %v2743
    %3842 = vmatpush1.msra.mxu0 %v2742
    %3843 = vmatprep.subr.mxu0 %v2739
    %3844 = vmatpush1.msra.mxu0 %v2738
    %3845 = vmatprep.subr.mxu0 %v2735
    %3846 = vmatpush1.msra.mxu0 %v2734
    %3847 = vmatprep.subr.mxu0 %v2731
    %3848 = vmatpush1.msra.mxu0 %v2730
    %3849 = vmatprep.subr.mxu0 %v2727
    %3850 = vmatpush1.msra.mxu0 %v2726
    %3851 = vmatprep.subr.mxu0 %v2723
    %3852 = vmatpush1.msra.mxu0 %v2722
    %3853 = vmatprep.subr.mxu0 %v2719
    %3854 = vmatpush1.msra.mxu0 %v2718
    %3855 = vmatprep.subr.mxu0 %v2715
    %3856 = vmatpush1.msra.mxu0 %v2714
    %3857 = vmatprep.subr.mxu0 %v2711
    %3858 = vmatpush1.msra.mxu0 %v2710
    %3859 = vmatprep.subr.mxu0 %v2707
    %3860 = vmatpush1.msra.mxu0 %v2706
    %3861 = vmatprep.subr.mxu0 %v2703
    %3862 = vmatpush1.msra.mxu0 %v2702
    %3863 = vmatprep.subr.mxu0 %v2699
    %3864 = vmatpush1.msra.mxu0 %v2698
    %3865 = vmatprep.subr.mxu0 %v2695
    %3866 = vmatpush1.msra.mxu0 %v2694
    %3867 = vmatprep.subr.mxu0 %v2691
    %3868 = vmatpush1.msra.mxu0 %v2690
    %3869 = vmatprep.subr.mxu0 %v2687
    %3870 = vmatpush1.msra.mxu0 %v2686
    %3871 = vmatprep.subr.mxu0 0.0
    %3872 = vmatpush2.msra.mxu0 0.0
    %3873 = vmatprep.subr.mxu0 0.0
    %3874 = vmatpush2.msra.mxu0 0.0
    %3875 = vmatprep.subr.mxu0 0.0
    %3876 = vmatpush2.msra.mxu0 0.0
    %3877 = vmatprep.subr.mxu0 0.0
    %3878 = vmatpush2.msra.mxu0 0.0
    %3879 = vmatprep.subr.mxu0 0.0
    %3880 = vmatpush2.msra.mxu0 0.0
    %3881 = vmatprep.subr.mxu0 0.0
    %3882 = vmatpush2.msra.mxu0 0.0
    %3883 = vmatprep.subr.mxu0 0.0
    %3884 = vmatpush2.msra.mxu0 0.0
    %3885 = vmatprep.subr.mxu0 0.0
    %3886 = vmatpush2.msra.mxu0 0.0
    %3887 = vmatprep.subr.mxu0 0.0
    %3888 = vmatpush2.msra.mxu0 0.0
    %3889 = vmatprep.subr.mxu0 0.0
    %3890 = vmatpush2.msra.mxu0 0.0
    %3891 = vmatprep.subr.mxu0 0.0
    %3892 = vmatpush2.msra.mxu0 0.0
    %3893 = vmatprep.subr.mxu0 0.0
    %3894 = vmatpush2.msra.mxu0 0.0
    %3895 = vmatprep.subr.mxu0 0.0
    %3896 = vmatpush2.msra.mxu0 0.0
    %3897 = vmatprep.subr.mxu0 0.0
    %3898 = vmatpush2.msra.mxu0 0.0
    %3899 = vmatprep.subr.mxu0 0.0
    %3900 = vmatpush2.msra.mxu0 0.0
    %3901 = vmatprep.subr.mxu0 0.0
    %3902 = vmatpush2.msra.mxu0 0.0
    %3903 = vmatprep.mubr.f32.mxu0 0.0
    %3904 = vmatmul.mubr.f32.gmra.mxu0 %v3766
    %v3905 = vpop.f32.mrf.mxu0
    %v3906 = vadd.f32 0.0, %v3905
    %v3907 = vpop.f32.mrf.mxu0
    %v3908 = vadd.f32 0.0, %v3907
    %3909 = vdwg.mxu0
    %v3914 = vcombine.low %v3835, %v3837
    %v3915 = vcombine.low %v3906, %v3908
    %v3917 = vunpack.c.l.s4 1966171168
    %v3918 = vunpack.c.0.s8 %v3917
    %v3919 = vlaneseq
    %v3920 = vshrl.u32 %v3919, 7
    %v3921 = vsub.s32 %v3918, %v3920
    %v3922 = vrot.slane %v3914, %v3921
    %v3924 = vunpack.c.l.s4 1966171168
    %v3925 = vunpack.c.0.s8 %v3924
    %v3926 = vlaneseq
    %v3927 = vshrl.u32 %v3926, 7
    %v3928 = vsub.s32 %v3925, %v3927
    %v3929 = vrot.slane %v3915, %v3928
    %v3930 = vcombine.low %v3922, %v3929
    %v3932 = vunpack.c.l.s4 1966171168
    %v3933 = vunpack.c.0.s8 %v3932
    %v3934 = vlaneseq
    %v3935 = vshrl.u32 %v3934, 7
    %v3936 = vsub.s32 %v3933, %v3935
    %v3937 = vrot.slane %v3930, %v3936
    %v3939 = vadd.f32 %v3767, %v3937
    %v3940 = vxor.u32 %v3939, 2147483648
    %v3941 = vmul.f32 %v3940, 1.442695
    %v3942 = vpow.pop %v3941
    %v3943 = vadd.f32 %v3942, 1.0
    %v3944 = vrcp.pop %v3943
    %v3945 = vmul.f32 1.0, %v3944
    %v3947 = vrot.slane %v3939, 1
    %v3949 = vxor.u32 %v3947, 2147483648
    %v3950 = vmul.f32 %v3949, 1.442695
    %v3951 = vpow.pop %v3950
    %v3952 = vadd.f32 %v3951, 1.0
    %v3953 = vrcp.pop %v3952
    %v3954 = vmul.f32 1.0, %v3953
    %v3955 = vrot.slane %v3939, 2
    %v3957 = vtanh.pop %v3955
    %v3958 = vrot.slane %v3939, 3
    %v3960 = vxor.u32 %v3958, 2147483648
    %v3961 = vmul.f32 %v3960, 1.442695
    %v3962 = vpow.pop %v3961
    %v3963 = vadd.f32 %v3962, 1.0
    %v3964 = vrcp.pop %v3963
    %v3965 = vmul.f32 1.0, %v3964
    %v3966 = vmul.f32 %v3954, %v3764
    %v3967 = vmul.f32 %v3945, %v3957
    %v3968 = vadd.f32 %v3966, %v3967
    %v3969 = vtanh.pop %v3968
    %v3970 = vmul.f32 %v3965, %v3969
    %v3971 = vld [vmem:[%s1910] ss:$8 sm:$0xf]
    %3972 = vmatprep.subr.mxu0 %v2745
    %3973 = vmatpush1.msra.mxu0 %v2744
    %3974 = vmatprep.subr.mxu0 %v2741
    %3975 = vmatpush1.msra.mxu0 %v2740
    %3976 = vmatprep.subr.mxu0 %v2737
    %3977 = vmatpush1.msra.mxu0 %v2736
    %3978 = vmatprep.subr.mxu0 %v2733
    %3979 = vmatpush1.msra.mxu0 %v2732
    %3980 = vmatprep.subr.mxu0 %v2729
    %3981 = vmatpush1.msra.mxu0 %v2728
    %3982 = vmatprep.subr.mxu0 %v2725
    %3983 = vmatpush1.msra.mxu0 %v2724
    %3984 = vmatprep.subr.mxu0 %v2721
    %3985 = vmatpush1.msra.mxu0 %v2720
    %3986 = vmatprep.subr.mxu0 %v2717
    %3987 = vmatpush1.msra.mxu0 %v2716
    %3988 = vmatprep.subr.mxu0 %v2713
    %3989 = vmatpush1.msra.mxu0 %v2712
    %3990 = vmatprep.subr.mxu0 %v2709
    %3991 = vmatpush1.msra.mxu0 %v2708
    %3992 = vmatprep.subr.mxu0 %v2705
    %3993 = vmatpush1.msra.mxu0 %v2704
    %3994 = vmatprep.subr.mxu0 %v2701
    %3995 = vmatpush1.msra.mxu0 %v2700
    %3996 = vmatprep.subr.mxu0 %v2697
    %3997 = vmatpush1.msra.mxu0 %v2696
    %3998 = vmatprep.subr.mxu0 %v2693
    %3999 = vmatpush1.msra.mxu0 %v2692
    %4000 = vmatprep.subr.mxu0 %v2689
    %4001 = vmatpush1.msra.mxu0 %v2688
    %4002 = vmatprep.subr.mxu0 %v2685
    %4003 = vmatpush1.msra.mxu0 %v2684
    %4004 = vmatprep.subr.mxu0 0.0
    %4005 = vmatpush2.msra.mxu0 0.0
    %4006 = vmatprep.subr.mxu0 0.0
    %4007 = vmatpush2.msra.mxu0 0.0
    %4008 = vmatprep.subr.mxu0 0.0
    %4009 = vmatpush2.msra.mxu0 0.0
    %4010 = vmatprep.subr.mxu0 0.0
    %4011 = vmatpush2.msra.mxu0 0.0
    %4012 = vmatprep.subr.mxu0 0.0
    %4013 = vmatpush2.msra.mxu0 0.0
    %4014 = vmatprep.subr.mxu0 0.0
    %4015 = vmatpush2.msra.mxu0 0.0
    %4016 = vmatprep.subr.mxu0 0.0
    %4017 = vmatpush2.msra.mxu0 0.0
    %4018 = vmatprep.subr.mxu0 0.0
    %4019 = vmatpush2.msra.mxu0 0.0
    %4020 = vmatprep.subr.mxu0 0.0
    %4021 = vmatpush2.msra.mxu0 0.0
    %4022 = vmatprep.subr.mxu0 0.0
    %4023 = vmatpush2.msra.mxu0 0.0
    %4024 = vmatprep.subr.mxu0 0.0
    %4025 = vmatpush2.msra.mxu0 0.0
    %4026 = vmatprep.subr.mxu0 0.0
    %4027 = vmatpush2.msra.mxu0 0.0
    %4028 = vmatprep.subr.mxu0 0.0
    %4029 = vmatpush2.msra.mxu0 0.0
    %4030 = vmatprep.subr.mxu0 0.0
    %4031 = vmatpush2.msra.mxu0 0.0
    %4032 = vmatprep.subr.mxu0 0.0
    %4033 = vmatpush2.msra.mxu0 0.0
    %4034 = vmatprep.subr.mxu0 0.0
    %4035 = vmatpush2.msra.mxu0 0.0
    %4036 = vmatprep.mubr.f32.mxu0 0.0
    %4037 = vmatmul.mubr.f32.gmra.mxu0 %v3970
    %v4038 = vpop.f32.mrf.mxu0
    %v4039 = vadd.f32 0.0, %v4038
    %v4040 = vpop.f32.mrf.mxu0
    %v4041 = vadd.f32 0.0, %v4040
    %4042 = vdwg.mxu0
    %4043 = vmatprep.subr.mxu0 %v2747
    %4044 = vmatpush1.msra.mxu0 %v2746
    %4045 = vmatprep.subr.mxu0 %v2743
    %4046 = vmatpush1.msra.mxu0 %v2742
    %4047 = vmatprep.subr.mxu0 %v2739
    %4048 = vmatpush1.msra.mxu0 %v2738
    %4049 = vmatprep.subr.mxu0 %v2735
    %4050 = vmatpush1.msra.mxu0 %v2734
    %4051 = vmatprep.subr.mxu0 %v2731
    %4052 = vmatpush1.msra.mxu0 %v2730
    %4053 = vmatprep.subr.mxu0 %v2727
    %4054 = vmatpush1.msra.mxu0 %v2726
    %4055 = vmatprep.subr.mxu0 %v2723
    %4056 = vmatpush1.msra.mxu0 %v2722
    %4057 = vmatprep.subr.mxu0 %v2719
    %4058 = vmatpush1.msra.mxu0 %v2718
    %4059 = vmatprep.subr.mxu0 %v2715
    %4060 = vmatpush1.msra.mxu0 %v2714
    %4061 = vmatprep.subr.mxu0 %v2711
    %4062 = vmatpush1.msra.mxu0 %v2710
    %4063 = vmatprep.subr.mxu0 %v2707
    %4064 = vmatpush1.msra.mxu0 %v2706
    %4065 = vmatprep.subr.mxu0 %v2703
    %4066 = vmatpush1.msra.mxu0 %v2702
    %4067 = vmatprep.subr.mxu0 %v2699
    %4068 = vmatpush1.msra.mxu0 %v2698
    %4069 = vmatprep.subr.mxu0 %v2695
    %4070 = vmatpush1.msra.mxu0 %v2694
    %4071 = vmatprep.subr.mxu0 %v2691
    %4072 = vmatpush1.msra.mxu0 %v2690
    %4073 = vmatprep.subr.mxu0 %v2687
    %4074 = vmatpush1.msra.mxu0 %v2686
    %4075 = vmatprep.subr.mxu0 0.0
    %4076 = vmatpush2.msra.mxu0 0.0
    %4077 = vmatprep.subr.mxu0 0.0
    %4078 = vmatpush2.msra.mxu0 0.0
    %4079 = vmatprep.subr.mxu0 0.0
    %4080 = vmatpush2.msra.mxu0 0.0
    %4081 = vmatprep.subr.mxu0 0.0
    %4082 = vmatpush2.msra.mxu0 0.0
    %4083 = vmatprep.subr.mxu0 0.0
    %4084 = vmatpush2.msra.mxu0 0.0
    %4085 = vmatprep.subr.mxu0 0.0
    %4086 = vmatpush2.msra.mxu0 0.0
    %4087 = vmatprep.subr.mxu0 0.0
    %4088 = vmatpush2.msra.mxu0 0.0
    %4089 = vmatprep.subr.mxu0 0.0
    %4090 = vmatpush2.msra.mxu0 0.0
    %4091 = vmatprep.subr.mxu0 0.0
    %4092 = vmatpush2.msra.mxu0 0.0
    %4093 = vmatprep.subr.mxu0 0.0
    %4094 = vmatpush2.msra.mxu0 0.0
    %4095 = vmatprep.subr.mxu0 0.0
    %4096 = vmatpush2.msra.mxu0 0.0
    %4097 = vmatprep.subr.mxu0 0.0
    %4098 = vmatpush2.msra.mxu0 0.0
    %4099 = vmatprep.subr.mxu0 0.0
    %4100 = vmatpush2.msra.mxu0 0.0
    %4101 = vmatprep.subr.mxu0 0.0
    %4102 = vmatpush2.msra.mxu0 0.0
    %4103 = vmatprep.subr.mxu0 0.0
    %4104 = vmatpush2.msra.mxu0 0.0
    %4105 = vmatprep.subr.mxu0 0.0
    %4106 = vmatpush2.msra.mxu0 0.0
    %4107 = vmatprep.mubr.f32.mxu0 0.0
    %4108 = vmatmul.mubr.f32.gmra.mxu0 %v3970
    %v4109 = vpop.f32.mrf.mxu0
    %v4110 = vadd.f32 0.0, %v4109
    %v4111 = vpop.f32.mrf.mxu0
    %v4112 = vadd.f32 0.0, %v4111
    %4113 = vdwg.mxu0
    %v4118 = vcombine.low %v4039, %v4041
    %v4119 = vcombine.low %v4110, %v4112
    %v4121 = vunpack.c.l.s4 1966171168
    %v4122 = vunpack.c.0.s8 %v4121
    %v4123 = vlaneseq
    %v4124 = vshrl.u32 %v4123, 7
    %v4125 = vsub.s32 %v4122, %v4124
    %v4126 = vrot.slane %v4118, %v4125
    %v4128 = vunpack.c.l.s4 1966171168
    %v4129 = vunpack.c.0.s8 %v4128
    %v4130 = vlaneseq
    %v4131 = vshrl.u32 %v4130, 7
    %v4132 = vsub.s32 %v4129, %v4131
    %v4133 = vrot.slane %v4119, %v4132
    %v4134 = vcombine.low %v4126, %v4133
    %v4136 = vunpack.c.l.s4 1966171168
    %v4137 = vunpack.c.0.s8 %v4136
    %v4138 = vlaneseq
    %v4139 = vshrl.u32 %v4138, 7
    %v4140 = vsub.s32 %v4137, %v4139
    %v4141 = vrot.slane %v4134, %v4140
    %v4143 = vadd.f32 %v3971, %v4141
    %v4144 = vxor.u32 %v4143, 2147483648
    %v4145 = vmul.f32 %v4144, 1.442695
    %v4146 = vpow.pop %v4145
    %v4147 = vadd.f32 %v4146, 1.0
    %v4148 = vrcp.pop %v4147
    %v4149 = vmul.f32 1.0, %v4148
    %v4151 = vrot.slane %v4143, 1
    %v4153 = vxor.u32 %v4151, 2147483648
    %v4154 = vmul.f32 %v4153, 1.442695
    %v4155 = vpow.pop %v4154
    %v4156 = vadd.f32 %v4155, 1.0
    %v4157 = vrcp.pop %v4156
    %v4158 = vmul.f32 1.0, %v4157
    %v4159 = vrot.slane %v4143, 2
    %v4161 = vtanh.pop %v4159
    %v4162 = vrot.slane %v4143, 3
    %v4164 = vxor.u32 %v4162, 2147483648
    %v4165 = vmul.f32 %v4164, 1.442695
    %v4166 = vpow.pop %v4165
    %v4167 = vadd.f32 %v4166, 1.0
    %v4168 = vrcp.pop %v4167
    %v4169 = vmul.f32 1.0, %v4168
    %v4170 = vmul.f32 %v4158, %v3968
    %v4171 = vmul.f32 %v4149, %v4161
    %v4172 = vadd.f32 %v4170, %v4171
    %v4173 = vtanh.pop %v4172
    %v4174 = vmul.f32 %v4169, %v4173
    %v4175 = vld [vmem:[%s2180] ss:$8 sm:$0xf]
    %4176 = vmatprep.subr.mxu0 %v2745
    %4177 = vmatpush1.msra.mxu0 %v2744
    %4178 = vmatprep.subr.mxu0 %v2741
    %4179 = vmatpush1.msra.mxu0 %v2740
    %4180 = vmatprep.subr.mxu0 %v2737
    %4181 = vmatpush1.msra.mxu0 %v2736
    %4182 = vmatprep.subr.mxu0 %v2733
    %4183 = vmatpush1.msra.mxu0 %v2732
    %4184 = vmatprep.subr.mxu0 %v2729
    %4185 = vmatpush1.msra.mxu0 %v2728
    %4186 = vmatprep.subr.mxu0 %v2725
    %4187 = vmatpush1.msra.mxu0 %v2724
    %4188 = vmatprep.subr.mxu0 %v2721
    %4189 = vmatpush1.msra.mxu0 %v2720
    %4190 = vmatprep.subr.mxu0 %v2717
    %4191 = vmatpush1.msra.mxu0 %v2716
    %4192 = vmatprep.subr.mxu0 %v2713
    %4193 = vmatpush1.msra.mxu0 %v2712
    %4194 = vmatprep.subr.mxu0 %v2709
    %4195 = vmatpush1.msra.mxu0 %v2708
    %4196 = vmatprep.subr.mxu0 %v2705
    %4197 = vmatpush1.msra.mxu0 %v2704
    %4198 = vmatprep.subr.mxu0 %v2701
    %4199 = vmatpush1.msra.mxu0 %v2700
    %4200 = vmatprep.subr.mxu0 %v2697
    %4201 = vmatpush1.msra.mxu0 %v2696
    %4202 = vmatprep.subr.mxu0 %v2693
    %4203 = vmatpush1.msra.mxu0 %v2692
    %4204 = vmatprep.subr.mxu0 %v2689
    %4205 = vmatpush1.msra.mxu0 %v2688
    %4206 = vmatprep.subr.mxu0 %v2685
    %4207 = vmatpush1.msra.mxu0 %v2684
    %4208 = vmatprep.subr.mxu0 0.0
    %4209 = vmatpush2.msra.mxu0 0.0
    %4210 = vmatprep.subr.mxu0 0.0
    %4211 = vmatpush2.msra.mxu0 0.0
    %4212 = vmatprep.subr.mxu0 0.0
    %4213 = vmatpush2.msra.mxu0 0.0
    %4214 = vmatprep.subr.mxu0 0.0
    %4215 = vmatpush2.msra.mxu0 0.0
    %4216 = vmatprep.subr.mxu0 0.0
    %4217 = vmatpush2.msra.mxu0 0.0
    %4218 = vmatprep.subr.mxu0 0.0
    %4219 = vmatpush2.msra.mxu0 0.0
    %4220 = vmatprep.subr.mxu0 0.0
    %4221 = vmatpush2.msra.mxu0 0.0
    %4222 = vmatprep.subr.mxu0 0.0
    %4223 = vmatpush2.msra.mxu0 0.0
    %4224 = vmatprep.subr.mxu0 0.0
    %4225 = vmatpush2.msra.mxu0 0.0
    %4226 = vmatprep.subr.mxu0 0.0
    %4227 = vmatpush2.msra.mxu0 0.0
    %4228 = vmatprep.subr.mxu0 0.0
    %4229 = vmatpush2.msra.mxu0 0.0
    %4230 = vmatprep.subr.mxu0 0.0
    %4231 = vmatpush2.msra.mxu0 0.0
    %4232 = vmatprep.subr.mxu0 0.0
    %4233 = vmatpush2.msra.mxu0 0.0
    %4234 = vmatprep.subr.mxu0 0.0
    %4235 = vmatpush2.msra.mxu0 0.0
    %4236 = vmatprep.subr.mxu0 0.0
    %4237 = vmatpush2.msra.mxu0 0.0
    %4238 = vmatprep.subr.mxu0 0.0
    %4239 = vmatpush2.msra.mxu0 0.0
    %4240 = vmatprep.mubr.f32.mxu0 0.0
    %4241 = vmatmul.mubr.f32.gmra.mxu0 %v4174
    %v4242 = vpop.f32.mrf.mxu0
    %v4243 = vadd.f32 0.0, %v4242
    %v4244 = vpop.f32.mrf.mxu0
    %v4245 = vadd.f32 0.0, %v4244
    %4246 = vdwg.mxu0
    %4247 = vmatprep.subr.mxu0 %v2747
    %4248 = vmatpush1.msra.mxu0 %v2746
    %4249 = vmatprep.subr.mxu0 %v2743
    %4250 = vmatpush1.msra.mxu0 %v2742
    %4251 = vmatprep.subr.mxu0 %v2739
    %4252 = vmatpush1.msra.mxu0 %v2738
    %4253 = vmatprep.subr.mxu0 %v2735
    %4254 = vmatpush1.msra.mxu0 %v2734
    %4255 = vmatprep.subr.mxu0 %v2731
    %4256 = vmatpush1.msra.mxu0 %v2730
    %4257 = vmatprep.subr.mxu0 %v2727
    %4258 = vmatpush1.msra.mxu0 %v2726
    %4259 = vmatprep.subr.mxu0 %v2723
    %4260 = vmatpush1.msra.mxu0 %v2722
    %4261 = vmatprep.subr.mxu0 %v2719
    %4262 = vmatpush1.msra.mxu0 %v2718
    %4263 = vmatprep.subr.mxu0 %v2715
    %4264 = vmatpush1.msra.mxu0 %v2714
    %4265 = vmatprep.subr.mxu0 %v2711
    %4266 = vmatpush1.msra.mxu0 %v2710
    %4267 = vmatprep.subr.mxu0 %v2707
    %4268 = vmatpush1.msra.mxu0 %v2706
    %4269 = vmatprep.subr.mxu0 %v2703
    %4270 = vmatpush1.msra.mxu0 %v2702
    %4271 = vmatprep.subr.mxu0 %v2699
    %4272 = vmatpush1.msra.mxu0 %v2698
    %4273 = vmatprep.subr.mxu0 %v2695
    %4274 = vmatpush1.msra.mxu0 %v2694
    %4275 = vmatprep.subr.mxu0 %v2691
    %4276 = vmatpush1.msra.mxu0 %v2690
    %4277 = vmatprep.subr.mxu0 %v2687
    %4278 = vmatpush1.msra.mxu0 %v2686
    %4279 = vmatprep.subr.mxu0 0.0
    %4280 = vmatpush2.msra.mxu0 0.0
    %4281 = vmatprep.subr.mxu0 0.0
    %4282 = vmatpush2.msra.mxu0 0.0
    %4283 = vmatprep.subr.mxu0 0.0
    %4284 = vmatpush2.msra.mxu0 0.0
    %4285 = vmatprep.subr.mxu0 0.0
    %4286 = vmatpush2.msra.mxu0 0.0
    %4287 = vmatprep.subr.mxu0 0.0
    %4288 = vmatpush2.msra.mxu0 0.0
    %4289 = vmatprep.subr.mxu0 0.0
    %4290 = vmatpush2.msra.mxu0 0.0
    %4291 = vmatprep.subr.mxu0 0.0
    %4292 = vmatpush2.msra.mxu0 0.0
    %4293 = vmatprep.subr.mxu0 0.0
    %4294 = vmatpush2.msra.mxu0 0.0
    %4295 = vmatprep.subr.mxu0 0.0
    %4296 = vmatpush2.msra.mxu0 0.0
    %4297 = vmatprep.subr.mxu0 0.0
    %4298 = vmatpush2.msra.mxu0 0.0
    %4299 = vmatprep.subr.mxu0 0.0
    %4300 = vmatpush2.msra.mxu0 0.0
    %4301 = vmatprep.subr.mxu0 0.0
    %4302 = vmatpush2.msra.mxu0 0.0
    %4303 = vmatprep.subr.mxu0 0.0
    %4304 = vmatpush2.msra.mxu0 0.0
    %4305 = vmatprep.subr.mxu0 0.0
    %4306 = vmatpush2.msra.mxu0 0.0
    %4307 = vmatprep.subr.mxu0 0.0
    %4308 = vmatpush2.msra.mxu0 0.0
    %4309 = vmatprep.subr.mxu0 0.0
    %4310 = vmatpush2.msra.mxu0 0.0
    %4311 = vmatprep.mubr.f32.mxu0 0.0
    %4312 = vmatmul.mubr.f32.gmra.mxu0 %v4174
    %v4313 = vpop.f32.mrf.mxu0
    %v4314 = vadd.f32 0.0, %v4313
    %v4315 = vpop.f32.mrf.mxu0
    %v4316 = vadd.f32 0.0, %v4315
    %4317 = vdwg.mxu0
    %v4322 = vcombine.low %v4243, %v4245
    %v4323 = vcombine.low %v4314, %v4316
    %v4325 = vunpack.c.l.s4 1966171168
    %v4326 = vunpack.c.0.s8 %v4325
    %v4327 = vlaneseq
    %v4328 = vshrl.u32 %v4327, 7
    %v4329 = vsub.s32 %v4326, %v4328
    %v4330 = vrot.slane %v4322, %v4329
    %v4332 = vunpack.c.l.s4 1966171168
    %v4333 = vunpack.c.0.s8 %v4332
    %v4334 = vlaneseq
    %v4335 = vshrl.u32 %v4334, 7
    %v4336 = vsub.s32 %v4333, %v4335
    %v4337 = vrot.slane %v4323, %v4336
    %v4338 = vcombine.low %v4330, %v4337
    %v4340 = vunpack.c.l.s4 1966171168
    %v4341 = vunpack.c.0.s8 %v4340
    %v4342 = vlaneseq
    %v4343 = vshrl.u32 %v4342, 7
    %v4344 = vsub.s32 %v4341, %v4343
    %v4345 = vrot.slane %v4338, %v4344
    %v4347 = vadd.f32 %v4175, %v4345
    %v4348 = vxor.u32 %v4347, 2147483648
    %v4349 = vmul.f32 %v4348, 1.442695
    %v4350 = vpow.pop %v4349
    %v4351 = vadd.f32 %v4350, 1.0
    %v4352 = vrcp.pop %v4351
    %v4353 = vmul.f32 1.0, %v4352
    %v4355 = vrot.slane %v4347, 1
    %v4357 = vxor.u32 %v4355, 2147483648
    %v4358 = vmul.f32 %v4357, 1.442695
    %v4359 = vpow.pop %v4358
    %v4360 = vadd.f32 %v4359, 1.0
    %v4361 = vrcp.pop %v4360
    %v4362 = vmul.f32 1.0, %v4361
    %v4363 = vrot.slane %v4347, 2
    %v4365 = vtanh.pop %v4363
    %v4366 = vrot.slane %v4347, 3
    %v4368 = vxor.u32 %v4366, 2147483648
    %v4369 = vmul.f32 %v4368, 1.442695
    %v4370 = vpow.pop %v4369
    %v4371 = vadd.f32 %v4370, 1.0
    %v4372 = vrcp.pop %v4371
    %v4373 = vmul.f32 1.0, %v4372
    %v4374 = vmul.f32 %v4362, %v4172
    %v4375 = vmul.f32 %v4353, %v4365
    %v4376 = vadd.f32 %v4374, %v4375
    %v4377 = vtanh.pop %v4376
    %v4378 = vmul.f32 %v4373, %v4377
    %v4379 = vld [vmem:[#allocation13] sm:$0xff]
    %v4380 = vld [vmem:[#allocation13 + $0x8] sm:$0xff]
    %v4381 = vld [vmem:[#allocation13 + $0x10] sm:$0xff]
    %v4382 = vld [vmem:[#allocation13 + $0x18] sm:$0xff]
    %v4383 = vld [vmem:[#allocation13 + $0x20] sm:$0xff]
    %v4384 = vld [vmem:[#allocation13 + $0x28] sm:$0xff]
    %v4385 = vld [vmem:[#allocation13 + $0x30] sm:$0xff]
    %v4386 = vld [vmem:[#allocation13 + $0x38] sm:$0xff]
    %v4387 = vld [vmem:[#allocation13 + $0x40] sm:$0xff]
    %v4388 = vld [vmem:[#allocation13 + $0x48] sm:$0xff]
    %v4389 = vld [vmem:[#allocation13 + $0x50] sm:$0xff]
    %v4390 = vld [vmem:[#allocation13 + $0x58] sm:$0xff]
    %v4391 = vld [vmem:[#allocation13 + $0x60] sm:$0xff]
    %v4392 = vld [vmem:[#allocation13 + $0x68] sm:$0xff]
    %v4393 = vld [vmem:[#allocation13 + $0x70] sm:$0xff]
    %v4394 = vld [vmem:[#allocation13 + $0x78] sm:$0xff]
    %v4395 = vld [vmem:[#allocation4] sm:$0x1]
    %4396 = vmatprep.subr.mxu0 0.0
    %4397 = vmatpush1.msra.mxu0 %v4394
    %4398 = vmatprep.subr.mxu0 0.0
    %4399 = vmatpush1.msra.mxu0 %v4393
    %4400 = vmatprep.subr.mxu0 0.0
    %4401 = vmatpush1.msra.mxu0 %v4392
    %4402 = vmatprep.subr.mxu0 0.0
    %4403 = vmatpush1.msra.mxu0 %v4391
    %4404 = vmatprep.subr.mxu0 0.0
    %4405 = vmatpush1.msra.mxu0 %v4390
    %4406 = vmatprep.subr.mxu0 0.0
    %4407 = vmatpush1.msra.mxu0 %v4389
    %4408 = vmatprep.subr.mxu0 0.0
    %4409 = vmatpush1.msra.mxu0 %v4388
    %4410 = vmatprep.subr.mxu0 0.0
    %4411 = vmatpush1.msra.mxu0 %v4387
    %4412 = vmatprep.subr.mxu0 0.0
    %4413 = vmatpush1.msra.mxu0 %v4386
    %4414 = vmatprep.subr.mxu0 0.0
    %4415 = vmatpush1.msra.mxu0 %v4385
    %4416 = vmatprep.subr.mxu0 0.0
    %4417 = vmatpush1.msra.mxu0 %v4384
    %4418 = vmatprep.subr.mxu0 0.0
    %4419 = vmatpush1.msra.mxu0 %v4383
    %4420 = vmatprep.subr.mxu0 0.0
    %4421 = vmatpush1.msra.mxu0 %v4382
    %4422 = vmatprep.subr.mxu0 0.0
    %4423 = vmatpush1.msra.mxu0 %v4381
    %4424 = vmatprep.subr.mxu0 0.0
    %4425 = vmatpush1.msra.mxu0 %v4380
    %4426 = vmatprep.subr.mxu0 0.0
    %4427 = vmatpush1.msra.mxu0 %v4379
    %4428 = vmatprep.subr.mxu0 0.0
    %4429 = vmatpush2.msra.mxu0 0.0
    %4430 = vmatprep.subr.mxu0 0.0
    %4431 = vmatpush2.msra.mxu0 0.0
    %4432 = vmatprep.subr.mxu0 0.0
    %4433 = vmatpush2.msra.mxu0 0.0
    %4434 = vmatprep.subr.mxu0 0.0
    %4435 = vmatpush2.msra.mxu0 0.0
    %4436 = vmatprep.subr.mxu0 0.0
    %4437 = vmatpush2.msra.mxu0 0.0
    %4438 = vmatprep.subr.mxu0 0.0
    %4439 = vmatpush2.msra.mxu0 0.0
    %4440 = vmatprep.subr.mxu0 0.0
    %4441 = vmatpush2.msra.mxu0 0.0
    %4442 = vmatprep.subr.mxu0 0.0
    %4443 = vmatpush2.msra.mxu0 0.0
    %4444 = vmatprep.subr.mxu0 0.0
    %4445 = vmatpush2.msra.mxu0 0.0
    %4446 = vmatprep.subr.mxu0 0.0
    %4447 = vmatpush2.msra.mxu0 0.0
    %4448 = vmatprep.subr.mxu0 0.0
    %4449 = vmatpush2.msra.mxu0 0.0
    %4450 = vmatprep.subr.mxu0 0.0
    %4451 = vmatpush2.msra.mxu0 0.0
    %4452 = vmatprep.subr.mxu0 0.0
    %4453 = vmatpush2.msra.mxu0 0.0
    %4454 = vmatprep.subr.mxu0 0.0
    %4455 = vmatpush2.msra.mxu0 0.0
    %4456 = vmatprep.subr.mxu0 0.0
    %4457 = vmatpush2.msra.mxu0 0.0
    %4458 = vmatprep.subr.mxu0 0.0
    %4459 = vmatpush2.msra.mxu0 0.0
    %4460 = vmatprep.mubr.f32.mxu0 0.0
    %4461 = vmatmul.mubr.f32.gmra.mxu0 %v4378
    %v4462 = vpop.f32.mrf.mxu0
    %v4463 = vadd.f32 %v4395, %v4462
    %v4464 = vpop.f32.mrf.mxu0
    %4465 = vdwg.mxu0
    %vm4466 = vcmask 0
    %4467 = vst.msk [vmem:[#allocation14] sm:$0x1] %vm4466, %v4463
    // Predicated region
    $region58: #{_forward_impl.1} parent=1 // pred_check
      _
    $region59: #{_forward_impl.1} parent=1 // pred_check_branch
      %4469 = sbr.rel (0) target = $region61
    $region60: #{_forward_impl.1} parent=1 // pred_region
      %s4471 = ssub.s32 16, 16
      %4472 = vsyncadd [#allocation7], %s4471
      %s4474 = sshll.u32 [#allocation14], 4
      %s4475 = int_to_ptr.vmem [resolvable:$true] %s4474
      %4477 = dma.vmem_to_hbm [thread:$0]  %s4475, 16, %s9, [#allocation7]
    $region61: #{_forward_impl.1} parent=1 // pred_fallthru
      _
    // Predicated region
    $region62: #{_forward_impl.1} parent=1 // pred_check
      _
    $region63: #{_forward_impl.1} parent=1 // pred_check_branch
      %4479 = sbr.rel (0) target = $region65
    $region64: #{_forward_impl.1} parent=1 // pred_region
      %4480 = dma.done [#allocation7], 16
    $region65: #{_forward_impl.1} parent=1 // pred_fallthru
      _
    %4481 = vsyncpa [#allocation6], 1
    %4482 = vsyncpa [#allocation9], 1
    %4483 = vsyncpa [#allocation12], 1
    %4484 = vsyncpa [#allocation7], 1

</llo_original>
